<compile_context>
chip_gen: v7x
topology: tpu7x:2x2x1
jax: 0.10.0
libtpu: 0.0.40
codegen_flags: <defaults>
</compile_context>

<pallas_src>
import functools

import jax
import jax.numpy as jnp
from jax.experimental import pallas as pl
from jax.experimental.pallas import tpu as pltpu

STATE_DIM = 8
MEAS_DIM = 4
HID = 16            # confidence-estimator hidden width
LN_EPS = 1e-5

# ---- SMEM scalar vector layout (prefetched) ----
SCAL_Q = 0          # process_noise_scale (raw)
SCAL_R = 1          # measurement_noise_scale (raw)
SCAL_MW = 2         # measurement_weight (raw)
SCAL_B2 = 3         # confidence estimator 2nd-layer bias
SCAL_H = 4          # H_base flattened row-major (4 * 8)
SCAL_LEN = SCAL_H + MEAS_DIM * STATE_DIM            # 36

# ---- VMEM parameter slab layout: (HID, 32) f32 ----
SLAB_COL_B1 = 8
SLAB_COL_G1 = 9
SLAB_COL_BE1 = 10
SLAB_COL_W2 = 11
SLAB_COL_FDIAG = 12     # rows 0..7
SLAB_COL_FVEL = 13      # rows 0..3
SLAB_COL_H0 = 16        # rows 0..3, cols 16..23 : H_base (4 x 8)
SLAB_COLS = 32


# ----------------------------- the Pallas kernel ----------------------------

def _kalman_kernel(scal_f, scal_i, slab_ref, meas_ref, imean_ref, icov_ref,
                   bbox_ref, fmean_ref, fcov_ref, mean_sc, cov_sc):
    f32 = jnp.float32
    tc = meas_ref.shape[0]          # time steps per chunk
    lanes = meas_ref.shape[2]       # number of independent trackers (lane axis)
    s8, m4 = STATE_DIM, MEAS_DIM

    chunk_id = pl.program_id(0)
    initialized = scal_i[0]
    n_valid = scal_i[1]

    # ---------------- loop-invariant parameter setup (once per chunk) ----------------
    riota8 = jax.lax.broadcasted_iota(jnp.int32, (s8, 1), 0)
    riota4 = jax.lax.broadcasted_iota(jnp.int32, (m4, 1), 0)
    zeros81 = jnp.zeros((s8, 1), f32)
    zeros41 = jnp.zeros((m4, 1), f32)

    # F = diag(clamp(F_diag, .9, 1.1)) + half-shift * sigmoid(F_vel); kept factored.
    fdvec = jnp.clip(slab_ref[0:s8, SLAB_COL_FDIAG:SLAB_COL_FDIAG + 1], 0.9, 1.1)   # (8,1)
    svvec = jnp.where(riota8 < m4,
                      jax.nn.sigmoid(slab_ref[0:s8, SLAB_COL_FVEL:SLAB_COL_FVEL + 1]),
                      zeros81)                                                       # (8,1)
    fd11 = [fdvec[j:j + 1, :] for j in range(s8)]     # per-column scalars (1,1)
    sv11 = [svvec[j:j + 1, :] for j in range(m4)]

    w1t = slab_ref[:, 0:2 * m4]                               # (HID, 8)  = W1^T
    w1c = [w1t[:, f:f + 1] for f in range(2 * m4)]            # (HID, 1) each
    b1c = slab_ref[:, SLAB_COL_B1:SLAB_COL_B1 + 1]
    g1c = slab_ref[:, SLAB_COL_G1:SLAB_COL_G1 + 1]
    be1c = slab_ref[:, SLAB_COL_BE1:SLAB_COL_BE1 + 1]
    w2c = slab_ref[:, SLAB_COL_W2:SLAB_COL_W2 + 1]
    hmat = slab_ref[0:m4, SLAB_COL_H0:SLAB_COL_H0 + s8]       # (4, 8)
    hcol = [hmat[:, j:j + 1] for j in range(s8)]              # (4, 1) each

    q11 = jnp.exp(jnp.full((1, 1), scal_f[SCAL_Q], f32))
    r11 = jnp.exp(jnp.full((1, 1), scal_f[SCAL_R], f32))
    sig_mw11 = jax.nn.sigmoid(jnp.full((1, 1), scal_f[SCAL_MW], f32))
    b2_11 = jnp.full((1, 1), scal_f[SCAL_B2], f32)
    hs = [[scal_f[SCAL_H + a * s8 + j] for j in range(s8)] for a in range(m4)]

    qcol = [jnp.where(riota8 == j, q11, zeros81) for j in range(s8)]   # columns of Q
    rcol = [jnp.where(riota4 == c, r11, zeros41) for c in range(m4)]   # columns of R

    # ---------------- carry-in state / cold start (first chunk only) ----------------
    @pl.when(chunk_id == 0)
    def _():
        mean_sc[...] = imean_ref[...]
        cov_sc[...] = icov_ref[...]

    is_cold = jnp.logical_and(chunk_id == 0, initialized == 0)

    @pl.when(is_cold)
    def _():
        # forward() cold path: state := [measurement, 0], cov := I, return measurement
        z0 = meas_ref[0]                                            # (4, lanes)
        mean_sc[...] = jnp.concatenate(
            [z0, jnp.zeros((s8 - m4, lanes), f32)], axis=0)
        ones_row = jnp.ones((1, lanes), f32)
        zeros_row = jnp.zeros((1, lanes), f32)
        for j in range(s8):
            cov_sc[j] = jnp.where(riota8 == j, ones_row, zeros_row)
        bbox_ref[0] = z0

    base = chunk_id * tc
    t_start = jnp.where(is_cold, jnp.int32(1), jnp.int32(0))
    t_stop = jnp.minimum(jnp.int32(tc), n_valid - base)   # padded tail steps never run

    # ---------------- the per-measurement Kalman recurrence ----------------
    @pl.loop(t_start, t_stop)
    def _step(t):
        z = meas_ref[t]                                  # (4, lanes)
        m = mean_sc[...]                                 # (8, lanes)
        pc = [cov_sc[j] for j in range(s8)]              # column j of P, each (8, lanes)

        # --- predict: F's diag + half-shift structure, pure VPU broadcasts ---
        m_sw = jnp.concatenate([m[m4:, :], m[:m4, :]], axis=0)
        pm = fdvec * m + svvec * m_sw                    # F @ mean

        ppc = []
        for j in range(s8):
            xj = fd11[j] * pc[j]                         # column j of P @ F^T
            if j < m4:
                xj = xj + sv11[j] * pc[j + m4]
            xj_sw = jnp.concatenate([xj[m4:, :], xj[:m4, :]], axis=0)
            ppc.append(fdvec * xj + svvec * xj_sw + qcol[j])   # column j of F P F^T + Q

        # --- innovation ---
        hm = hcol[0] * pm[0:1, :]
        for j in range(1, s8):
            hm = hm + hcol[j] * pm[j:j + 1, :]
        innov = z - hm                                   # (4, lanes)

        # --- PHt = Pp @ H^T (columns a = 0..3), broadcast MACs on the VPU ---
        phtc = []
        for a in range(m4):
            acc = hs[a][0] * ppc[0]
            for j in range(1, s8):
                acc = acc + hs[a][j] * ppc[j]
            phtc.append(acc)                             # (8, lanes)

        # --- S = H Pp H^T + R, one 4x4 per lane ---
        sc_ = []
        for c in range(m4):
            acc = hcol[0] * phtc[c][0:1, :]
            for i in range(1, s8):
                acc = acc + hcol[i] * phtc[c][i:i + 1, :]
            sc_.append(acc + rcol[c])                    # (4, lanes) = column c of S
        se = [[sc_[c][a:a + 1, :] for c in range(m4)] for a in range(m4)]   # se[row][col]

        # --- closed-form adjugate 4x4 inverse (independent cofactors, 1 exact divide) ---
        def det3(rs, cs):
            r0, r1, r2 = rs
            c0, c1, c2 = cs
            return (se[r0][c0] * (se[r1][c1] * se[r2][c2] - se[r1][c2] * se[r2][c1])
                    - se[r0][c1] * (se[r1][c0] * se[r2][c2] - se[r1][c2] * se[r2][c0])
                    + se[r0][c2] * (se[r1][c0] * se[r2][c1] - se[r1][c1] * se[r2][c0]))

        cof = [[None] * m4 for _ in range(m4)]
        for i in range(m4):
            rs = [r for r in range(m4) if r != i]
            for j in range(m4):
                cs = [c for c in range(m4) if c != j]
                minor = det3(rs, cs)
                cof[i][j] = minor if (i + j) % 2 == 0 else -minor
        det = (se[0][0] * cof[0][0] + se[0][1] * cof[0][1]
               + se[0][2] * cof[0][2] + se[0][3] * cof[0][3])
        inv_det = 1.0 / det                              # (1, lanes), exact divide
        sinv = [[cof[c][a] * inv_det for c in range(m4)] for a in range(m4)]  # sinv[row][col]

        # --- K = Pp H^T S^-1 ---
        kc = []
        for a in range(m4):
            acc = phtc[0] * sinv[0][a]
            for c in range(1, m4):
                acc = acc + phtc[c] * sinv[c][a]
            kc.append(acc)                               # (8, lanes) = column a of K

        # --- confidence estimator (eval mode; dropout == identity) ---
        h = w1c[0] * innov[0:1, :]
        for f in range(1, m4):
            h = h + w1c[f] * innov[f:f + 1, :]
        for f in range(m4):
            h = h + w1c[m4 + f] * z[f:f + 1, :]
        h = h + b1c                                      # (HID, lanes)
        mu = jnp.mean(h, axis=0, keepdims=True)
        var = jnp.mean((h - mu) * (h - mu), axis=0, keepdims=True)
        hn = (h - mu) * jax.lax.rsqrt(var + LN_EPS) * g1c + be1c
        hr = jnp.maximum(hn, 0.0)
        conf = jax.nn.sigmoid(jnp.sum(hr * w2c, axis=0, keepdims=True) + b2_11)   # (1, lanes)
        mw = conf * sig_mw11                             # (1, lanes)

        # --- correct ---
        kinn = kc[0] * innov[0:1, :]
        for a in range(1, m4):
            kinn = kinn + kc[a] * innov[a:a + 1, :]
        new_m = pm + mw * kinn                           # (8, lanes)

        mean_sc[...] = new_m
        # new_cov = Pp - K (H Pp) = Pp - K PHt^T   (Pp symmetric)
        for j in range(s8):
            col = ppc[j]
            for a in range(m4):
                col = col - kc[a] * phtc[a][j:j + 1, :]
            cov_sc[j] = col
        bbox_ref[t] = new_m[0:m4, :]

    # export carried state (resident output block; the last chunk's write is final)
    fmean_ref[...] = mean_sc[...]
    fcov_ref[...] = cov_sc[...]


# ----------------------------- wrapper ---------------------------------------

@functools.partial(jax.jit, static_argnames=("chunk",))
def _kalman_sequence(meas, init_mean, init_cov, initialized, slab, scal_f, *, chunk=128):
    """meas: (T, 4, B). Returns ((T, 4, B) bboxes, (8, B) mean, (8, 8, B) cov)."""
    T, _, B = meas.shape
    tc = max(1, min(chunk, T))
    nchunks = -(-T // tc)
    Tpad = nchunks * tc
    if Tpad != T:
        meas = jnp.pad(meas, ((0, Tpad - T), (0, 0), (0, 0)))
    scal_i = jnp.stack([jnp.asarray(initialized, jnp.int32),
                        jnp.asarray(T, jnp.int32)])

    grid_spec = pltpu.PrefetchScalarGridSpec(
        num_scalar_prefetch=2,
        grid=(nchunks,),
        in_specs=[
            pl.BlockSpec(slab.shape, lambda c, sf, si: (0, 0)),                     # slab
            pl.BlockSpec((tc, MEAS_DIM, B), lambda c, sf, si: (c, 0, 0)),           # meas
            pl.BlockSpec((STATE_DIM, B), lambda c, sf, si: (0, 0)),                 # init mean
            pl.BlockSpec((STATE_DIM, STATE_DIM, B), lambda c, sf, si: (0, 0, 0)),   # init cov
        ],
        out_specs=(
            pl.BlockSpec((tc, MEAS_DIM, B), lambda c, sf, si: (c, 0, 0)),           # bboxes
            pl.BlockSpec((STATE_DIM, B), lambda c, sf, si: (0, 0)),                 # final mean
            pl.BlockSpec((STATE_DIM, STATE_DIM, B), lambda c, sf, si: (0, 0, 0)),   # final cov
        ),
        scratch_shapes=[pltpu.VMEM((STATE_DIM, B), jnp.float32),
                        pltpu.VMEM((STATE_DIM, STATE_DIM, B), jnp.float32)],
    )
    out_shape = (jax.ShapeDtypeStruct((Tpad, MEAS_DIM, B), jnp.float32),
                 jax.ShapeDtypeStruct((STATE_DIM, B), jnp.float32),
                 jax.ShapeDtypeStruct((STATE_DIM, STATE_DIM, B), jnp.float32))
    bbox, fmean, fcov = pl.pallas_call(
        _kalman_kernel,
        out_shape=out_shape,
        grid_spec=grid_spec,
        compiler_params=pltpu.CompilerParams(
            dimension_semantics=("arbitrary",),
            vmem_limit_bytes=32 * 1024 * 1024),
    )(scal_f, scal_i, slab, meas, init_mean, init_cov)
    return bbox[:T], fmean, fcov


# ----------------------------- parameters ------------------------------------

def make_params(key):
    """Example parameters matching the nn.Module (mildly perturbed for a stronger test)."""
    k = jax.random.split(key, 8)
    return {
        "F_diag": jnp.ones((STATE_DIM,), jnp.float32)
                  + 0.05 * jax.random.normal(k[0], (STATE_DIM,), jnp.float32),
        "F_vel": 0.2 * jax.random.normal(k[1], (STATE_DIM // 2,), jnp.float32),
        "H_base": (jnp.zeros((MEAS_DIM, STATE_DIM), jnp.float32)
                   .at[:, :MEAS_DIM].set(jnp.eye(MEAS_DIM, dtype=jnp.float32))
                   + 0.05 * jax.random.normal(k[2], (MEAS_DIM, STATE_DIM), jnp.float32)),
        "process_noise_scale": jnp.asarray(0.01, jnp.float32),
        "measurement_noise_scale": jnp.asarray(0.1, jnp.float32),
        "measurement_weight": jnp.asarray(0.5, jnp.float32),
        # confidence_estimator: Linear(8,16) -> LayerNorm(16) -> ReLU -> Linear(16,1) -> Sigmoid
        "W1": 0.2 * jax.random.normal(k[3], (2 * MEAS_DIM, HID), jnp.float32),   # weight^T
        "b1": 0.05 * jax.random.normal(k[4], (HID,), jnp.float32),
        "g1": jnp.ones((HID,), jnp.float32)
              + 0.1 * jax.random.normal(k[5], (HID,), jnp.float32),
        "be1": 0.05 * jax.random.normal(k[6], (HID,), jnp.float32),
        "W2": 0.2 * jax.random.normal(k[7], (HID,), jnp.float32),
        "b2": jnp.asarray(0.02, jnp.float32),
    }


def pack_params(params):
    """Pack small tensors into one VMEM slab + one SMEM scalar vector."""
    slab = jnp.zeros((HID, SLAB_COLS), jnp.float32)
    slab = slab.at[:, 0:2 * MEAS_DIM].set(jnp.asarray(params["W1"], jnp.float32).T)
    slab = slab.at[:, SLAB_COL_B1].set(jnp.asarray(params["b1"], jnp.float32))
    slab = slab.at[:, SLAB_COL_G1].set(jnp.asarray(params["g1"], jnp.float32))
    slab = slab.at[:, SLAB_COL_BE1].set(jnp.asarray(params["be1"], jnp.float32))
    slab = slab.at[:, SLAB_COL_W2].set(jnp.asarray(params["W2"], jnp.float32))
    slab = slab.at[0:STATE_DIM, SLAB_COL_FDIAG].set(jnp.asarray(params["F_diag"], jnp.float32))
    slab = slab.at[0:MEAS_DIM, SLAB_COL_FVEL].set(jnp.asarray(params["F_vel"], jnp.float32))
    slab = slab.at[0:MEAS_DIM, SLAB_COL_H0:SLAB_COL_H0 + STATE_DIM].set(
        jnp.asarray(params["H_base"], jnp.float32))
    scal_f = jnp.concatenate([
        jnp.stack([jnp.asarray(params["process_noise_scale"], jnp.float32),
                   jnp.asarray(params["measurement_noise_scale"], jnp.float32),
                   jnp.asarray(params["measurement_weight"], jnp.float32),
                   jnp.asarray(params["b2"], jnp.float32)]),
        jnp.asarray(params["H_base"], jnp.float32).reshape(-1)])
    assert scal_f.shape == (SCAL_LEN,)
    return slab, scal_f


# ----------------------------- user-facing APIs -------------------------------

def run_tracker_bank(measurements_bt, params, *, chunk=128):
    """Run B independent trackers in one kernel. measurements_bt: (B, T, 4) -> (B, T, 4)."""
    slab, scal_f = pack_params(params)
    meas = jnp.transpose(jnp.asarray(measurements_bt, jnp.float32), (1, 2, 0))   # (T, 4, B)
    B = meas.shape[2]
    init_mean = jnp.zeros((STATE_DIM, B), jnp.float32)
    init_cov = jnp.broadcast_to(jnp.eye(STATE_DIM, dtype=jnp.float32)[:, :, None],
                                (STATE_DIM, STATE_DIM, B))
    bbox, fmean, fcov = _kalman_sequence(meas, init_mean, init_cov,
                                         jnp.asarray(0, jnp.int32), slab, scal_f,
                                         chunk=chunk)
    return jnp.transpose(bbox, (2, 0, 1)), fmean, fcov


class LearnableKalmanTrackerPallas:
    """Stateful wrapper mirroring the nn.Module's forward() semantics (eval mode, B = 1)."""

    def __init__(self, params):
        self.params = params
        self.slab, self.scal_f = pack_params(params)
        self.reset()

    def reset(self):
        self.mean = None                # (8, 1)
        self.covariance = None          # (8, 8, 1)
        self.last_measurement = None
        self.innovation_history = []    # TODO(synk): reference appends but never uses it

    def forward_sequence(self, measurements):
        meas = jnp.asarray(measurements, jnp.float32)
        if meas.ndim == 1:
            meas = meas[None, :]
        T = meas.shape[0]
        meas_k = meas.reshape(T, MEAS_DIM, 1)
        if self.mean is None:
            init_mean = jnp.zeros((STATE_DIM, 1), jnp.float32)
            init_cov = jnp.eye(STATE_DIM, dtype=jnp.float32)[:, :, None]
            flag = 0
        else:
            init_mean, init_cov, flag = self.mean, self.covariance, 1
        bbox, fmean, fcov = _kalman_sequence(meas_k, init_mean, init_cov,
                                             jnp.asarray(flag, jnp.int32),
                                             self.slab, self.scal_f)
        self.mean, self.covariance = fmean, fcov
        self.last_measurement = meas[-1:]
        return bbox[:, :, 0]            # (T, 4)

    def __call__(self, measurement):
        meas = jnp.asarray(measurement, jnp.float32).reshape(1, MEAS_DIM)
        return self.forward_sequence(meas)[0]


# ----------------------------- pure-JAX reference ----------------------------

def reference_forward_sequence(measurements, params):
    """Faithful eager-JAX mirror of LearnableKalmanTracker.forward() over a sequence."""
    half = STATE_DIM // 2
    with jax.default_matmul_precision("highest"):
        fd = jnp.clip(params["F_diag"], 0.9, 1.1)
        F = jnp.diag(fd).at[jnp.arange(half), jnp.arange(half) + half].set(
            jax.nn.sigmoid(params["F_vel"]))
        H = params["H_base"]
        q = jnp.exp(params["process_noise_scale"])
        r = jnp.exp(params["measurement_noise_scale"])
        mw0 = jax.nn.sigmoid(params["measurement_weight"])
        mean, cov, outs = None, None, []
        for t in range(measurements.shape[0]):
            z = measurements[t:t + 1]
            if mean is None:
                mean = jnp.zeros((1, STATE_DIM), jnp.float32).at[:, :MEAS_DIM].set(z)
                cov = jnp.eye(STATE_DIM, dtype=jnp.float32)
                outs.append(z[0])
                continue
            pm = mean @ F.T
            Pp = F @ cov @ F.T + q * jnp.eye(STATE_DIM, dtype=jnp.float32)
            innov = z - pm @ H.T
            S = H @ Pp @ H.T + r * jnp.eye(MEAS_DIM, dtype=jnp.float32)
            K = Pp @ H.T @ jnp.linalg.inv(S)
            feat = jnp.concatenate([innov, z], axis=1)
            h = feat @ params["W1"] + params["b1"][None, :]
            mu = jnp.mean(h, -1, keepdims=True)
            var = jnp.mean((h - mu) ** 2, -1, keepdims=True)
            h = (h - mu) / jnp.sqrt(var + LN_EPS) * params["g1"][None, :] + params["be1"][None, :]
            h = jnp.maximum(h, 0.0)
            conf = jax.nn.sigmoid(h @ params["W2"].reshape(HID, 1) + params["b2"])
            mw = conf * mw0
            mean = pm + mw * (innov @ K.T)
            cov = (jnp.eye(STATE_DIM, dtype=jnp.float32) - K @ H) @ Pp
            outs.append(mean[0, :MEAS_DIM])
        return jnp.stack(outs)


# ----------------------------- demo / self-test -------------------------------

if __name__ == "__main__":
    key = jax.random.PRNGKey(0)
    pkey, bkey, wkey = jax.random.split(key, 3)
    params = make_params(pkey)

    # a bank of B independent trackers, each a random-walk sequence of T [x, y, w, h] boxes
    B, T = 128, 13
    base = 2.0 + 10.0 * jax.random.uniform(bkey, (1, 1, MEAS_DIM), jnp.float32)
    walk = jnp.cumsum(0.3 * jax.random.normal(wkey, (B, T, MEAS_DIM), jnp.float32), axis=1)
    meas_bt = base + walk                                          # (B, T, 4)

    # one kernel call processes all B trackers and all T steps (chunk=8 -> 2 grid steps + tail)
    bbox_bt, fmean, fcov = run_tracker_bank(meas_bt, params, chunk=8)
    jax.block_until_ready((bbox_bt, fmean, fcov))
    assert bbox_bt.shape == (B, T, MEAS_DIM)
    assert bool(jnp.all(jnp.isfinite(bbox_bt)))

    ref_bt = jax.vmap(lambda ms: reference_forward_sequence(ms, params))(meas_bt)
    err = jnp.abs(bbox_bt - ref_bt)
    tol = 5e-2 + 5e-2 * jnp.abs(ref_bt)
    assert bool(jnp.all(err <= tol)), \
        f"tracker-bank mismatch, max abs err = {float(jnp.max(err))}"

    # stateful single-tracker API (mirrors nn.Module.forward, one measurement per call)
    tracker = LearnableKalmanTrackerPallas(params)
    single = jnp.stack([tracker(meas_bt[0, t]) for t in range(5)])
    jax.block_until_ready(single)
    err1 = jnp.abs(single - ref_bt[0, :5])
    tol1 = 5e-2 + 5e-2 * jnp.abs(ref_bt[0, :5])
    assert bool(jnp.all(err1 <= tol1)), \
        f"single-tracker mismatch, max abs err = {float(jnp.max(err1))}"

    print("KERNEL_OK")
</pallas_src>

<mosaic_0001>
module attributes {stable_mosaic.version = 11 : i64} {
  func.func @_kalman_kernel(%arg0: i32, %arg1: memref<36xf32, #tpu.memory_space<smem>>, %arg2: memref<2xi32, #tpu.memory_space<smem>>, %arg3: memref<16x32xf32, #tpu.memory_space<vmem>>, %arg4: memref<8x4x128xf32, #tpu.memory_space<vmem>>, %arg5: memref<8x128xf32, #tpu.memory_space<vmem>>, %arg6: memref<8x8x128xf32, #tpu.memory_space<vmem>>, %arg7: memref<8x4x128xf32, #tpu.memory_space<vmem>>, %arg8: memref<8x128xf32, #tpu.memory_space<vmem>>, %arg9: memref<8x8x128xf32, #tpu.memory_space<vmem>>, %arg10: memref<8x128xf32, #tpu.memory_space<vmem>>, %arg11: memref<8x8x128xf32, #tpu.memory_space<vmem>>) attributes {dimension_semantics = [#tpu.dimension_semantics<arbitrary>], iteration_bounds = array<i64: 2>, scalar_prefetch = 2 : i64, scratch_operands = 2 : i64, tpu.core_type = #tpu.core_type<tc>, window_params = [{pipeline_mode = #tpu.pipeline_mode<synchronous>, transform_indices = @transform_0, window_bounds = array<i64: 16, 32>}, {transform_indices = @transform_1, window_bounds = array<i64: 8, 4, 128>}, {pipeline_mode = #tpu.pipeline_mode<synchronous>, transform_indices = @transform_2, window_bounds = array<i64: 8, 128>}, {pipeline_mode = #tpu.pipeline_mode<synchronous>, transform_indices = @transform_3, window_bounds = array<i64: 8, 8, 128>}, {transform_indices = @transform_4, window_bounds = array<i64: 8, 4, 128>}, {pipeline_mode = #tpu.pipeline_mode<synchronous>, transform_indices = @transform_5, window_bounds = array<i64: 8, 128>}, {pipeline_mode = #tpu.pipeline_mode<synchronous>, transform_indices = @transform_6, window_bounds = array<i64: 8, 8, 128>}]} {
    %c0 = arith.constant 0 : index
    %0 = memref.load %arg2[%c0] : memref<2xi32, #tpu.memory_space<smem>>
    %c1 = arith.constant 1 : index
    %1 = memref.load %arg2[%c1] : memref<2xi32, #tpu.memory_space<smem>>
    %2 = tpu.iota {dimensions = array<i32: 0>} : vector<8x1xi32>
    %3 = tpu.iota {dimensions = array<i32: 0>} : vector<4x1xi32>
    %cst = arith.constant 0.000000e+00 : f32
    %4 = vector.broadcast %cst : f32 to vector<8x1xf32>
    %cst_0 = arith.constant 0.000000e+00 : f32
    %5 = vector.broadcast %cst_0 : f32 to vector<4x1xf32>
    %c0_1 = arith.constant 0 : index
    %c12 = arith.constant 12 : index
    %6 = vector.load %arg3[%c0_1, %c12] : memref<16x32xf32, #tpu.memory_space<vmem>>, vector<8x1xf32>
    %cst_2 = arith.constant 0.899999976 : f32
    %cst_3 = arith.constant 1.100000e+00 : f32
    %7 = vector.broadcast %cst_2 : f32 to vector<8x1xf32>
    %8 = arith.maximumf %7, %6 : vector<8x1xf32>
    %9 = vector.broadcast %cst_3 : f32 to vector<8x1xf32>
    %10 = arith.minimumf %9, %8 : vector<8x1xf32>
    %c4_i32 = arith.constant 4 : i32
    %11 = vector.broadcast %c4_i32 : i32 to vector<8x1xi32>
    %12 = arith.cmpi slt, %2, %11 : vector<8x1xi32>
    %c0_4 = arith.constant 0 : index
    %c13 = arith.constant 13 : index
    %13 = vector.load %arg3[%c0_4, %c13] : memref<16x32xf32, #tpu.memory_space<vmem>>, vector<8x1xf32>
    %14 = arith.negf %13 : vector<8x1xf32>
    %15 = math.exp %14 : vector<8x1xf32>
    %cst_5 = arith.constant 1.000000e+00 : f32
    %16 = vector.broadcast %cst_5 : f32 to vector<8x1xf32>
    %17 = arith.addf %16, %15 : vector<8x1xf32>
    %18 = arith.divf %16, %17 : vector<8x1xf32>
    %19 = arith.select %12, %18, %4 : vector<8x1xi1>, vector<8x1xf32>
    %20 = vector.extract_strided_slice %10 {offsets = [0, 0], sizes = [1, 1], strides = [1, 1]} : vector<8x1xf32> to vector<1x1xf32>
    %21 = vector.extract_strided_slice %10 {offsets = [1, 0], sizes = [1, 1], strides = [1, 1]} : vector<8x1xf32> to vector<1x1xf32>
    %22 = vector.extract_strided_slice %10 {offsets = [2, 0], sizes = [1, 1], strides = [1, 1]} : vector<8x1xf32> to vector<1x1xf32>
    %23 = vector.extract_strided_slice %10 {offsets = [3, 0], sizes = [1, 1], strides = [1, 1]} : vector<8x1xf32> to vector<1x1xf32>
    %24 = vector.extract_strided_slice %10 {offsets = [4, 0], sizes = [1, 1], strides = [1, 1]} : vector<8x1xf32> to vector<1x1xf32>
    %25 = vector.extract_strided_slice %10 {offsets = [5, 0], sizes = [1, 1], strides = [1, 1]} : vector<8x1xf32> to vector<1x1xf32>
    %26 = vector.extract_strided_slice %10 {offsets = [6, 0], sizes = [1, 1], strides = [1, 1]} : vector<8x1xf32> to vector<1x1xf32>
    %27 = vector.extract_strided_slice %10 {offsets = [7, 0], sizes = [1, 1], strides = [1, 1]} : vector<8x1xf32> to vector<1x1xf32>
    %28 = vector.extract_strided_slice %19 {offsets = [0, 0], sizes = [1, 1], strides = [1, 1]} : vector<8x1xf32> to vector<1x1xf32>
    %29 = vector.extract_strided_slice %19 {offsets = [1, 0], sizes = [1, 1], strides = [1, 1]} : vector<8x1xf32> to vector<1x1xf32>
    %30 = vector.extract_strided_slice %19 {offsets = [2, 0], sizes = [1, 1], strides = [1, 1]} : vector<8x1xf32> to vector<1x1xf32>
    %31 = vector.extract_strided_slice %19 {offsets = [3, 0], sizes = [1, 1], strides = [1, 1]} : vector<8x1xf32> to vector<1x1xf32>
    %c0_6 = arith.constant 0 : index
    %c0_7 = arith.constant 0 : index
    %32 = vector.load %arg3[%c0_6, %c0_7] : memref<16x32xf32, #tpu.memory_space<vmem>>, vector<16x8xf32>
    %33 = vector.extract_strided_slice %32 {offsets = [0, 0], sizes = [16, 1], strides = [1, 1]} : vector<16x8xf32> to vector<16x1xf32>
    %34 = vector.extract_strided_slice %32 {offsets = [0, 1], sizes = [16, 1], strides = [1, 1]} : vector<16x8xf32> to vector<16x1xf32>
    %35 = vector.extract_strided_slice %32 {offsets = [0, 2], sizes = [16, 1], strides = [1, 1]} : vector<16x8xf32> to vector<16x1xf32>
    %36 = vector.extract_strided_slice %32 {offsets = [0, 3], sizes = [16, 1], strides = [1, 1]} : vector<16x8xf32> to vector<16x1xf32>
    %37 = vector.extract_strided_slice %32 {offsets = [0, 4], sizes = [16, 1], strides = [1, 1]} : vector<16x8xf32> to vector<16x1xf32>
    %38 = vector.extract_strided_slice %32 {offsets = [0, 5], sizes = [16, 1], strides = [1, 1]} : vector<16x8xf32> to vector<16x1xf32>
    %39 = vector.extract_strided_slice %32 {offsets = [0, 6], sizes = [16, 1], strides = [1, 1]} : vector<16x8xf32> to vector<16x1xf32>
    %40 = vector.extract_strided_slice %32 {offsets = [0, 7], sizes = [16, 1], strides = [1, 1]} : vector<16x8xf32> to vector<16x1xf32>
    %c0_8 = arith.constant 0 : index
    %c8 = arith.constant 8 : index
    %41 = vector.load %arg3[%c0_8, %c8] : memref<16x32xf32, #tpu.memory_space<vmem>>, vector<16x1xf32>
    %c0_9 = arith.constant 0 : index
    %c9 = arith.constant 9 : index
    %42 = vector.load %arg3[%c0_9, %c9] : memref<16x32xf32, #tpu.memory_space<vmem>>, vector<16x1xf32>
    %c0_10 = arith.constant 0 : index
    %c10 = arith.constant 10 : index
    %43 = vector.load %arg3[%c0_10, %c10] : memref<16x32xf32, #tpu.memory_space<vmem>>, vector<16x1xf32>
    %c0_11 = arith.constant 0 : index
    %c11 = arith.constant 11 : index
    %44 = vector.load %arg3[%c0_11, %c11] : memref<16x32xf32, #tpu.memory_space<vmem>>, vector<16x1xf32>
    %c0_12 = arith.constant 0 : index
    %c16 = arith.constant 16 : index
    %45 = vector.load %arg3[%c0_12, %c16] : memref<16x32xf32, #tpu.memory_space<vmem>>, vector<4x8xf32>
    %46 = vector.extract_strided_slice %45 {offsets = [0, 0], sizes = [4, 1], strides = [1, 1]} : vector<4x8xf32> to vector<4x1xf32>
    %47 = vector.extract_strided_slice %45 {offsets = [0, 1], sizes = [4, 1], strides = [1, 1]} : vector<4x8xf32> to vector<4x1xf32>
    %48 = vector.extract_strided_slice %45 {offsets = [0, 2], sizes = [4, 1], strides = [1, 1]} : vector<4x8xf32> to vector<4x1xf32>
    %49 = vector.extract_strided_slice %45 {offsets = [0, 3], sizes = [4, 1], strides = [1, 1]} : vector<4x8xf32> to vector<4x1xf32>
    %50 = vector.extract_strided_slice %45 {offsets = [0, 4], sizes = [4, 1], strides = [1, 1]} : vector<4x8xf32> to vector<4x1xf32>
    %51 = vector.extract_strided_slice %45 {offsets = [0, 5], sizes = [4, 1], strides = [1, 1]} : vector<4x8xf32> to vector<4x1xf32>
    %52 = vector.extract_strided_slice %45 {offsets = [0, 6], sizes = [4, 1], strides = [1, 1]} : vector<4x8xf32> to vector<4x1xf32>
    %53 = vector.extract_strided_slice %45 {offsets = [0, 7], sizes = [4, 1], strides = [1, 1]} : vector<4x8xf32> to vector<4x1xf32>
    %c0_13 = arith.constant 0 : index
    %54 = memref.load %arg1[%c0_13] : memref<36xf32, #tpu.memory_space<smem>>
    %55 = vector.broadcast %54 : f32 to vector<1x1xf32>
    %56 = math.exp %55 : vector<1x1xf32>
    %c1_14 = arith.constant 1 : index
    %57 = memref.load %arg1[%c1_14] : memref<36xf32, #tpu.memory_space<smem>>
    %58 = vector.broadcast %57 : f32 to vector<1x1xf32>
    %59 = math.exp %58 : vector<1x1xf32>
    %c2 = arith.constant 2 : index
    %60 = memref.load %arg1[%c2] : memref<36xf32, #tpu.memory_space<smem>>
    %61 = vector.broadcast %60 : f32 to vector<1x1xf32>
    %62 = arith.negf %61 : vector<1x1xf32>
    %63 = math.exp %62 : vector<1x1xf32>
    %cst_15 = arith.constant 1.000000e+00 : f32
    %64 = vector.broadcast %cst_15 : f32 to vector<1x1xf32>
    %65 = arith.addf %64, %63 : vector<1x1xf32>
    %66 = arith.divf %64, %65 : vector<1x1xf32>
    %c3 = arith.constant 3 : index
    %67 = memref.load %arg1[%c3] : memref<36xf32, #tpu.memory_space<smem>>
    %68 = vector.broadcast %67 : f32 to vector<1x1xf32>
    %c4 = arith.constant 4 : index
    %69 = memref.load %arg1[%c4] : memref<36xf32, #tpu.memory_space<smem>>
    %c5 = arith.constant 5 : index
    %70 = memref.load %arg1[%c5] : memref<36xf32, #tpu.memory_space<smem>>
    %c6 = arith.constant 6 : index
    %71 = memref.load %arg1[%c6] : memref<36xf32, #tpu.memory_space<smem>>
    %c7 = arith.constant 7 : index
    %72 = memref.load %arg1[%c7] : memref<36xf32, #tpu.memory_space<smem>>
    %c8_16 = arith.constant 8 : index
    %73 = memref.load %arg1[%c8_16] : memref<36xf32, #tpu.memory_space<smem>>
    %c9_17 = arith.constant 9 : index
    %74 = memref.load %arg1[%c9_17] : memref<36xf32, #tpu.memory_space<smem>>
    %c10_18 = arith.constant 10 : index
    %75 = memref.load %arg1[%c10_18] : memref<36xf32, #tpu.memory_space<smem>>
    %c11_19 = arith.constant 11 : index
    %76 = memref.load %arg1[%c11_19] : memref<36xf32, #tpu.memory_space<smem>>
    %c12_20 = arith.constant 12 : index
    %77 = memref.load %arg1[%c12_20] : memref<36xf32, #tpu.memory_space<smem>>
    %c13_21 = arith.constant 13 : index
    %78 = memref.load %arg1[%c13_21] : memref<36xf32, #tpu.memory_space<smem>>
    %c14 = arith.constant 14 : index
    %79 = memref.load %arg1[%c14] : memref<36xf32, #tpu.memory_space<smem>>
    %c15 = arith.constant 15 : index
    %80 = memref.load %arg1[%c15] : memref<36xf32, #tpu.memory_space<smem>>
    %c16_22 = arith.constant 16 : index
    %81 = memref.load %arg1[%c16_22] : memref<36xf32, #tpu.memory_space<smem>>
    %c17 = arith.constant 17 : index
    %82 = memref.load %arg1[%c17] : memref<36xf32, #tpu.memory_space<smem>>
    %c18 = arith.constant 18 : index
    %83 = memref.load %arg1[%c18] : memref<36xf32, #tpu.memory_space<smem>>
    %c19 = arith.constant 19 : index
    %84 = memref.load %arg1[%c19] : memref<36xf32, #tpu.memory_space<smem>>
    %c20 = arith.constant 20 : index
    %85 = memref.load %arg1[%c20] : memref<36xf32, #tpu.memory_space<smem>>
    %c21 = arith.constant 21 : index
    %86 = memref.load %arg1[%c21] : memref<36xf32, #tpu.memory_space<smem>>
    %c22 = arith.constant 22 : index
    %87 = memref.load %arg1[%c22] : memref<36xf32, #tpu.memory_space<smem>>
    %c23 = arith.constant 23 : index
    %88 = memref.load %arg1[%c23] : memref<36xf32, #tpu.memory_space<smem>>
    %c24 = arith.constant 24 : index
    %89 = memref.load %arg1[%c24] : memref<36xf32, #tpu.memory_space<smem>>
    %c25 = arith.constant 25 : index
    %90 = memref.load %arg1[%c25] : memref<36xf32, #tpu.memory_space<smem>>
    %c26 = arith.constant 26 : index
    %91 = memref.load %arg1[%c26] : memref<36xf32, #tpu.memory_space<smem>>
    %c27 = arith.constant 27 : index
    %92 = memref.load %arg1[%c27] : memref<36xf32, #tpu.memory_space<smem>>
    %c28 = arith.constant 28 : index
    %93 = memref.load %arg1[%c28] : memref<36xf32, #tpu.memory_space<smem>>
    %c29 = arith.constant 29 : index
    %94 = memref.load %arg1[%c29] : memref<36xf32, #tpu.memory_space<smem>>
    %c30 = arith.constant 30 : index
    %95 = memref.load %arg1[%c30] : memref<36xf32, #tpu.memory_space<smem>>
    %c31 = arith.constant 31 : index
    %96 = memref.load %arg1[%c31] : memref<36xf32, #tpu.memory_space<smem>>
    %c32 = arith.constant 32 : index
    %97 = memref.load %arg1[%c32] : memref<36xf32, #tpu.memory_space<smem>>
    %c33 = arith.constant 33 : index
    %98 = memref.load %arg1[%c33] : memref<36xf32, #tpu.memory_space<smem>>
    %c34 = arith.constant 34 : index
    %99 = memref.load %arg1[%c34] : memref<36xf32, #tpu.memory_space<smem>>
    %c35 = arith.constant 35 : index
    %100 = memref.load %arg1[%c35] : memref<36xf32, #tpu.memory_space<smem>>
    %c0_i32 = arith.constant 0 : i32
    %101 = vector.broadcast %c0_i32 : i32 to vector<8x1xi32>
    %102 = arith.cmpi eq, %2, %101 : vector<8x1xi32>
    %103 = vector.shape_cast %56 : vector<1x1xf32> to vector<1x1xf32>
    %104 = vector.broadcast %103 : vector<1x1xf32> to vector<8x1xf32>
    %105 = arith.select %102, %104, %4 : vector<8x1xi1>, vector<8x1xf32>
    %c1_i32 = arith.constant 1 : i32
    %106 = vector.broadcast %c1_i32 : i32 to vector<8x1xi32>
    %107 = arith.cmpi eq, %2, %106 : vector<8x1xi32>
    %108 = vector.shape_cast %56 : vector<1x1xf32> to vector<1x1xf32>
    %109 = vector.broadcast %108 : vector<1x1xf32> to vector<8x1xf32>
    %110 = arith.select %107, %109, %4 : vector<8x1xi1>, vector<8x1xf32>
    %c2_i32 = arith.constant 2 : i32
    %111 = vector.broadcast %c2_i32 : i32 to vector<8x1xi32>
    %112 = arith.cmpi eq, %2, %111 : vector<8x1xi32>
    %113 = vector.shape_cast %56 : vector<1x1xf32> to vector<1x1xf32>
    %114 = vector.broadcast %113 : vector<1x1xf32> to vector<8x1xf32>
    %115 = arith.select %112, %114, %4 : vector<8x1xi1>, vector<8x1xf32>
    %c3_i32 = arith.constant 3 : i32
    %116 = vector.broadcast %c3_i32 : i32 to vector<8x1xi32>
    %117 = arith.cmpi eq, %2, %116 : vector<8x1xi32>
    %118 = vector.shape_cast %56 : vector<1x1xf32> to vector<1x1xf32>
    %119 = vector.broadcast %118 : vector<1x1xf32> to vector<8x1xf32>
    %120 = arith.select %117, %119, %4 : vector<8x1xi1>, vector<8x1xf32>
    %c4_i32_23 = arith.constant 4 : i32
    %121 = vector.broadcast %c4_i32_23 : i32 to vector<8x1xi32>
    %122 = arith.cmpi eq, %2, %121 : vector<8x1xi32>
    %123 = vector.shape_cast %56 : vector<1x1xf32> to vector<1x1xf32>
    %124 = vector.broadcast %123 : vector<1x1xf32> to vector<8x1xf32>
    %125 = arith.select %122, %124, %4 : vector<8x1xi1>, vector<8x1xf32>
    %c5_i32 = arith.constant 5 : i32
    %126 = vector.broadcast %c5_i32 : i32 to vector<8x1xi32>
    %127 = arith.cmpi eq, %2, %126 : vector<8x1xi32>
    %128 = vector.shape_cast %56 : vector<1x1xf32> to vector<1x1xf32>
    %129 = vector.broadcast %128 : vector<1x1xf32> to vector<8x1xf32>
    %130 = arith.select %127, %129, %4 : vector<8x1xi1>, vector<8x1xf32>
    %c6_i32 = arith.constant 6 : i32
    %131 = vector.broadcast %c6_i32 : i32 to vector<8x1xi32>
    %132 = arith.cmpi eq, %2, %131 : vector<8x1xi32>
    %133 = vector.shape_cast %56 : vector<1x1xf32> to vector<1x1xf32>
    %134 = vector.broadcast %133 : vector<1x1xf32> to vector<8x1xf32>
    %135 = arith.select %132, %134, %4 : vector<8x1xi1>, vector<8x1xf32>
    %c7_i32 = arith.constant 7 : i32
    %136 = vector.broadcast %c7_i32 : i32 to vector<8x1xi32>
    %137 = arith.cmpi eq, %2, %136 : vector<8x1xi32>
    %138 = vector.shape_cast %56 : vector<1x1xf32> to vector<1x1xf32>
    %139 = vector.broadcast %138 : vector<1x1xf32> to vector<8x1xf32>
    %140 = arith.select %137, %139, %4 : vector<8x1xi1>, vector<8x1xf32>
    %c0_i32_24 = arith.constant 0 : i32
    %141 = vector.broadcast %c0_i32_24 : i32 to vector<4x1xi32>
    %142 = arith.cmpi eq, %3, %141 : vector<4x1xi32>
    %143 = vector.shape_cast %59 : vector<1x1xf32> to vector<1x1xf32>
    %144 = vector.broadcast %143 : vector<1x1xf32> to vector<4x1xf32>
    %145 = arith.select %142, %144, %5 : vector<4x1xi1>, vector<4x1xf32>
    %c1_i32_25 = arith.constant 1 : i32
    %146 = vector.broadcast %c1_i32_25 : i32 to vector<4x1xi32>
    %147 = arith.cmpi eq, %3, %146 : vector<4x1xi32>
    %148 = vector.shape_cast %59 : vector<1x1xf32> to vector<1x1xf32>
    %149 = vector.broadcast %148 : vector<1x1xf32> to vector<4x1xf32>
    %150 = arith.select %147, %149, %5 : vector<4x1xi1>, vector<4x1xf32>
    %c2_i32_26 = arith.constant 2 : i32
    %151 = vector.broadcast %c2_i32_26 : i32 to vector<4x1xi32>
    %152 = arith.cmpi eq, %3, %151 : vector<4x1xi32>
    %153 = vector.shape_cast %59 : vector<1x1xf32> to vector<1x1xf32>
    %154 = vector.broadcast %153 : vector<1x1xf32> to vector<4x1xf32>
    %155 = arith.select %152, %154, %5 : vector<4x1xi1>, vector<4x1xf32>
    %c3_i32_27 = arith.constant 3 : i32
    %156 = vector.broadcast %c3_i32_27 : i32 to vector<4x1xi32>
    %157 = arith.cmpi eq, %3, %156 : vector<4x1xi32>
    %158 = vector.shape_cast %59 : vector<1x1xf32> to vector<1x1xf32>
    %159 = vector.broadcast %158 : vector<1x1xf32> to vector<4x1xf32>
    %160 = arith.select %157, %159, %5 : vector<4x1xi1>, vector<4x1xf32>
    %c0_i32_28 = arith.constant 0 : i32
    %161 = arith.cmpi eq, %arg0, %c0_i32_28 : i32
    %162 = arith.extui %161 : i1 to i32
    %c0_i32_29 = arith.constant 0 : i32
    %163 = arith.cmpi ne, %162, %c0_i32_29 : i32
    scf.if %163 {
      %c0_52 = arith.constant 0 : index
      %c0_53 = arith.constant 0 : index
      %183 = vector.load %arg5[%c0_52, %c0_53] : memref<8x128xf32, #tpu.memory_space<vmem>>, vector<8x128xf32>
      %c0_54 = arith.constant 0 : index
      %c0_55 = arith.constant 0 : index
      %184 = vector.load %arg10[%c0_54, %c0_55] : memref<8x128xf32, #tpu.memory_space<vmem>>, vector<8x128xf32>
      tpu.vector_store %arg10[%c0_54, %c0_55], %183 {strides = array<i32>} : memref<8x128xf32, #tpu.memory_space<vmem>>, vector<8x128xf32>,
      %c0_56 = arith.constant 0 : index
      %c0_57 = arith.constant 0 : index
      %c0_58 = arith.constant 0 : index
      %185 = vector.load %arg6[%c0_56, %c0_57, %c0_58] : memref<8x8x128xf32, #tpu.memory_space<vmem>>, vector<8x8x128xf32>
      %c0_59 = arith.constant 0 : index
      %c0_60 = arith.constant 0 : index
      %c0_61 = arith.constant 0 : index
      %186 = vector.load %arg11[%c0_59, %c0_60, %c0_61] : memref<8x8x128xf32, #tpu.memory_space<vmem>>, vector<8x8x128xf32>
      tpu.vector_store %arg11[%c0_59, %c0_60, %c0_61], %185 {strides = array<i32>} : memref<8x8x128xf32, #tpu.memory_space<vmem>>, vector<8x8x128xf32>,
    } else {
    }
    %c0_i32_30 = arith.constant 0 : i32
    %164 = arith.cmpi eq, %arg0, %c0_i32_30 : i32
    %c0_i32_31 = arith.constant 0 : i32
    %165 = arith.cmpi eq, %0, %c0_i32_31 : i32
    %166 = arith.andi %164, %165 : i1
    %167 = arith.extui %166 : i1 to i32
    %c0_i32_32 = arith.constant 0 : i32
    %168 = arith.cmpi ne, %167, %c0_i32_32 : i32
    scf.if %168 {
      %c0_52 = arith.constant 0 : index
      %c0_53 = arith.constant 0 : index
      %c0_54 = arith.constant 0 : index
      %183 = vector.load %arg4[%c0_52, %c0_53, %c0_54] : memref<8x4x128xf32, #tpu.memory_space<vmem>>, vector<1x4x128xf32>
      %184 = vector.shape_cast %183 : vector<1x4x128xf32> to vector<4x128xf32>
      %cst_55 = arith.constant 0.000000e+00 : f32
      %185 = vector.broadcast %cst_55 : f32 to vector<4x128xf32>
      %186 = tpu.concatenate %184, %185 in 0 : vector<4x128xf32>, vector<4x128xf32> -> vector<8x128xf32>
      %c0_56 = arith.constant 0 : index
      %c0_57 = arith.constant 0 : index
      %187 = vector.load %arg10[%c0_56, %c0_57] : memref<8x128xf32, #tpu.memory_space<vmem>>, vector<8x128xf32>
      tpu.vector_store %arg10[%c0_56, %c0_57], %186 {strides = array<i32>} : memref<8x128xf32, #tpu.memory_space<vmem>>, vector<8x128xf32>,
      %cst_58 = arith.constant 1.000000e+00 : f32
      %188 = vector.broadcast %cst_58 : f32 to vector<1x128xf32>
      %cst_59 = arith.constant 0.000000e+00 : f32
      %189 = vector.broadcast %cst_59 : f32 to vector<1x128xf32>
      %c0_i32_60 = arith.constant 0 : i32
      %190 = vector.broadcast %c0_i32_60 : i32 to vector<8x1xi32>
      %191 = arith.cmpi eq, %2, %190 : vector<8x1xi32>
      %192 = vector.shape_cast %191 : vector<8x1xi1> to vector<8x1xi1>
      %193 = vector.broadcast %192 : vector<8x1xi1> to vector<8x128xi1>
      %194 = vector.shape_cast %188 : vector<1x128xf32> to vector<1x128xf32>
      %195 = vector.broadcast %194 : vector<1x128xf32> to vector<8x128xf32>
      %196 = vector.shape_cast %189 : vector<1x128xf32> to vector<1x128xf32>
      %197 = vector.broadcast %196 : vector<1x128xf32> to vector<8x128xf32>
      %198 = arith.select %193, %195, %197 : vector<8x128xi1>, vector<8x128xf32>
      %c0_61 = arith.constant 0 : index
      %c0_62 = arith.constant 0 : index
      %c0_63 = arith.constant 0 : index
      %199 = vector.load %arg11[%c0_61, %c0_62, %c0_63] : memref<8x8x128xf32, #tpu.memory_space<vmem>>, vector<1x8x128xf32>
      %200 = vector.shape_cast %199 : vector<1x8x128xf32> to vector<8x128xf32>
      %201 = vector.shape_cast %198 : vector<8x128xf32> to vector<1x8x128xf32>
      tpu.vector_store %arg11[%c0_61, %c0_62, %c0_63], %201 {strides = array<i32>} : memref<8x8x128xf32, #tpu.memory_space<vmem>>, vector<1x8x128xf32>,
      %c1_i32_64 = arith.constant 1 : i32
      %202 = vector.broadcast %c1_i32_64 : i32 to vector<8x1xi32>
      %203 = arith.cmpi eq, %2, %202 : vector<8x1xi32>
      %204 = vector.shape_cast %203 : vector<8x1xi1> to vector<8x1xi1>
      %205 = vector.broadcast %204 : vector<8x1xi1> to vector<8x128xi1>
      %206 = vector.shape_cast %188 : vector<1x128xf32> to vector<1x128xf32>
      %207 = vector.broadcast %206 : vector<1x128xf32> to vector<8x128xf32>
      %208 = vector.shape_cast %189 : vector<1x128xf32> to vector<1x128xf32>
      %209 = vector.broadcast %208 : vector<1x128xf32> to vector<8x128xf32>
      %210 = arith.select %205, %207, %209 : vector<8x128xi1>, vector<8x128xf32>
      %c1_65 = arith.constant 1 : index
      %c0_66 = arith.constant 0 : index
      %c0_67 = arith.constant 0 : index
      %211 = vector.load %arg11[%c1_65, %c0_66, %c0_67] : memref<8x8x128xf32, #tpu.memory_space<vmem>>, vector<1x8x128xf32>
      %212 = vector.shape_cast %211 : vector<1x8x128xf32> to vector<8x128xf32>
      %213 = vector.shape_cast %210 : vector<8x128xf32> to vector<1x8x128xf32>
      tpu.vector_store %arg11[%c1_65, %c0_66, %c0_67], %213 {strides = array<i32>} : memref<8x8x128xf32, #tpu.memory_space<vmem>>, vector<1x8x128xf32>,
      %c2_i32_68 = arith.constant 2 : i32
      %214 = vector.broadcast %c2_i32_68 : i32 to vector<8x1xi32>
      %215 = arith.cmpi eq, %2, %214 : vector<8x1xi32>
      %216 = vector.shape_cast %215 : vector<8x1xi1> to vector<8x1xi1>
      %217 = vector.broadcast %216 : vector<8x1xi1> to vector<8x128xi1>
      %218 = vector.shape_cast %188 : vector<1x128xf32> to vector<1x128xf32>
      %219 = vector.broadcast %218 : vector<1x128xf32> to vector<8x128xf32>
      %220 = vector.shape_cast %189 : vector<1x128xf32> to vector<1x128xf32>
      %221 = vector.broadcast %220 : vector<1x128xf32> to vector<8x128xf32>
      %222 = arith.select %217, %219, %221 : vector<8x128xi1>, vector<8x128xf32>
      %c2_69 = arith.constant 2 : index
      %c0_70 = arith.constant 0 : index
      %c0_71 = arith.constant 0 : index
      %223 = vector.load %arg11[%c2_69, %c0_70, %c0_71] : memref<8x8x128xf32, #tpu.memory_space<vmem>>, vector<1x8x128xf32>
      %224 = vector.shape_cast %223 : vector<1x8x128xf32> to vector<8x128xf32>
      %225 = vector.shape_cast %222 : vector<8x128xf32> to vector<1x8x128xf32>
      tpu.vector_store %arg11[%c2_69, %c0_70, %c0_71], %225 {strides = array<i32>} : memref<8x8x128xf32, #tpu.memory_space<vmem>>, vector<1x8x128xf32>,
      %c3_i32_72 = arith.constant 3 : i32
      %226 = vector.broadcast %c3_i32_72 : i32 to vector<8x1xi32>
      %227 = arith.cmpi eq, %2, %226 : vector<8x1xi32>
      %228 = vector.shape_cast %227 : vector<8x1xi1> to vector<8x1xi1>
      %229 = vector.broadcast %228 : vector<8x1xi1> to vector<8x128xi1>
      %230 = vector.shape_cast %188 : vector<1x128xf32> to vector<1x128xf32>
      %231 = vector.broadcast %230 : vector<1x128xf32> to vector<8x128xf32>
      %232 = vector.shape_cast %189 : vector<1x128xf32> to vector<1x128xf32>
      %233 = vector.broadcast %232 : vector<1x128xf32> to vector<8x128xf32>
      %234 = arith.select %229, %231, %233 : vector<8x128xi1>, vector<8x128xf32>
      %c3_73 = arith.constant 3 : index
      %c0_74 = arith.constant 0 : index
      %c0_75 = arith.constant 0 : index
      %235 = vector.load %arg11[%c3_73, %c0_74, %c0_75] : memref<8x8x128xf32, #tpu.memory_space<vmem>>, vector<1x8x128xf32>
      %236 = vector.shape_cast %235 : vector<1x8x128xf32> to vector<8x128xf32>
      %237 = vector.shape_cast %234 : vector<8x128xf32> to vector<1x8x128xf32>
      tpu.vector_store %arg11[%c3_73, %c0_74, %c0_75], %237 {strides = array<i32>} : memref<8x8x128xf32, #tpu.memory_space<vmem>>, vector<1x8x128xf32>,
      %c4_i32_76 = arith.constant 4 : i32
      %238 = vector.broadcast %c4_i32_76 : i32 to vector<8x1xi32>
      %239 = arith.cmpi eq, %2, %238 : vector<8x1xi32>
      %240 = vector.shape_cast %239 : vector<8x1xi1> to vector<8x1xi1>
      %241 = vector.broadcast %240 : vector<8x1xi1> to vector<8x128xi1>
      %242 = vector.shape_cast %188 : vector<1x128xf32> to vector<1x128xf32>
      %243 = vector.broadcast %242 : vector<1x128xf32> to vector<8x128xf32>
      %244 = vector.shape_cast %189 : vector<1x128xf32> to vector<1x128xf32>
      %245 = vector.broadcast %244 : vector<1x128xf32> to vector<8x128xf32>
      %246 = arith.select %241, %243, %245 : vector<8x128xi1>, vector<8x128xf32>
      %c4_77 = arith.constant 4 : index
      %c0_78 = arith.constant 0 : index
      %c0_79 = arith.constant 0 : index
      %247 = vector.load %arg11[%c4_77, %c0_78, %c0_79] : memref<8x8x128xf32, #tpu.memory_space<vmem>>, vector<1x8x128xf32>
      %248 = vector.shape_cast %247 : vector<1x8x128xf32> to vector<8x128xf32>
      %249 = vector.shape_cast %246 : vector<8x128xf32> to vector<1x8x128xf32>
      tpu.vector_store %arg11[%c4_77, %c0_78, %c0_79], %249 {strides = array<i32>} : memref<8x8x128xf32, #tpu.memory_space<vmem>>, vector<1x8x128xf32>,
      %c5_i32_80 = arith.constant 5 : i32
      %250 = vector.broadcast %c5_i32_80 : i32 to vector<8x1xi32>
      %251 = arith.cmpi eq, %2, %250 : vector<8x1xi32>
      %252 = vector.shape_cast %251 : vector<8x1xi1> to vector<8x1xi1>
      %253 = vector.broadcast %252 : vector<8x1xi1> to vector<8x128xi1>
      %254 = vector.shape_cast %188 : vector<1x128xf32> to vector<1x128xf32>
      %255 = vector.broadcast %254 : vector<1x128xf32> to vector<8x128xf32>
      %256 = vector.shape_cast %189 : vector<1x128xf32> to vector<1x128xf32>
      %257 = vector.broadcast %256 : vector<1x128xf32> to vector<8x128xf32>
      %258 = arith.select %253, %255, %257 : vector<8x128xi1>, vector<8x128xf32>
      %c5_81 = arith.constant 5 : index
      %c0_82 = arith.constant 0 : index
      %c0_83 = arith.constant 0 : index
      %259 = vector.load %arg11[%c5_81, %c0_82, %c0_83] : memref<8x8x128xf32, #tpu.memory_space<vmem>>, vector<1x8x128xf32>
      %260 = vector.shape_cast %259 : vector<1x8x128xf32> to vector<8x128xf32>
      %261 = vector.shape_cast %258 : vector<8x128xf32> to vector<1x8x128xf32>
      tpu.vector_store %arg11[%c5_81, %c0_82, %c0_83], %261 {strides = array<i32>} : memref<8x8x128xf32, #tpu.memory_space<vmem>>, vector<1x8x128xf32>,
      %c6_i32_84 = arith.constant 6 : i32
      %262 = vector.broadcast %c6_i32_84 : i32 to vector<8x1xi32>
      %263 = arith.cmpi eq, %2, %262 : vector<8x1xi32>
      %264 = vector.shape_cast %263 : vector<8x1xi1> to vector<8x1xi1>
      %265 = vector.broadcast %264 : vector<8x1xi1> to vector<8x128xi1>
      %266 = vector.shape_cast %188 : vector<1x128xf32> to vector<1x128xf32>
      %267 = vector.broadcast %266 : vector<1x128xf32> to vector<8x128xf32>
      %268 = vector.shape_cast %189 : vector<1x128xf32> to vector<1x128xf32>
      %269 = vector.broadcast %268 : vector<1x128xf32> to vector<8x128xf32>
      %270 = arith.select %265, %267, %269 : vector<8x128xi1>, vector<8x128xf32>
      %c6_85 = arith.constant 6 : index
      %c0_86 = arith.constant 0 : index
      %c0_87 = arith.constant 0 : index
      %271 = vector.load %arg11[%c6_85, %c0_86, %c0_87] : memref<8x8x128xf32, #tpu.memory_space<vmem>>, vector<1x8x128xf32>
      %272 = vector.shape_cast %271 : vector<1x8x128xf32> to vector<8x128xf32>
      %273 = vector.shape_cast %270 : vector<8x128xf32> to vector<1x8x128xf32>
      tpu.vector_store %arg11[%c6_85, %c0_86, %c0_87], %273 {strides = array<i32>} : memref<8x8x128xf32, #tpu.memory_space<vmem>>, vector<1x8x128xf32>,
      %c7_i32_88 = arith.constant 7 : i32
      %274 = vector.broadcast %c7_i32_88 : i32 to vector<8x1xi32>
      %275 = arith.cmpi eq, %2, %274 : vector<8x1xi32>
      %276 = vector.shape_cast %275 : vector<8x1xi1> to vector<8x1xi1>
      %277 = vector.broadcast %276 : vector<8x1xi1> to vector<8x128xi1>
      %278 = vector.shape_cast %188 : vector<1x128xf32> to vector<1x128xf32>
      %279 = vector.broadcast %278 : vector<1x128xf32> to vector<8x128xf32>
      %280 = vector.shape_cast %189 : vector<1x128xf32> to vector<1x128xf32>
      %281 = vector.broadcast %280 : vector<1x128xf32> to vector<8x128xf32>
      %282 = arith.select %277, %279, %281 : vector<8x128xi1>, vector<8x128xf32>
      %c7_89 = arith.constant 7 : index
      %c0_90 = arith.constant 0 : index
      %c0_91 = arith.constant 0 : index
      %283 = vector.load %arg11[%c7_89, %c0_90, %c0_91] : memref<8x8x128xf32, #tpu.memory_space<vmem>>, vector<1x8x128xf32>
      %284 = vector.shape_cast %283 : vector<1x8x128xf32> to vector<8x128xf32>
      %285 = vector.shape_cast %282 : vector<8x128xf32> to vector<1x8x128xf32>
      tpu.vector_store %arg11[%c7_89, %c0_90, %c0_91], %285 {strides = array<i32>} : memref<8x8x128xf32, #tpu.memory_space<vmem>>, vector<1x8x128xf32>,
      %c0_92 = arith.constant 0 : index
      %c0_93 = arith.constant 0 : index
      %c0_94 = arith.constant 0 : index
      %286 = vector.load %arg7[%c0_92, %c0_93, %c0_94] : memref<8x4x128xf32, #tpu.memory_space<vmem>>, vector<1x4x128xf32>
      %287 = vector.shape_cast %286 : vector<1x4x128xf32> to vector<4x128xf32>
      %288 = vector.shape_cast %184 : vector<4x128xf32> to vector<1x4x128xf32>
      tpu.vector_store %arg7[%c0_92, %c0_93, %c0_94], %288 {strides = array<i32>} : memref<8x4x128xf32, #tpu.memory_space<vmem>>, vector<1x4x128xf32>,
    } else {
    }
    %c8_i32 = arith.constant 8 : i32
    %169 = arith.muli %arg0, %c8_i32 : i32
    %c1_i32_33 = arith.constant 1 : i32
    %c0_i32_34 = arith.constant 0 : i32
    %170 = arith.select %166, %c1_i32_33, %c0_i32_34 : i32
    %171 = arith.subi %1, %169 : i32
    %c8_i32_35 = arith.constant 8 : i32
    %172 = arith.minsi %c8_i32_35, %171 : i32
    %173 = arith.subi %172, %170 : i32
    %c1_i32_36 = arith.constant 1 : i32
    %c1_i32_37 = arith.constant 1 : i32
    %174 = arith.subi %c1_i32_36, %c1_i32_37 : i32
    %175 = arith.addi %173, %174 : i32
    %c1_i32_38 = arith.constant 1 : i32
    %176 = arith.divsi %175, %c1_i32_38 : i32
    %c1_i32_39 = arith.constant 1 : i32
    %c0_i32_40 = arith.constant 0 : i32
    %177 = arith.subi %176, %c0_i32_40 : i32
    %178 = arith.addi %c0_i32_40, %177 : i32
    %c1_i32_41 = arith.constant 1 : i32
    scf.for %arg12 = %c0_i32_40 to %178 step %c1_i32_41  : i32 {
      %183 = arith.muli %arg12, %c1_i32_39 : i32
      %184 = arith.addi %170, %183 : i32
      %185 = arith.index_cast %184 : i32 to index
      %c0_52 = arith.constant 0 : index
      %c0_53 = arith.constant 0 : index
      %186 = vector.load %arg4[%185, %c0_52, %c0_53] : memref<8x4x128xf32, #tpu.memory_space<vmem>>, vector<1x4x128xf32>
      %187 = vector.shape_cast %186 : vector<1x4x128xf32> to vector<4x128xf32>
      %c0_54 = arith.constant 0 : index
      %c0_55 = arith.constant 0 : index
      %188 = vector.load %arg10[%c0_54, %c0_55] : memref<8x128xf32, #tpu.memory_space<vmem>>, vector<8x128xf32>
      %c0_56 = arith.constant 0 : index
      %c0_57 = arith.constant 0 : index
      %c0_58 = arith.constant 0 : index
      %189 = vector.load %arg11[%c0_56, %c0_57, %c0_58] : memref<8x8x128xf32, #tpu.memory_space<vmem>>, vector<1x8x128xf32>
      %190 = vector.shape_cast %189 : vector<1x8x128xf32> to vector<8x128xf32>
      %c1_59 = arith.constant 1 : index
      %c0_60 = arith.constant 0 : index
      %c0_61 = arith.constant 0 : index
      %191 = vector.load %arg11[%c1_59, %c0_60, %c0_61] : memref<8x8x128xf32, #tpu.memory_space<vmem>>, vector<1x8x128xf32>
      %192 = vector.shape_cast %191 : vector<1x8x128xf32> to vector<8x128xf32>
      %c2_62 = arith.constant 2 : index
      %c0_63 = arith.constant 0 : index
      %c0_64 = arith.constant 0 : index
      %193 = vector.load %arg11[%c2_62, %c0_63, %c0_64] : memref<8x8x128xf32, #tpu.memory_space<vmem>>, vector<1x8x128xf32>
      %194 = vector.shape_cast %193 : vector<1x8x128xf32> to vector<8x128xf32>
      %c3_65 = arith.constant 3 : index
      %c0_66 = arith.constant 0 : index
      %c0_67 = arith.constant 0 : index
      %195 = vector.load %arg11[%c3_65, %c0_66, %c0_67] : memref<8x8x128xf32, #tpu.memory_space<vmem>>, vector<1x8x128xf32>
      %196 = vector.shape_cast %195 : vector<1x8x128xf32> to vector<8x128xf32>
      %c4_68 = arith.constant 4 : index
      %c0_69 = arith.constant 0 : index
      %c0_70 = arith.constant 0 : index
      %197 = vector.load %arg11[%c4_68, %c0_69, %c0_70] : memref<8x8x128xf32, #tpu.memory_space<vmem>>, vector<1x8x128xf32>
      %198 = vector.shape_cast %197 : vector<1x8x128xf32> to vector<8x128xf32>
      %c5_71 = arith.constant 5 : index
      %c0_72 = arith.constant 0 : index
      %c0_73 = arith.constant 0 : index
      %199 = vector.load %arg11[%c5_71, %c0_72, %c0_73] : memref<8x8x128xf32, #tpu.memory_space<vmem>>, vector<1x8x128xf32>
      %200 = vector.shape_cast %199 : vector<1x8x128xf32> to vector<8x128xf32>
      %c6_74 = arith.constant 6 : index
      %c0_75 = arith.constant 0 : index
      %c0_76 = arith.constant 0 : index
      %201 = vector.load %arg11[%c6_74, %c0_75, %c0_76] : memref<8x8x128xf32, #tpu.memory_space<vmem>>, vector<1x8x128xf32>
      %202 = vector.shape_cast %201 : vector<1x8x128xf32> to vector<8x128xf32>
      %c7_77 = arith.constant 7 : index
      %c0_78 = arith.constant 0 : index
      %c0_79 = arith.constant 0 : index
      %203 = vector.load %arg11[%c7_77, %c0_78, %c0_79] : memref<8x8x128xf32, #tpu.memory_space<vmem>>, vector<1x8x128xf32>
      %204 = vector.shape_cast %203 : vector<1x8x128xf32> to vector<8x128xf32>
      %205 = vector.extract_strided_slice %188 {offsets = [4, 0], sizes = [4, 128], strides = [1, 1]} : vector<8x128xf32> to vector<4x128xf32>
      %206 = vector.extract_strided_slice %188 {offsets = [0, 0], sizes = [4, 128], strides = [1, 1]} : vector<8x128xf32> to vector<4x128xf32>
      %207 = tpu.concatenate %205, %206 in 0 : vector<4x128xf32>, vector<4x128xf32> -> vector<8x128xf32>
      %208 = vector.broadcast %10 : vector<8x1xf32> to vector<8x128xf32>
      %209 = arith.mulf %208, %188 : vector<8x128xf32>
      %210 = vector.broadcast %19 : vector<8x1xf32> to vector<8x128xf32>
      %211 = arith.mulf %210, %207 : vector<8x128xf32>
      %212 = arith.addf %209, %211 : vector<8x128xf32>
      %213 = vector.broadcast %20 : vector<1x1xf32> to vector<8x128xf32>
      %214 = arith.mulf %213, %190 : vector<8x128xf32>
      %215 = vector.broadcast %28 : vector<1x1xf32> to vector<8x128xf32>
      %216 = arith.mulf %215, %198 : vector<8x128xf32>
      %217 = arith.addf %214, %216 : vector<8x128xf32>
      %218 = vector.extract_strided_slice %217 {offsets = [4, 0], sizes = [4, 128], strides = [1, 1]} : vector<8x128xf32> to vector<4x128xf32>
      %219 = vector.extract_strided_slice %217 {offsets = [0, 0], sizes = [4, 128], strides = [1, 1]} : vector<8x128xf32> to vector<4x128xf32>
      %220 = tpu.concatenate %218, %219 in 0 : vector<4x128xf32>, vector<4x128xf32> -> vector<8x128xf32>
      %221 = vector.broadcast %10 : vector<8x1xf32> to vector<8x128xf32>
      %222 = arith.mulf %221, %217 : vector<8x128xf32>
      %223 = vector.broadcast %19 : vector<8x1xf32> to vector<8x128xf32>
      %224 = arith.mulf %223, %220 : vector<8x128xf32>
      %225 = arith.addf %222, %224 : vector<8x128xf32>
      %226 = vector.broadcast %105 : vector<8x1xf32> to vector<8x128xf32>
      %227 = arith.addf %225, %226 : vector<8x128xf32>
      %228 = vector.broadcast %21 : vector<1x1xf32> to vector<8x128xf32>
      %229 = arith.mulf %228, %192 : vector<8x128xf32>
      %230 = vector.broadcast %29 : vector<1x1xf32> to vector<8x128xf32>
      %231 = arith.mulf %230, %200 : vector<8x128xf32>
      %232 = arith.addf %229, %231 : vector<8x128xf32>
      %233 = vector.extract_strided_slice %232 {offsets = [4, 0], sizes = [4, 128], strides = [1, 1]} : vector<8x128xf32> to vector<4x128xf32>
      %234 = vector.extract_strided_slice %232 {offsets = [0, 0], sizes = [4, 128], strides = [1, 1]} : vector<8x128xf32> to vector<4x128xf32>
      %235 = tpu.concatenate %233, %234 in 0 : vector<4x128xf32>, vector<4x128xf32> -> vector<8x128xf32>
      %236 = vector.broadcast %10 : vector<8x1xf32> to vector<8x128xf32>
      %237 = arith.mulf %236, %232 : vector<8x128xf32>
      %238 = vector.broadcast %19 : vector<8x1xf32> to vector<8x128xf32>
      %239 = arith.mulf %238, %235 : vector<8x128xf32>
      %240 = arith.addf %237, %239 : vector<8x128xf32>
      %241 = vector.broadcast %110 : vector<8x1xf32> to vector<8x128xf32>
      %242 = arith.addf %240, %241 : vector<8x128xf32>
      %243 = vector.broadcast %22 : vector<1x1xf32> to vector<8x128xf32>
      %244 = arith.mulf %243, %194 : vector<8x128xf32>
      %245 = vector.broadcast %30 : vector<1x1xf32> to vector<8x128xf32>
      %246 = arith.mulf %245, %202 : vector<8x128xf32>
      %247 = arith.addf %244, %246 : vector<8x128xf32>
      %248 = vector.extract_strided_slice %247 {offsets = [4, 0], sizes = [4, 128], strides = [1, 1]} : vector<8x128xf32> to vector<4x128xf32>
      %249 = vector.extract_strided_slice %247 {offsets = [0, 0], sizes = [4, 128], strides = [1, 1]} : vector<8x128xf32> to vector<4x128xf32>
      %250 = tpu.concatenate %248, %249 in 0 : vector<4x128xf32>, vector<4x128xf32> -> vector<8x128xf32>
      %251 = vector.broadcast %10 : vector<8x1xf32> to vector<8x128xf32>
      %252 = arith.mulf %251, %247 : vector<8x128xf32>
      %253 = vector.broadcast %19 : vector<8x1xf32> to vector<8x128xf32>
      %254 = arith.mulf %253, %250 : vector<8x128xf32>
      %255 = arith.addf %252, %254 : vector<8x128xf32>
      %256 = vector.broadcast %115 : vector<8x1xf32> to vector<8x128xf32>
      %257 = arith.addf %255, %256 : vector<8x128xf32>
      %258 = vector.broadcast %23 : vector<1x1xf32> to vector<8x128xf32>
      %259 = arith.mulf %258, %196 : vector<8x128xf32>
      %260 = vector.broadcast %31 : vector<1x1xf32> to vector<8x128xf32>
      %261 = arith.mulf %260, %204 : vector<8x128xf32>
      %262 = arith.addf %259, %261 : vector<8x128xf32>
      %263 = vector.extract_strided_slice %262 {offsets = [4, 0], sizes = [4, 128], strides = [1, 1]} : vector<8x128xf32> to vector<4x128xf32>
      %264 = vector.extract_strided_slice %262 {offsets = [0, 0], sizes = [4, 128], strides = [1, 1]} : vector<8x128xf32> to vector<4x128xf32>
      %265 = tpu.concatenate %263, %264 in 0 : vector<4x128xf32>, vector<4x128xf32> -> vector<8x128xf32>
      %266 = vector.broadcast %10 : vector<8x1xf32> to vector<8x128xf32>
      %267 = arith.mulf %266, %262 : vector<8x128xf32>
      %268 = vector.broadcast %19 : vector<8x1xf32> to vector<8x128xf32>
      %269 = arith.mulf %268, %265 : vector<8x128xf32>
      %270 = arith.addf %267, %269 : vector<8x128xf32>
      %271 = vector.broadcast %120 : vector<8x1xf32> to vector<8x128xf32>
      %272 = arith.addf %270, %271 : vector<8x128xf32>
      %273 = vector.broadcast %24 : vector<1x1xf32> to vector<8x128xf32>
      %274 = arith.mulf %273, %198 : vector<8x128xf32>
      %275 = vector.extract_strided_slice %274 {offsets = [4, 0], sizes = [4, 128], strides = [1, 1]} : vector<8x128xf32> to vector<4x128xf32>
      %276 = vector.extract_strided_slice %274 {offsets = [0, 0], sizes = [4, 128], strides = [1, 1]} : vector<8x128xf32> to vector<4x128xf32>
      %277 = tpu.concatenate %275, %276 in 0 : vector<4x128xf32>, vector<4x128xf32> -> vector<8x128xf32>
      %278 = vector.broadcast %10 : vector<8x1xf32> to vector<8x128xf32>
      %279 = arith.mulf %278, %274 : vector<8x128xf32>
      %280 = vector.broadcast %19 : vector<8x1xf32> to vector<8x128xf32>
      %281 = arith.mulf %280, %277 : vector<8x128xf32>
      %282 = arith.addf %279, %281 : vector<8x128xf32>
      %283 = vector.broadcast %125 : vector<8x1xf32> to vector<8x128xf32>
      %284 = arith.addf %282, %283 : vector<8x128xf32>
      %285 = vector.broadcast %25 : vector<1x1xf32> to vector<8x128xf32>
      %286 = arith.mulf %285, %200 : vector<8x128xf32>
      %287 = vector.extract_strided_slice %286 {offsets = [4, 0], sizes = [4, 128], strides = [1, 1]} : vector<8x128xf32> to vector<4x128xf32>
      %288 = vector.extract_strided_slice %286 {offsets = [0, 0], sizes = [4, 128], strides = [1, 1]} : vector<8x128xf32> to vector<4x128xf32>
      %289 = tpu.concatenate %287, %288 in 0 : vector<4x128xf32>, vector<4x128xf32> -> vector<8x128xf32>
      %290 = vector.broadcast %10 : vector<8x1xf32> to vector<8x128xf32>
      %291 = arith.mulf %290, %286 : vector<8x128xf32>
      %292 = vector.broadcast %19 : vector<8x1xf32> to vector<8x128xf32>
      %293 = arith.mulf %292, %289 : vector<8x128xf32>
      %294 = arith.addf %291, %293 : vector<8x128xf32>
      %295 = vector.broadcast %130 : vector<8x1xf32> to vector<8x128xf32>
      %296 = arith.addf %294, %295 : vector<8x128xf32>
      %297 = vector.broadcast %26 : vector<1x1xf32> to vector<8x128xf32>
      %298 = arith.mulf %297, %202 : vector<8x128xf32>
      %299 = vector.extract_strided_slice %298 {offsets = [4, 0], sizes = [4, 128], strides = [1, 1]} : vector<8x128xf32> to vector<4x128xf32>
      %300 = vector.extract_strided_slice %298 {offsets = [0, 0], sizes = [4, 128], strides = [1, 1]} : vector<8x128xf32> to vector<4x128xf32>
      %301 = tpu.concatenate %299, %300 in 0 : vector<4x128xf32>, vector<4x128xf32> -> vector<8x128xf32>
      %302 = vector.broadcast %10 : vector<8x1xf32> to vector<8x128xf32>
      %303 = arith.mulf %302, %298 : vector<8x128xf32>
      %304 = vector.broadcast %19 : vector<8x1xf32> to vector<8x128xf32>
      %305 = arith.mulf %304, %301 : vector<8x128xf32>
      %306 = arith.addf %303, %305 : vector<8x128xf32>
      %307 = vector.broadcast %135 : vector<8x1xf32> to vector<8x128xf32>
      %308 = arith.addf %306, %307 : vector<8x128xf32>
      %309 = vector.broadcast %27 : vector<1x1xf32> to vector<8x128xf32>
      %310 = arith.mulf %309, %204 : vector<8x128xf32>
      %311 = vector.extract_strided_slice %310 {offsets = [4, 0], sizes = [4, 128], strides = [1, 1]} : vector<8x128xf32> to vector<4x128xf32>
      %312 = vector.extract_strided_slice %310 {offsets = [0, 0], sizes = [4, 128], strides = [1, 1]} : vector<8x128xf32> to vector<4x128xf32>
      %313 = tpu.concatenate %311, %312 in 0 : vector<4x128xf32>, vector<4x128xf32> -> vector<8x128xf32>
      %314 = vector.broadcast %10 : vector<8x1xf32> to vector<8x128xf32>
      %315 = arith.mulf %314, %310 : vector<8x128xf32>
      %316 = vector.broadcast %19 : vector<8x1xf32> to vector<8x128xf32>
      %317 = arith.mulf %316, %313 : vector<8x128xf32>
      %318 = arith.addf %315, %317 : vector<8x128xf32>
      %319 = vector.broadcast %140 : vector<8x1xf32> to vector<8x128xf32>
      %320 = arith.addf %318, %319 : vector<8x128xf32>
      %321 = vector.extract_strided_slice %212 {offsets = [0, 0], sizes = [1, 128], strides = [1, 1]} : vector<8x128xf32> to vector<1x128xf32>
      %322 = vector.broadcast %46 : vector<4x1xf32> to vector<4x128xf32>
      %323 = vector.broadcast %321 : vector<1x128xf32> to vector<4x128xf32>
      %324 = arith.mulf %322, %323 : vector<4x128xf32>
      %325 = vector.extract_strided_slice %212 {offsets = [1, 0], sizes = [1, 128], strides = [1, 1]} : vector<8x128xf32> to vector<1x128xf32>
      %326 = vector.broadcast %47 : vector<4x1xf32> to vector<4x128xf32>
      %327 = vector.broadcast %325 : vector<1x128xf32> to vector<4x128xf32>
      %328 = arith.mulf %326, %327 : vector<4x128xf32>
      %329 = arith.addf %324, %328 : vector<4x128xf32>
      %330 = vector.extract_strided_slice %212 {offsets = [2, 0], sizes = [1, 128], strides = [1, 1]} : vector<8x128xf32> to vector<1x128xf32>
      %331 = vector.broadcast %48 : vector<4x1xf32> to vector<4x128xf32>
      %332 = vector.broadcast %330 : vector<1x128xf32> to vector<4x128xf32>
      %333 = arith.mulf %331, %332 : vector<4x128xf32>
      %334 = arith.addf %329, %333 : vector<4x128xf32>
      %335 = vector.extract_strided_slice %212 {offsets = [3, 0], sizes = [1, 128], strides = [1, 1]} : vector<8x128xf32> to vector<1x128xf32>
      %336 = vector.broadcast %49 : vector<4x1xf32> to vector<4x128xf32>
      %337 = vector.broadcast %335 : vector<1x128xf32> to vector<4x128xf32>
      %338 = arith.mulf %336, %337 : vector<4x128xf32>
      %339 = arith.addf %334, %338 : vector<4x128xf32>
      %340 = vector.extract_strided_slice %212 {offsets = [4, 0], sizes = [1, 128], strides = [1, 1]} : vector<8x128xf32> to vector<1x128xf32>
      %341 = vector.broadcast %50 : vector<4x1xf32> to vector<4x128xf32>
      %342 = vector.broadcast %340 : vector<1x128xf32> to vector<4x128xf32>
      %343 = arith.mulf %341, %342 : vector<4x128xf32>
      %344 = arith.addf %339, %343 : vector<4x128xf32>
      %345 = vector.extract_strided_slice %212 {offsets = [5, 0], sizes = [1, 128], strides = [1, 1]} : vector<8x128xf32> to vector<1x128xf32>
      %346 = vector.broadcast %51 : vector<4x1xf32> to vector<4x128xf32>
      %347 = vector.broadcast %345 : vector<1x128xf32> to vector<4x128xf32>
      %348 = arith.mulf %346, %347 : vector<4x128xf32>
      %349 = arith.addf %344, %348 : vector<4x128xf32>
      %350 = vector.extract_strided_slice %212 {offsets = [6, 0], sizes = [1, 128], strides = [1, 1]} : vector<8x128xf32> to vector<1x128xf32>
      %351 = vector.broadcast %52 : vector<4x1xf32> to vector<4x128xf32>
      %352 = vector.broadcast %350 : vector<1x128xf32> to vector<4x128xf32>
      %353 = arith.mulf %351, %352 : vector<4x128xf32>
      %354 = arith.addf %349, %353 : vector<4x128xf32>
      %355 = vector.extract_strided_slice %212 {offsets = [7, 0], sizes = [1, 128], strides = [1, 1]} : vector<8x128xf32> to vector<1x128xf32>
      %356 = vector.broadcast %53 : vector<4x1xf32> to vector<4x128xf32>
      %357 = vector.broadcast %355 : vector<1x128xf32> to vector<4x128xf32>
      %358 = arith.mulf %356, %357 : vector<4x128xf32>
      %359 = arith.addf %354, %358 : vector<4x128xf32>
      %360 = arith.subf %187, %359 : vector<4x128xf32>
      %361 = vector.broadcast %69 : f32 to vector<8x128xf32>
      %362 = arith.mulf %361, %227 : vector<8x128xf32>
      %363 = vector.broadcast %70 : f32 to vector<8x128xf32>
      %364 = arith.mulf %363, %242 : vector<8x128xf32>
      %365 = arith.addf %362, %364 : vector<8x128xf32>
      %366 = vector.broadcast %71 : f32 to vector<8x128xf32>
      %367 = arith.mulf %366, %257 : vector<8x128xf32>
      %368 = arith.addf %365, %367 : vector<8x128xf32>
      %369 = vector.broadcast %72 : f32 to vector<8x128xf32>
      %370 = arith.mulf %369, %272 : vector<8x128xf32>
      %371 = arith.addf %368, %370 : vector<8x128xf32>
      %372 = vector.broadcast %73 : f32 to vector<8x128xf32>
      %373 = arith.mulf %372, %284 : vector<8x128xf32>
      %374 = arith.addf %371, %373 : vector<8x128xf32>
      %375 = vector.broadcast %74 : f32 to vector<8x128xf32>
      %376 = arith.mulf %375, %296 : vector<8x128xf32>
      %377 = arith.addf %374, %376 : vector<8x128xf32>
      %378 = vector.broadcast %75 : f32 to vector<8x128xf32>
      %379 = arith.mulf %378, %308 : vector<8x128xf32>
      %380 = arith.addf %377, %379 : vector<8x128xf32>
      %381 = vector.broadcast %76 : f32 to vector<8x128xf32>
      %382 = arith.mulf %381, %320 : vector<8x128xf32>
      %383 = arith.addf %380, %382 : vector<8x128xf32>
      %384 = vector.broadcast %77 : f32 to vector<8x128xf32>
      %385 = arith.mulf %384, %227 : vector<8x128xf32>
      %386 = vector.broadcast %78 : f32 to vector<8x128xf32>
      %387 = arith.mulf %386, %242 : vector<8x128xf32>
      %388 = arith.addf %385, %387 : vector<8x128xf32>
      %389 = vector.broadcast %79 : f32 to vector<8x128xf32>
      %390 = arith.mulf %389, %257 : vector<8x128xf32>
      %391 = arith.addf %388, %390 : vector<8x128xf32>
      %392 = vector.broadcast %80 : f32 to vector<8x128xf32>
      %393 = arith.mulf %392, %272 : vector<8x128xf32>
      %394 = arith.addf %391, %393 : vector<8x128xf32>
      %395 = vector.broadcast %81 : f32 to vector<8x128xf32>
      %396 = arith.mulf %395, %284 : vector<8x128xf32>
      %397 = arith.addf %394, %396 : vector<8x128xf32>
      %398 = vector.broadcast %82 : f32 to vector<8x128xf32>
      %399 = arith.mulf %398, %296 : vector<8x128xf32>
      %400 = arith.addf %397, %399 : vector<8x128xf32>
      %401 = vector.broadcast %83 : f32 to vector<8x128xf32>
      %402 = arith.mulf %401, %308 : vector<8x128xf32>
      %403 = arith.addf %400, %402 : vector<8x128xf32>
      %404 = vector.broadcast %84 : f32 to vector<8x128xf32>
      %405 = arith.mulf %404, %320 : vector<8x128xf32>
      %406 = arith.addf %403, %405 : vector<8x128xf32>
      %407 = vector.broadcast %85 : f32 to vector<8x128xf32>
      %408 = arith.mulf %407, %227 : vector<8x128xf32>
      %409 = vector.broadcast %86 : f32 to vector<8x128xf32>
      %410 = arith.mulf %409, %242 : vector<8x128xf32>
      %411 = arith.addf %408, %410 : vector<8x128xf32>
      %412 = vector.broadcast %87 : f32 to vector<8x128xf32>
      %413 = arith.mulf %412, %257 : vector<8x128xf32>
      %414 = arith.addf %411, %413 : vector<8x128xf32>
      %415 = vector.broadcast %88 : f32 to vector<8x128xf32>
      %416 = arith.mulf %415, %272 : vector<8x128xf32>
      %417 = arith.addf %414, %416 : vector<8x128xf32>
      %418 = vector.broadcast %89 : f32 to vector<8x128xf32>
      %419 = arith.mulf %418, %284 : vector<8x128xf32>
      %420 = arith.addf %417, %419 : vector<8x128xf32>
      %421 = vector.broadcast %90 : f32 to vector<8x128xf32>
      %422 = arith.mulf %421, %296 : vector<8x128xf32>
      %423 = arith.addf %420, %422 : vector<8x128xf32>
      %424 = vector.broadcast %91 : f32 to vector<8x128xf32>
      %425 = arith.mulf %424, %308 : vector<8x128xf32>
      %426 = arith.addf %423, %425 : vector<8x128xf32>
      %427 = vector.broadcast %92 : f32 to vector<8x128xf32>
      %428 = arith.mulf %427, %320 : vector<8x128xf32>
      %429 = arith.addf %426, %428 : vector<8x128xf32>
      %430 = vector.broadcast %93 : f32 to vector<8x128xf32>
      %431 = arith.mulf %430, %227 : vector<8x128xf32>
      %432 = vector.broadcast %94 : f32 to vector<8x128xf32>
      %433 = arith.mulf %432, %242 : vector<8x128xf32>
      %434 = arith.addf %431, %433 : vector<8x128xf32>
      %435 = vector.broadcast %95 : f32 to vector<8x128xf32>
      %436 = arith.mulf %435, %257 : vector<8x128xf32>
      %437 = arith.addf %434, %436 : vector<8x128xf32>
      %438 = vector.broadcast %96 : f32 to vector<8x128xf32>
      %439 = arith.mulf %438, %272 : vector<8x128xf32>
      %440 = arith.addf %437, %439 : vector<8x128xf32>
      %441 = vector.broadcast %97 : f32 to vector<8x128xf32>
      %442 = arith.mulf %441, %284 : vector<8x128xf32>
      %443 = arith.addf %440, %442 : vector<8x128xf32>
      %444 = vector.broadcast %98 : f32 to vector<8x128xf32>
      %445 = arith.mulf %444, %296 : vector<8x128xf32>
      %446 = arith.addf %443, %445 : vector<8x128xf32>
      %447 = vector.broadcast %99 : f32 to vector<8x128xf32>
      %448 = arith.mulf %447, %308 : vector<8x128xf32>
      %449 = arith.addf %446, %448 : vector<8x128xf32>
      %450 = vector.broadcast %100 : f32 to vector<8x128xf32>
      %451 = arith.mulf %450, %320 : vector<8x128xf32>
      %452 = arith.addf %449, %451 : vector<8x128xf32>
      %453 = vector.extract_strided_slice %383 {offsets = [0, 0], sizes = [1, 128], strides = [1, 1]} : vector<8x128xf32> to vector<1x128xf32>
      %454 = vector.broadcast %46 : vector<4x1xf32> to vector<4x128xf32>
      %455 = vector.broadcast %453 : vector<1x128xf32> to vector<4x128xf32>
      %456 = arith.mulf %454, %455 : vector<4x128xf32>
      %457 = vector.extract_strided_slice %383 {offsets = [1, 0], sizes = [1, 128], strides = [1, 1]} : vector<8x128xf32> to vector<1x128xf32>
      %458 = vector.broadcast %47 : vector<4x1xf32> to vector<4x128xf32>
      %459 = vector.broadcast %457 : vector<1x128xf32> to vector<4x128xf32>
      %460 = arith.mulf %458, %459 : vector<4x128xf32>
      %461 = arith.addf %456, %460 : vector<4x128xf32>
      %462 = vector.extract_strided_slice %383 {offsets = [2, 0], sizes = [1, 128], strides = [1, 1]} : vector<8x128xf32> to vector<1x128xf32>
      %463 = vector.broadcast %48 : vector<4x1xf32> to vector<4x128xf32>
      %464 = vector.broadcast %462 : vector<1x128xf32> to vector<4x128xf32>
      %465 = arith.mulf %463, %464 : vector<4x128xf32>
      %466 = arith.addf %461, %465 : vector<4x128xf32>
      %467 = vector.extract_strided_slice %383 {offsets = [3, 0], sizes = [1, 128], strides = [1, 1]} : vector<8x128xf32> to vector<1x128xf32>
      %468 = vector.broadcast %49 : vector<4x1xf32> to vector<4x128xf32>
      %469 = vector.broadcast %467 : vector<1x128xf32> to vector<4x128xf32>
      %470 = arith.mulf %468, %469 : vector<4x128xf32>
      %471 = arith.addf %466, %470 : vector<4x128xf32>
      %472 = vector.extract_strided_slice %383 {offsets = [4, 0], sizes = [1, 128], strides = [1, 1]} : vector<8x128xf32> to vector<1x128xf32>
      %473 = vector.broadcast %50 : vector<4x1xf32> to vector<4x128xf32>
      %474 = vector.broadcast %472 : vector<1x128xf32> to vector<4x128xf32>
      %475 = arith.mulf %473, %474 : vector<4x128xf32>
      %476 = arith.addf %471, %475 : vector<4x128xf32>
      %477 = vector.extract_strided_slice %383 {offsets = [5, 0], sizes = [1, 128], strides = [1, 1]} : vector<8x128xf32> to vector<1x128xf32>
      %478 = vector.broadcast %51 : vector<4x1xf32> to vector<4x128xf32>
      %479 = vector.broadcast %477 : vector<1x128xf32> to vector<4x128xf32>
      %480 = arith.mulf %478, %479 : vector<4x128xf32>
      %481 = arith.addf %476, %480 : vector<4x128xf32>
      %482 = vector.extract_strided_slice %383 {offsets = [6, 0], sizes = [1, 128], strides = [1, 1]} : vector<8x128xf32> to vector<1x128xf32>
      %483 = vector.broadcast %52 : vector<4x1xf32> to vector<4x128xf32>
      %484 = vector.broadcast %482 : vector<1x128xf32> to vector<4x128xf32>
      %485 = arith.mulf %483, %484 : vector<4x128xf32>
      %486 = arith.addf %481, %485 : vector<4x128xf32>
      %487 = vector.extract_strided_slice %383 {offsets = [7, 0], sizes = [1, 128], strides = [1, 1]} : vector<8x128xf32> to vector<1x128xf32>
      %488 = vector.broadcast %53 : vector<4x1xf32> to vector<4x128xf32>
      %489 = vector.broadcast %487 : vector<1x128xf32> to vector<4x128xf32>
      %490 = arith.mulf %488, %489 : vector<4x128xf32>
      %491 = arith.addf %486, %490 : vector<4x128xf32>
      %492 = vector.broadcast %145 : vector<4x1xf32> to vector<4x128xf32>
      %493 = arith.addf %491, %492 : vector<4x128xf32>
      %494 = vector.extract_strided_slice %406 {offsets = [0, 0], sizes = [1, 128], strides = [1, 1]} : vector<8x128xf32> to vector<1x128xf32>
      %495 = vector.broadcast %46 : vector<4x1xf32> to vector<4x128xf32>
      %496 = vector.broadcast %494 : vector<1x128xf32> to vector<4x128xf32>
      %497 = arith.mulf %495, %496 : vector<4x128xf32>
      %498 = vector.extract_strided_slice %406 {offsets = [1, 0], sizes = [1, 128], strides = [1, 1]} : vector<8x128xf32> to vector<1x128xf32>
      %499 = vector.broadcast %47 : vector<4x1xf32> to vector<4x128xf32>
      %500 = vector.broadcast %498 : vector<1x128xf32> to vector<4x128xf32>
      %501 = arith.mulf %499, %500 : vector<4x128xf32>
      %502 = arith.addf %497, %501 : vector<4x128xf32>
      %503 = vector.extract_strided_slice %406 {offsets = [2, 0], sizes = [1, 128], strides = [1, 1]} : vector<8x128xf32> to vector<1x128xf32>
      %504 = vector.broadcast %48 : vector<4x1xf32> to vector<4x128xf32>
      %505 = vector.broadcast %503 : vector<1x128xf32> to vector<4x128xf32>
      %506 = arith.mulf %504, %505 : vector<4x128xf32>
      %507 = arith.addf %502, %506 : vector<4x128xf32>
      %508 = vector.extract_strided_slice %406 {offsets = [3, 0], sizes = [1, 128], strides = [1, 1]} : vector<8x128xf32> to vector<1x128xf32>
      %509 = vector.broadcast %49 : vector<4x1xf32> to vector<4x128xf32>
      %510 = vector.broadcast %508 : vector<1x128xf32> to vector<4x128xf32>
      %511 = arith.mulf %509, %510 : vector<4x128xf32>
      %512 = arith.addf %507, %511 : vector<4x128xf32>
      %513 = vector.extract_strided_slice %406 {offsets = [4, 0], sizes = [1, 128], strides = [1, 1]} : vector<8x128xf32> to vector<1x128xf32>
      %514 = vector.broadcast %50 : vector<4x1xf32> to vector<4x128xf32>
      %515 = vector.broadcast %513 : vector<1x128xf32> to vector<4x128xf32>
      %516 = arith.mulf %514, %515 : vector<4x128xf32>
      %517 = arith.addf %512, %516 : vector<4x128xf32>
      %518 = vector.extract_strided_slice %406 {offsets = [5, 0], sizes = [1, 128], strides = [1, 1]} : vector<8x128xf32> to vector<1x128xf32>
      %519 = vector.broadcast %51 : vector<4x1xf32> to vector<4x128xf32>
      %520 = vector.broadcast %518 : vector<1x128xf32> to vector<4x128xf32>
      %521 = arith.mulf %519, %520 : vector<4x128xf32>
      %522 = arith.addf %517, %521 : vector<4x128xf32>
      %523 = vector.extract_strided_slice %406 {offsets = [6, 0], sizes = [1, 128], strides = [1, 1]} : vector<8x128xf32> to vector<1x128xf32>
      %524 = vector.broadcast %52 : vector<4x1xf32> to vector<4x128xf32>
      %525 = vector.broadcast %523 : vector<1x128xf32> to vector<4x128xf32>
      %526 = arith.mulf %524, %525 : vector<4x128xf32>
      %527 = arith.addf %522, %526 : vector<4x128xf32>
      %528 = vector.extract_strided_slice %406 {offsets = [7, 0], sizes = [1, 128], strides = [1, 1]} : vector<8x128xf32> to vector<1x128xf32>
      %529 = vector.broadcast %53 : vector<4x1xf32> to vector<4x128xf32>
      %530 = vector.broadcast %528 : vector<1x128xf32> to vector<4x128xf32>
      %531 = arith.mulf %529, %530 : vector<4x128xf32>
      %532 = arith.addf %527, %531 : vector<4x128xf32>
      %533 = vector.broadcast %150 : vector<4x1xf32> to vector<4x128xf32>
      %534 = arith.addf %532, %533 : vector<4x128xf32>
      %535 = vector.extract_strided_slice %429 {offsets = [0, 0], sizes = [1, 128], strides = [1, 1]} : vector<8x128xf32> to vector<1x128xf32>
      %536 = vector.broadcast %46 : vector<4x1xf32> to vector<4x128xf32>
      %537 = vector.broadcast %535 : vector<1x128xf32> to vector<4x128xf32>
      %538 = arith.mulf %536, %537 : vector<4x128xf32>
      %539 = vector.extract_strided_slice %429 {offsets = [1, 0], sizes = [1, 128], strides = [1, 1]} : vector<8x128xf32> to vector<1x128xf32>
      %540 = vector.broadcast %47 : vector<4x1xf32> to vector<4x128xf32>
      %541 = vector.broadcast %539 : vector<1x128xf32> to vector<4x128xf32>
      %542 = arith.mulf %540, %541 : vector<4x128xf32>
      %543 = arith.addf %538, %542 : vector<4x128xf32>
      %544 = vector.extract_strided_slice %429 {offsets = [2, 0], sizes = [1, 128], strides = [1, 1]} : vector<8x128xf32> to vector<1x128xf32>
      %545 = vector.broadcast %48 : vector<4x1xf32> to vector<4x128xf32>
      %546 = vector.broadcast %544 : vector<1x128xf32> to vector<4x128xf32>
      %547 = arith.mulf %545, %546 : vector<4x128xf32>
      %548 = arith.addf %543, %547 : vector<4x128xf32>
      %549 = vector.extract_strided_slice %429 {offsets = [3, 0], sizes = [1, 128], strides = [1, 1]} : vector<8x128xf32> to vector<1x128xf32>
      %550 = vector.broadcast %49 : vector<4x1xf32> to vector<4x128xf32>
      %551 = vector.broadcast %549 : vector<1x128xf32> to vector<4x128xf32>
      %552 = arith.mulf %550, %551 : vector<4x128xf32>
      %553 = arith.addf %548, %552 : vector<4x128xf32>
      %554 = vector.extract_strided_slice %429 {offsets = [4, 0], sizes = [1, 128], strides = [1, 1]} : vector<8x128xf32> to vector<1x128xf32>
      %555 = vector.broadcast %50 : vector<4x1xf32> to vector<4x128xf32>
      %556 = vector.broadcast %554 : vector<1x128xf32> to vector<4x128xf32>
      %557 = arith.mulf %555, %556 : vector<4x128xf32>
      %558 = arith.addf %553, %557 : vector<4x128xf32>
      %559 = vector.extract_strided_slice %429 {offsets = [5, 0], sizes = [1, 128], strides = [1, 1]} : vector<8x128xf32> to vector<1x128xf32>
      %560 = vector.broadcast %51 : vector<4x1xf32> to vector<4x128xf32>
      %561 = vector.broadcast %559 : vector<1x128xf32> to vector<4x128xf32>
      %562 = arith.mulf %560, %561 : vector<4x128xf32>
      %563 = arith.addf %558, %562 : vector<4x128xf32>
      %564 = vector.extract_strided_slice %429 {offsets = [6, 0], sizes = [1, 128], strides = [1, 1]} : vector<8x128xf32> to vector<1x128xf32>
      %565 = vector.broadcast %52 : vector<4x1xf32> to vector<4x128xf32>
      %566 = vector.broadcast %564 : vector<1x128xf32> to vector<4x128xf32>
      %567 = arith.mulf %565, %566 : vector<4x128xf32>
      %568 = arith.addf %563, %567 : vector<4x128xf32>
      %569 = vector.extract_strided_slice %429 {offsets = [7, 0], sizes = [1, 128], strides = [1, 1]} : vector<8x128xf32> to vector<1x128xf32>
      %570 = vector.broadcast %53 : vector<4x1xf32> to vector<4x128xf32>
      %571 = vector.broadcast %569 : vector<1x128xf32> to vector<4x128xf32>
      %572 = arith.mulf %570, %571 : vector<4x128xf32>
      %573 = arith.addf %568, %572 : vector<4x128xf32>
      %574 = vector.broadcast %155 : vector<4x1xf32> to vector<4x128xf32>
      %575 = arith.addf %573, %574 : vector<4x128xf32>
      %576 = vector.extract_strided_slice %452 {offsets = [0, 0], sizes = [1, 128], strides = [1, 1]} : vector<8x128xf32> to vector<1x128xf32>
      %577 = vector.broadcast %46 : vector<4x1xf32> to vector<4x128xf32>
      %578 = vector.broadcast %576 : vector<1x128xf32> to vector<4x128xf32>
      %579 = arith.mulf %577, %578 : vector<4x128xf32>
      %580 = vector.extract_strided_slice %452 {offsets = [1, 0], sizes = [1, 128], strides = [1, 1]} : vector<8x128xf32> to vector<1x128xf32>
      %581 = vector.broadcast %47 : vector<4x1xf32> to vector<4x128xf32>
      %582 = vector.broadcast %580 : vector<1x128xf32> to vector<4x128xf32>
      %583 = arith.mulf %581, %582 : vector<4x128xf32>
      %584 = arith.addf %579, %583 : vector<4x128xf32>
      %585 = vector.extract_strided_slice %452 {offsets = [2, 0], sizes = [1, 128], strides = [1, 1]} : vector<8x128xf32> to vector<1x128xf32>
      %586 = vector.broadcast %48 : vector<4x1xf32> to vector<4x128xf32>
      %587 = vector.broadcast %585 : vector<1x128xf32> to vector<4x128xf32>
      %588 = arith.mulf %586, %587 : vector<4x128xf32>
      %589 = arith.addf %584, %588 : vector<4x128xf32>
      %590 = vector.extract_strided_slice %452 {offsets = [3, 0], sizes = [1, 128], strides = [1, 1]} : vector<8x128xf32> to vector<1x128xf32>
      %591 = vector.broadcast %49 : vector<4x1xf32> to vector<4x128xf32>
      %592 = vector.broadcast %590 : vector<1x128xf32> to vector<4x128xf32>
      %593 = arith.mulf %591, %592 : vector<4x128xf32>
      %594 = arith.addf %589, %593 : vector<4x128xf32>
      %595 = vector.extract_strided_slice %452 {offsets = [4, 0], sizes = [1, 128], strides = [1, 1]} : vector<8x128xf32> to vector<1x128xf32>
      %596 = vector.broadcast %50 : vector<4x1xf32> to vector<4x128xf32>
      %597 = vector.broadcast %595 : vector<1x128xf32> to vector<4x128xf32>
      %598 = arith.mulf %596, %597 : vector<4x128xf32>
      %599 = arith.addf %594, %598 : vector<4x128xf32>
      %600 = vector.extract_strided_slice %452 {offsets = [5, 0], sizes = [1, 128], strides = [1, 1]} : vector<8x128xf32> to vector<1x128xf32>
      %601 = vector.broadcast %51 : vector<4x1xf32> to vector<4x128xf32>
      %602 = vector.broadcast %600 : vector<1x128xf32> to vector<4x128xf32>
      %603 = arith.mulf %601, %602 : vector<4x128xf32>
      %604 = arith.addf %599, %603 : vector<4x128xf32>
      %605 = vector.extract_strided_slice %452 {offsets = [6, 0], sizes = [1, 128], strides = [1, 1]} : vector<8x128xf32> to vector<1x128xf32>
      %606 = vector.broadcast %52 : vector<4x1xf32> to vector<4x128xf32>
      %607 = vector.broadcast %605 : vector<1x128xf32> to vector<4x128xf32>
      %608 = arith.mulf %606, %607 : vector<4x128xf32>
      %609 = arith.addf %604, %608 : vector<4x128xf32>
      %610 = vector.extract_strided_slice %452 {offsets = [7, 0], sizes = [1, 128], strides = [1, 1]} : vector<8x128xf32> to vector<1x128xf32>
      %611 = vector.broadcast %53 : vector<4x1xf32> to vector<4x128xf32>
      %612 = vector.broadcast %610 : vector<1x128xf32> to vector<4x128xf32>
      %613 = arith.mulf %611, %612 : vector<4x128xf32>
      %614 = arith.addf %609, %613 : vector<4x128xf32>
      %615 = vector.broadcast %160 : vector<4x1xf32> to vector<4x128xf32>
      %616 = arith.addf %614, %615 : vector<4x128xf32>
      %617 = vector.extract_strided_slice %493 {offsets = [0, 0], sizes = [1, 128], strides = [1, 1]} : vector<4x128xf32> to vector<1x128xf32>
      %618 = vector.extract_strided_slice %534 {offsets = [0, 0], sizes = [1, 128], strides = [1, 1]} : vector<4x128xf32> to vector<1x128xf32>
      %619 = vector.extract_strided_slice %575 {offsets = [0, 0], sizes = [1, 128], strides = [1, 1]} : vector<4x128xf32> to vector<1x128xf32>
      %620 = vector.extract_strided_slice %616 {offsets = [0, 0], sizes = [1, 128], strides = [1, 1]} : vector<4x128xf32> to vector<1x128xf32>
      %621 = vector.extract_strided_slice %493 {offsets = [1, 0], sizes = [1, 128], strides = [1, 1]} : vector<4x128xf32> to vector<1x128xf32>
      %622 = vector.extract_strided_slice %534 {offsets = [1, 0], sizes = [1, 128], strides = [1, 1]} : vector<4x128xf32> to vector<1x128xf32>
      %623 = vector.extract_strided_slice %575 {offsets = [1, 0], sizes = [1, 128], strides = [1, 1]} : vector<4x128xf32> to vector<1x128xf32>
      %624 = vector.extract_strided_slice %616 {offsets = [1, 0], sizes = [1, 128], strides = [1, 1]} : vector<4x128xf32> to vector<1x128xf32>
      %625 = vector.extract_strided_slice %493 {offsets = [2, 0], sizes = [1, 128], strides = [1, 1]} : vector<4x128xf32> to vector<1x128xf32>
      %626 = vector.extract_strided_slice %534 {offsets = [2, 0], sizes = [1, 128], strides = [1, 1]} : vector<4x128xf32> to vector<1x128xf32>
      %627 = vector.extract_strided_slice %575 {offsets = [2, 0], sizes = [1, 128], strides = [1, 1]} : vector<4x128xf32> to vector<1x128xf32>
      %628 = vector.extract_strided_slice %616 {offsets = [2, 0], sizes = [1, 128], strides = [1, 1]} : vector<4x128xf32> to vector<1x128xf32>
      %629 = vector.extract_strided_slice %493 {offsets = [3, 0], sizes = [1, 128], strides = [1, 1]} : vector<4x128xf32> to vector<1x128xf32>
      %630 = vector.extract_strided_slice %534 {offsets = [3, 0], sizes = [1, 128], strides = [1, 1]} : vector<4x128xf32> to vector<1x128xf32>
      %631 = vector.extract_strided_slice %575 {offsets = [3, 0], sizes = [1, 128], strides = [1, 1]} : vector<4x128xf32> to vector<1x128xf32>
      %632 = vector.extract_strided_slice %616 {offsets = [3, 0], sizes = [1, 128], strides = [1, 1]} : vector<4x128xf32> to vector<1x128xf32>
      %633 = arith.mulf %627, %632 : vector<1x128xf32>
      %634 = arith.mulf %628, %631 : vector<1x128xf32>
      %635 = arith.subf %633, %634 : vector<1x128xf32>
      %636 = arith.mulf %622, %635 : vector<1x128xf32>
      %637 = arith.mulf %626, %632 : vector<1x128xf32>
      %638 = arith.mulf %628, %630 : vector<1x128xf32>
      %639 = arith.subf %637, %638 : vector<1x128xf32>
      %640 = arith.mulf %623, %639 : vector<1x128xf32>
      %641 = arith.subf %636, %640 : vector<1x128xf32>
      %642 = arith.mulf %626, %631 : vector<1x128xf32>
      %643 = arith.mulf %627, %630 : vector<1x128xf32>
      %644 = arith.subf %642, %643 : vector<1x128xf32>
      %645 = arith.mulf %624, %644 : vector<1x128xf32>
      %646 = arith.addf %641, %645 : vector<1x128xf32>
      %647 = arith.mulf %627, %632 : vector<1x128xf32>
      %648 = arith.mulf %628, %631 : vector<1x128xf32>
      %649 = arith.subf %647, %648 : vector<1x128xf32>
      %650 = arith.mulf %621, %649 : vector<1x128xf32>
      %651 = arith.mulf %625, %632 : vector<1x128xf32>
      %652 = arith.mulf %628, %629 : vector<1x128xf32>
      %653 = arith.subf %651, %652 : vector<1x128xf32>
      %654 = arith.mulf %623, %653 : vector<1x128xf32>
      %655 = arith.subf %650, %654 : vector<1x128xf32>
      %656 = arith.mulf %625, %631 : vector<1x128xf32>
      %657 = arith.mulf %627, %629 : vector<1x128xf32>
      %658 = arith.subf %656, %657 : vector<1x128xf32>
      %659 = arith.mulf %624, %658 : vector<1x128xf32>
      %660 = arith.addf %655, %659 : vector<1x128xf32>
      %cst_80 = arith.constant 0.000000e+00 : f32
      %661 = vector.broadcast %cst_80 : f32 to vector<1x128xf32>
      %662 = arith.subf %661, %660 : vector<1x128xf32>
      %663 = arith.mulf %626, %632 : vector<1x128xf32>
      %664 = arith.mulf %628, %630 : vector<1x128xf32>
      %665 = arith.subf %663, %664 : vector<1x128xf32>
      %666 = arith.mulf %621, %665 : vector<1x128xf32>
      %667 = arith.mulf %625, %632 : vector<1x128xf32>
      %668 = arith.mulf %628, %629 : vector<1x128xf32>
      %669 = arith.subf %667, %668 : vector<1x128xf32>
      %670 = arith.mulf %622, %669 : vector<1x128xf32>
      %671 = arith.subf %666, %670 : vector<1x128xf32>
      %672 = arith.mulf %625, %630 : vector<1x128xf32>
      %673 = arith.mulf %626, %629 : vector<1x128xf32>
      %674 = arith.subf %672, %673 : vector<1x128xf32>
      %675 = arith.mulf %624, %674 : vector<1x128xf32>
      %676 = arith.addf %671, %675 : vector<1x128xf32>
      %677 = arith.mulf %626, %631 : vector<1x128xf32>
      %678 = arith.mulf %627, %630 : vector<1x128xf32>
      %679 = arith.subf %677, %678 : vector<1x128xf32>
      %680 = arith.mulf %621, %679 : vector<1x128xf32>
      %681 = arith.mulf %625, %631 : vector<1x128xf32>
      %682 = arith.mulf %627, %629 : vector<1x128xf32>
      %683 = arith.subf %681, %682 : vector<1x128xf32>
      %684 = arith.mulf %622, %683 : vector<1x128xf32>
      %685 = arith.subf %680, %684 : vector<1x128xf32>
      %686 = arith.mulf %625, %630 : vector<1x128xf32>
      %687 = arith.mulf %626, %629 : vector<1x128xf32>
      %688 = arith.subf %686, %687 : vector<1x128xf32>
      %689 = arith.mulf %623, %688 : vector<1x128xf32>
      %690 = arith.addf %685, %689 : vector<1x128xf32>
      %cst_81 = arith.constant 0.000000e+00 : f32
      %691 = vector.broadcast %cst_81 : f32 to vector<1x128xf32>
      %692 = arith.subf %691, %690 : vector<1x128xf32>
      %693 = arith.mulf %627, %632 : vector<1x128xf32>
      %694 = arith.mulf %628, %631 : vector<1x128xf32>
      %695 = arith.subf %693, %694 : vector<1x128xf32>
      %696 = arith.mulf %618, %695 : vector<1x128xf32>
      %697 = arith.mulf %626, %632 : vector<1x128xf32>
      %698 = arith.mulf %628, %630 : vector<1x128xf32>
      %699 = arith.subf %697, %698 : vector<1x128xf32>
      %700 = arith.mulf %619, %699 : vector<1x128xf32>
      %701 = arith.subf %696, %700 : vector<1x128xf32>
      %702 = arith.mulf %626, %631 : vector<1x128xf32>
      %703 = arith.mulf %627, %630 : vector<1x128xf32>
      %704 = arith.subf %702, %703 : vector<1x128xf32>
      %705 = arith.mulf %620, %704 : vector<1x128xf32>
      %706 = arith.addf %701, %705 : vector<1x128xf32>
      %cst_82 = arith.constant 0.000000e+00 : f32
      %707 = vector.broadcast %cst_82 : f32 to vector<1x128xf32>
      %708 = arith.subf %707, %706 : vector<1x128xf32>
      %709 = arith.mulf %627, %632 : vector<1x128xf32>
      %710 = arith.mulf %628, %631 : vector<1x128xf32>
      %711 = arith.subf %709, %710 : vector<1x128xf32>
      %712 = arith.mulf %617, %711 : vector<1x128xf32>
      %713 = arith.mulf %625, %632 : vector<1x128xf32>
      %714 = arith.mulf %628, %629 : vector<1x128xf32>
      %715 = arith.subf %713, %714 : vector<1x128xf32>
      %716 = arith.mulf %619, %715 : vector<1x128xf32>
      %717 = arith.subf %712, %716 : vector<1x128xf32>
      %718 = arith.mulf %625, %631 : vector<1x128xf32>
      %719 = arith.mulf %627, %629 : vector<1x128xf32>
      %720 = arith.subf %718, %719 : vector<1x128xf32>
      %721 = arith.mulf %620, %720 : vector<1x128xf32>
      %722 = arith.addf %717, %721 : vector<1x128xf32>
      %723 = arith.mulf %626, %632 : vector<1x128xf32>
      %724 = arith.mulf %628, %630 : vector<1x128xf32>
      %725 = arith.subf %723, %724 : vector<1x128xf32>
      %726 = arith.mulf %617, %725 : vector<1x128xf32>
      %727 = arith.mulf %625, %632 : vector<1x128xf32>
      %728 = arith.mulf %628, %629 : vector<1x128xf32>
      %729 = arith.subf %727, %728 : vector<1x128xf32>
      %730 = arith.mulf %618, %729 : vector<1x128xf32>
      %731 = arith.subf %726, %730 : vector<1x128xf32>
      %732 = arith.mulf %625, %630 : vector<1x128xf32>
      %733 = arith.mulf %626, %629 : vector<1x128xf32>
      %734 = arith.subf %732, %733 : vector<1x128xf32>
      %735 = arith.mulf %620, %734 : vector<1x128xf32>
      %736 = arith.addf %731, %735 : vector<1x128xf32>
      %cst_83 = arith.constant 0.000000e+00 : f32
      %737 = vector.broadcast %cst_83 : f32 to vector<1x128xf32>
      %738 = arith.subf %737, %736 : vector<1x128xf32>
      %739 = arith.mulf %626, %631 : vector<1x128xf32>
      %740 = arith.mulf %627, %630 : vector<1x128xf32>
      %741 = arith.subf %739, %740 : vector<1x128xf32>
      %742 = arith.mulf %617, %741 : vector<1x128xf32>
      %743 = arith.mulf %625, %631 : vector<1x128xf32>
      %744 = arith.mulf %627, %629 : vector<1x128xf32>
      %745 = arith.subf %743, %744 : vector<1x128xf32>
      %746 = arith.mulf %618, %745 : vector<1x128xf32>
      %747 = arith.subf %742, %746 : vector<1x128xf32>
      %748 = arith.mulf %625, %630 : vector<1x128xf32>
      %749 = arith.mulf %626, %629 : vector<1x128xf32>
      %750 = arith.subf %748, %749 : vector<1x128xf32>
      %751 = arith.mulf %619, %750 : vector<1x128xf32>
      %752 = arith.addf %747, %751 : vector<1x128xf32>
      %753 = arith.mulf %623, %632 : vector<1x128xf32>
      %754 = arith.mulf %624, %631 : vector<1x128xf32>
      %755 = arith.subf %753, %754 : vector<1x128xf32>
      %756 = arith.mulf %618, %755 : vector<1x128xf32>
      %757 = arith.mulf %622, %632 : vector<1x128xf32>
      %758 = arith.mulf %624, %630 : vector<1x128xf32>
      %759 = arith.subf %757, %758 : vector<1x128xf32>
      %760 = arith.mulf %619, %759 : vector<1x128xf32>
      %761 = arith.subf %756, %760 : vector<1x128xf32>
      %762 = arith.mulf %622, %631 : vector<1x128xf32>
      %763 = arith.mulf %623, %630 : vector<1x128xf32>
      %764 = arith.subf %762, %763 : vector<1x128xf32>
      %765 = arith.mulf %620, %764 : vector<1x128xf32>
      %766 = arith.addf %761, %765 : vector<1x128xf32>
      %767 = arith.mulf %623, %632 : vector<1x128xf32>
      %768 = arith.mulf %624, %631 : vector<1x128xf32>
      %769 = arith.subf %767, %768 : vector<1x128xf32>
      %770 = arith.mulf %617, %769 : vector<1x128xf32>
      %771 = arith.mulf %621, %632 : vector<1x128xf32>
      %772 = arith.mulf %624, %629 : vector<1x128xf32>
      %773 = arith.subf %771, %772 : vector<1x128xf32>
      %774 = arith.mulf %619, %773 : vector<1x128xf32>
      %775 = arith.subf %770, %774 : vector<1x128xf32>
      %776 = arith.mulf %621, %631 : vector<1x128xf32>
      %777 = arith.mulf %623, %629 : vector<1x128xf32>
      %778 = arith.subf %776, %777 : vector<1x128xf32>
      %779 = arith.mulf %620, %778 : vector<1x128xf32>
      %780 = arith.addf %775, %779 : vector<1x128xf32>
      %cst_84 = arith.constant 0.000000e+00 : f32
      %781 = vector.broadcast %cst_84 : f32 to vector<1x128xf32>
      %782 = arith.subf %781, %780 : vector<1x128xf32>
      %783 = arith.mulf %622, %632 : vector<1x128xf32>
      %784 = arith.mulf %624, %630 : vector<1x128xf32>
      %785 = arith.subf %783, %784 : vector<1x128xf32>
      %786 = arith.mulf %617, %785 : vector<1x128xf32>
      %787 = arith.mulf %621, %632 : vector<1x128xf32>
      %788 = arith.mulf %624, %629 : vector<1x128xf32>
      %789 = arith.subf %787, %788 : vector<1x128xf32>
      %790 = arith.mulf %618, %789 : vector<1x128xf32>
      %791 = arith.subf %786, %790 : vector<1x128xf32>
      %792 = arith.mulf %621, %630 : vector<1x128xf32>
      %793 = arith.mulf %622, %629 : vector<1x128xf32>
      %794 = arith.subf %792, %793 : vector<1x128xf32>
      %795 = arith.mulf %620, %794 : vector<1x128xf32>
      %796 = arith.addf %791, %795 : vector<1x128xf32>
      %797 = arith.mulf %622, %631 : vector<1x128xf32>
      %798 = arith.mulf %623, %630 : vector<1x128xf32>
      %799 = arith.subf %797, %798 : vector<1x128xf32>
      %800 = arith.mulf %617, %799 : vector<1x128xf32>
      %801 = arith.mulf %621, %631 : vector<1x128xf32>
      %802 = arith.mulf %623, %629 : vector<1x128xf32>
      %803 = arith.subf %801, %802 : vector<1x128xf32>
      %804 = arith.mulf %618, %803 : vector<1x128xf32>
      %805 = arith.subf %800, %804 : vector<1x128xf32>
      %806 = arith.mulf %621, %630 : vector<1x128xf32>
      %807 = arith.mulf %622, %629 : vector<1x128xf32>
      %808 = arith.subf %806, %807 : vector<1x128xf32>
      %809 = arith.mulf %619, %808 : vector<1x128xf32>
      %810 = arith.addf %805, %809 : vector<1x128xf32>
      %cst_85 = arith.constant 0.000000e+00 : f32
      %811 = vector.broadcast %cst_85 : f32 to vector<1x128xf32>
      %812 = arith.subf %811, %810 : vector<1x128xf32>
      %813 = arith.mulf %623, %628 : vector<1x128xf32>
      %814 = arith.mulf %624, %627 : vector<1x128xf32>
      %815 = arith.subf %813, %814 : vector<1x128xf32>
      %816 = arith.mulf %618, %815 : vector<1x128xf32>
      %817 = arith.mulf %622, %628 : vector<1x128xf32>
      %818 = arith.mulf %624, %626 : vector<1x128xf32>
      %819 = arith.subf %817, %818 : vector<1x128xf32>
      %820 = arith.mulf %619, %819 : vector<1x128xf32>
      %821 = arith.subf %816, %820 : vector<1x128xf32>
      %822 = arith.mulf %622, %627 : vector<1x128xf32>
      %823 = arith.mulf %623, %626 : vector<1x128xf32>
      %824 = arith.subf %822, %823 : vector<1x128xf32>
      %825 = arith.mulf %620, %824 : vector<1x128xf32>
      %826 = arith.addf %821, %825 : vector<1x128xf32>
      %cst_86 = arith.constant 0.000000e+00 : f32
      %827 = vector.broadcast %cst_86 : f32 to vector<1x128xf32>
      %828 = arith.subf %827, %826 : vector<1x128xf32>
      %829 = arith.mulf %623, %628 : vector<1x128xf32>
      %830 = arith.mulf %624, %627 : vector<1x128xf32>
      %831 = arith.subf %829, %830 : vector<1x128xf32>
      %832 = arith.mulf %617, %831 : vector<1x128xf32>
      %833 = arith.mulf %621, %628 : vector<1x128xf32>
      %834 = arith.mulf %624, %625 : vector<1x128xf32>
      %835 = arith.subf %833, %834 : vector<1x128xf32>
      %836 = arith.mulf %619, %835 : vector<1x128xf32>
      %837 = arith.subf %832, %836 : vector<1x128xf32>
      %838 = arith.mulf %621, %627 : vector<1x128xf32>
      %839 = arith.mulf %623, %625 : vector<1x128xf32>
      %840 = arith.subf %838, %839 : vector<1x128xf32>
      %841 = arith.mulf %620, %840 : vector<1x128xf32>
      %842 = arith.addf %837, %841 : vector<1x128xf32>
      %843 = arith.mulf %622, %628 : vector<1x128xf32>
      %844 = arith.mulf %624, %626 : vector<1x128xf32>
      %845 = arith.subf %843, %844 : vector<1x128xf32>
      %846 = arith.mulf %617, %845 : vector<1x128xf32>
      %847 = arith.mulf %621, %628 : vector<1x128xf32>
      %848 = arith.mulf %624, %625 : vector<1x128xf32>
      %849 = arith.subf %847, %848 : vector<1x128xf32>
      %850 = arith.mulf %618, %849 : vector<1x128xf32>
      %851 = arith.subf %846, %850 : vector<1x128xf32>
      %852 = arith.mulf %621, %626 : vector<1x128xf32>
      %853 = arith.mulf %622, %625 : vector<1x128xf32>
      %854 = arith.subf %852, %853 : vector<1x128xf32>
      %855 = arith.mulf %620, %854 : vector<1x128xf32>
      %856 = arith.addf %851, %855 : vector<1x128xf32>
      %cst_87 = arith.constant 0.000000e+00 : f32
      %857 = vector.broadcast %cst_87 : f32 to vector<1x128xf32>
      %858 = arith.subf %857, %856 : vector<1x128xf32>
      %859 = arith.mulf %622, %627 : vector<1x128xf32>
      %860 = arith.mulf %623, %626 : vector<1x128xf32>
      %861 = arith.subf %859, %860 : vector<1x128xf32>
      %862 = arith.mulf %617, %861 : vector<1x128xf32>
      %863 = arith.mulf %621, %627 : vector<1x128xf32>
      %864 = arith.mulf %623, %625 : vector<1x128xf32>
      %865 = arith.subf %863, %864 : vector<1x128xf32>
      %866 = arith.mulf %618, %865 : vector<1x128xf32>
      %867 = arith.subf %862, %866 : vector<1x128xf32>
      %868 = arith.mulf %621, %626 : vector<1x128xf32>
      %869 = arith.mulf %622, %625 : vector<1x128xf32>
      %870 = arith.subf %868, %869 : vector<1x128xf32>
      %871 = arith.mulf %619, %870 : vector<1x128xf32>
      %872 = arith.addf %867, %871 : vector<1x128xf32>
      %873 = arith.mulf %617, %646 : vector<1x128xf32>
      %874 = arith.mulf %618, %662 : vector<1x128xf32>
      %875 = arith.addf %873, %874 : vector<1x128xf32>
      %876 = arith.mulf %619, %676 : vector<1x128xf32>
      %877 = arith.addf %875, %876 : vector<1x128xf32>
      %878 = arith.mulf %620, %692 : vector<1x128xf32>
      %879 = arith.addf %877, %878 : vector<1x128xf32>
      %cst_88 = arith.constant 1.000000e+00 : f32
      %880 = vector.broadcast %cst_88 : f32 to vector<1x128xf32>
      %881 = arith.divf %880, %879 : vector<1x128xf32>
      %882 = arith.mulf %646, %881 : vector<1x128xf32>
      %883 = arith.mulf %708, %881 : vector<1x128xf32>
      %884 = arith.mulf %766, %881 : vector<1x128xf32>
      %885 = arith.mulf %828, %881 : vector<1x128xf32>
      %886 = arith.mulf %662, %881 : vector<1x128xf32>
      %887 = arith.mulf %722, %881 : vector<1x128xf32>
      %888 = arith.mulf %782, %881 : vector<1x128xf32>
      %889 = arith.mulf %842, %881 : vector<1x128xf32>
      %890 = arith.mulf %676, %881 : vector<1x128xf32>
      %891 = arith.mulf %738, %881 : vector<1x128xf32>
      %892 = arith.mulf %796, %881 : vector<1x128xf32>
      %893 = arith.mulf %858, %881 : vector<1x128xf32>
      %894 = arith.mulf %692, %881 : vector<1x128xf32>
      %895 = arith.mulf %752, %881 : vector<1x128xf32>
      %896 = arith.mulf %812, %881 : vector<1x128xf32>
      %897 = arith.mulf %872, %881 : vector<1x128xf32>
      %898 = vector.broadcast %882 : vector<1x128xf32> to vector<8x128xf32>
      %899 = arith.mulf %383, %898 : vector<8x128xf32>
      %900 = vector.broadcast %886 : vector<1x128xf32> to vector<8x128xf32>
      %901 = arith.mulf %406, %900 : vector<8x128xf32>
      %902 = arith.addf %899, %901 : vector<8x128xf32>
      %903 = vector.broadcast %890 : vector<1x128xf32> to vector<8x128xf32>
      %904 = arith.mulf %429, %903 : vector<8x128xf32>
      %905 = arith.addf %902, %904 : vector<8x128xf32>
      %906 = vector.broadcast %894 : vector<1x128xf32> to vector<8x128xf32>
      %907 = arith.mulf %452, %906 : vector<8x128xf32>
      %908 = arith.addf %905, %907 : vector<8x128xf32>
      %909 = vector.broadcast %883 : vector<1x128xf32> to vector<8x128xf32>
      %910 = arith.mulf %383, %909 : vector<8x128xf32>
      %911 = vector.broadcast %887 : vector<1x128xf32> to vector<8x128xf32>
      %912 = arith.mulf %406, %911 : vector<8x128xf32>
      %913 = arith.addf %910, %912 : vector<8x128xf32>
      %914 = vector.broadcast %891 : vector<1x128xf32> to vector<8x128xf32>
      %915 = arith.mulf %429, %914 : vector<8x128xf32>
      %916 = arith.addf %913, %915 : vector<8x128xf32>
      %917 = vector.broadcast %895 : vector<1x128xf32> to vector<8x128xf32>
      %918 = arith.mulf %452, %917 : vector<8x128xf32>
      %919 = arith.addf %916, %918 : vector<8x128xf32>
      %920 = vector.broadcast %884 : vector<1x128xf32> to vector<8x128xf32>
      %921 = arith.mulf %383, %920 : vector<8x128xf32>
      %922 = vector.broadcast %888 : vector<1x128xf32> to vector<8x128xf32>
      %923 = arith.mulf %406, %922 : vector<8x128xf32>
      %924 = arith.addf %921, %923 : vector<8x128xf32>
      %925 = vector.broadcast %892 : vector<1x128xf32> to vector<8x128xf32>
      %926 = arith.mulf %429, %925 : vector<8x128xf32>
      %927 = arith.addf %924, %926 : vector<8x128xf32>
      %928 = vector.broadcast %896 : vector<1x128xf32> to vector<8x128xf32>
      %929 = arith.mulf %452, %928 : vector<8x128xf32>
      %930 = arith.addf %927, %929 : vector<8x128xf32>
      %931 = vector.broadcast %885 : vector<1x128xf32> to vector<8x128xf32>
      %932 = arith.mulf %383, %931 : vector<8x128xf32>
      %933 = vector.broadcast %889 : vector<1x128xf32> to vector<8x128xf32>
      %934 = arith.mulf %406, %933 : vector<8x128xf32>
      %935 = arith.addf %932, %934 : vector<8x128xf32>
      %936 = vector.broadcast %893 : vector<1x128xf32> to vector<8x128xf32>
      %937 = arith.mulf %429, %936 : vector<8x128xf32>
      %938 = arith.addf %935, %937 : vector<8x128xf32>
      %939 = vector.broadcast %897 : vector<1x128xf32> to vector<8x128xf32>
      %940 = arith.mulf %452, %939 : vector<8x128xf32>
      %941 = arith.addf %938, %940 : vector<8x128xf32>
      %942 = vector.extract_strided_slice %360 {offsets = [0, 0], sizes = [1, 128], strides = [1, 1]} : vector<4x128xf32> to vector<1x128xf32>
      %943 = vector.broadcast %33 : vector<16x1xf32> to vector<16x128xf32>
      %944 = vector.broadcast %942 : vector<1x128xf32> to vector<16x128xf32>
      %945 = arith.mulf %943, %944 : vector<16x128xf32>
      %946 = vector.extract_strided_slice %360 {offsets = [1, 0], sizes = [1, 128], strides = [1, 1]} : vector<4x128xf32> to vector<1x128xf32>
      %947 = vector.broadcast %34 : vector<16x1xf32> to vector<16x128xf32>
      %948 = vector.broadcast %946 : vector<1x128xf32> to vector<16x128xf32>
      %949 = arith.mulf %947, %948 : vector<16x128xf32>
      %950 = arith.addf %945, %949 : vector<16x128xf32>
      %951 = vector.extract_strided_slice %360 {offsets = [2, 0], sizes = [1, 128], strides = [1, 1]} : vector<4x128xf32> to vector<1x128xf32>
      %952 = vector.broadcast %35 : vector<16x1xf32> to vector<16x128xf32>
      %953 = vector.broadcast %951 : vector<1x128xf32> to vector<16x128xf32>
      %954 = arith.mulf %952, %953 : vector<16x128xf32>
      %955 = arith.addf %950, %954 : vector<16x128xf32>
      %956 = vector.extract_strided_slice %360 {offsets = [3, 0], sizes = [1, 128], strides = [1, 1]} : vector<4x128xf32> to vector<1x128xf32>
      %957 = vector.broadcast %36 : vector<16x1xf32> to vector<16x128xf32>
      %958 = vector.broadcast %956 : vector<1x128xf32> to vector<16x128xf32>
      %959 = arith.mulf %957, %958 : vector<16x128xf32>
      %960 = arith.addf %955, %959 : vector<16x128xf32>
      %961 = vector.extract_strided_slice %187 {offsets = [0, 0], sizes = [1, 128], strides = [1, 1]} : vector<4x128xf32> to vector<1x128xf32>
      %962 = vector.broadcast %37 : vector<16x1xf32> to vector<16x128xf32>
      %963 = vector.broadcast %961 : vector<1x128xf32> to vector<16x128xf32>
      %964 = arith.mulf %962, %963 : vector<16x128xf32>
      %965 = arith.addf %960, %964 : vector<16x128xf32>
      %966 = vector.extract_strided_slice %187 {offsets = [1, 0], sizes = [1, 128], strides = [1, 1]} : vector<4x128xf32> to vector<1x128xf32>
      %967 = vector.broadcast %38 : vector<16x1xf32> to vector<16x128xf32>
      %968 = vector.broadcast %966 : vector<1x128xf32> to vector<16x128xf32>
      %969 = arith.mulf %967, %968 : vector<16x128xf32>
      %970 = arith.addf %965, %969 : vector<16x128xf32>
      %971 = vector.extract_strided_slice %187 {offsets = [2, 0], sizes = [1, 128], strides = [1, 1]} : vector<4x128xf32> to vector<1x128xf32>
      %972 = vector.broadcast %39 : vector<16x1xf32> to vector<16x128xf32>
      %973 = vector.broadcast %971 : vector<1x128xf32> to vector<16x128xf32>
      %974 = arith.mulf %972, %973 : vector<16x128xf32>
      %975 = arith.addf %970, %974 : vector<16x128xf32>
      %976 = vector.extract_strided_slice %187 {offsets = [3, 0], sizes = [1, 128], strides = [1, 1]} : vector<4x128xf32> to vector<1x128xf32>
      %977 = vector.broadcast %40 : vector<16x1xf32> to vector<16x128xf32>
      %978 = vector.broadcast %976 : vector<1x128xf32> to vector<16x128xf32>
      %979 = arith.mulf %977, %978 : vector<16x128xf32>
      %980 = arith.addf %975, %979 : vector<16x128xf32>
      %981 = vector.broadcast %41 : vector<16x1xf32> to vector<16x128xf32>
      %982 = arith.addf %980, %981 : vector<16x128xf32>
      %cst_89 = arith.constant dense<0.000000e+00> : vector<128xf32>
      %983 = vector.multi_reduction <add>, %982, %cst_89 [0] : vector<16x128xf32> to vector<128xf32>
      %984 = vector.shape_cast %983 : vector<128xf32> to vector<1x128xf32>
      %cst_90 = arith.constant 1.600000e+01 : f32
      %985 = vector.broadcast %cst_90 : f32 to vector<1x128xf32>
      %986 = arith.divf %984, %985 : vector<1x128xf32>
      %987 = vector.broadcast %986 : vector<1x128xf32> to vector<16x128xf32>
      %988 = arith.subf %982, %987 : vector<16x128xf32>
      %989 = vector.broadcast %986 : vector<1x128xf32> to vector<16x128xf32>
      %990 = arith.subf %982, %989 : vector<16x128xf32>
      %991 = arith.mulf %988, %990 : vector<16x128xf32>
      %cst_91 = arith.constant dense<0.000000e+00> : vector<128xf32>
      %992 = vector.multi_reduction <add>, %991, %cst_91 [0] : vector<16x128xf32> to vector<128xf32>
      %993 = vector.shape_cast %992 : vector<128xf32> to vector<1x128xf32>
      %cst_92 = arith.constant 1.600000e+01 : f32
      %994 = vector.broadcast %cst_92 : f32 to vector<1x128xf32>
      %995 = arith.divf %993, %994 : vector<1x128xf32>
      %996 = vector.broadcast %986 : vector<1x128xf32> to vector<16x128xf32>
      %997 = arith.subf %982, %996 : vector<16x128xf32>
      %cst_93 = arith.constant 9.99999974E-6 : f32
      %998 = vector.broadcast %cst_93 : f32 to vector<1x128xf32>
      %999 = arith.addf %995, %998 : vector<1x128xf32>
      %1000 = math.rsqrt %999 : vector<1x128xf32>
      %1001 = vector.broadcast %1000 : vector<1x128xf32> to vector<16x128xf32>
      %1002 = arith.mulf %997, %1001 : vector<16x128xf32>
      %1003 = vector.broadcast %42 : vector<16x1xf32> to vector<16x128xf32>
      %1004 = arith.mulf %1002, %1003 : vector<16x128xf32>
      %1005 = vector.broadcast %43 : vector<16x1xf32> to vector<16x128xf32>
      %1006 = arith.addf %1004, %1005 : vector<16x128xf32>
      %cst_94 = arith.constant 0.000000e+00 : f32
      %1007 = vector.broadcast %cst_94 : f32 to vector<16x128xf32>
      %1008 = arith.maximumf %1006, %1007 : vector<16x128xf32>
      %1009 = vector.broadcast %44 : vector<16x1xf32> to vector<16x128xf32>
      %1010 = arith.mulf %1008, %1009 : vector<16x128xf32>
      %cst_95 = arith.constant dense<0.000000e+00> : vector<128xf32>
      %1011 = vector.multi_reduction <add>, %1010, %cst_95 [0] : vector<16x128xf32> to vector<128xf32>
      %1012 = vector.shape_cast %1011 : vector<128xf32> to vector<1x128xf32>
      %1013 = vector.broadcast %68 : vector<1x1xf32> to vector<1x128xf32>
      %1014 = arith.addf %1012, %1013 : vector<1x128xf32>
      %1015 = arith.negf %1014 : vector<1x128xf32>
      %1016 = math.exp %1015 : vector<1x128xf32>
      %cst_96 = arith.constant 1.000000e+00 : f32
      %1017 = vector.broadcast %cst_96 : f32 to vector<1x128xf32>
      %1018 = arith.addf %1017, %1016 : vector<1x128xf32>
      %1019 = arith.divf %1017, %1018 : vector<1x128xf32>
      %1020 = vector.broadcast %66 : vector<1x1xf32> to vector<1x128xf32>
      %1021 = arith.mulf %1019, %1020 : vector<1x128xf32>
      %1022 = vector.extract_strided_slice %360 {offsets = [0, 0], sizes = [1, 128], strides = [1, 1]} : vector<4x128xf32> to vector<1x128xf32>
      %1023 = vector.broadcast %1022 : vector<1x128xf32> to vector<8x128xf32>
      %1024 = arith.mulf %908, %1023 : vector<8x128xf32>
      %1025 = vector.extract_strided_slice %360 {offsets = [1, 0], sizes = [1, 128], strides = [1, 1]} : vector<4x128xf32> to vector<1x128xf32>
      %1026 = vector.broadcast %1025 : vector<1x128xf32> to vector<8x128xf32>
      %1027 = arith.mulf %919, %1026 : vector<8x128xf32>
      %1028 = arith.addf %1024, %1027 : vector<8x128xf32>
      %1029 = vector.extract_strided_slice %360 {offsets = [2, 0], sizes = [1, 128], strides = [1, 1]} : vector<4x128xf32> to vector<1x128xf32>
      %1030 = vector.broadcast %1029 : vector<1x128xf32> to vector<8x128xf32>
      %1031 = arith.mulf %930, %1030 : vector<8x128xf32>
      %1032 = arith.addf %1028, %1031 : vector<8x128xf32>
      %1033 = vector.extract_strided_slice %360 {offsets = [3, 0], sizes = [1, 128], strides = [1, 1]} : vector<4x128xf32> to vector<1x128xf32>
      %1034 = vector.broadcast %1033 : vector<1x128xf32> to vector<8x128xf32>
      %1035 = arith.mulf %941, %1034 : vector<8x128xf32>
      %1036 = arith.addf %1032, %1035 : vector<8x128xf32>
      %1037 = vector.broadcast %1021 : vector<1x128xf32> to vector<8x128xf32>
      %1038 = arith.mulf %1037, %1036 : vector<8x128xf32>
      %1039 = arith.addf %212, %1038 : vector<8x128xf32>
      %c0_97 = arith.constant 0 : index
      %c0_98 = arith.constant 0 : index
      %1040 = vector.load %arg10[%c0_97, %c0_98] : memref<8x128xf32, #tpu.memory_space<vmem>>, vector<8x128xf32>
      tpu.vector_store %arg10[%c0_97, %c0_98], %1039 {strides = array<i32>} : memref<8x128xf32, #tpu.memory_space<vmem>>, vector<8x128xf32>,
      %1041 = vector.extract_strided_slice %383 {offsets = [0, 0], sizes = [1, 128], strides = [1, 1]} : vector<8x128xf32> to vector<1x128xf32>
      %1042 = vector.broadcast %1041 : vector<1x128xf32> to vector<8x128xf32>
      %1043 = arith.mulf %908, %1042 : vector<8x128xf32>
      %1044 = arith.subf %227, %1043 : vector<8x128xf32>
      %1045 = vector.extract_strided_slice %406 {offsets = [0, 0], sizes = [1, 128], strides = [1, 1]} : vector<8x128xf32> to vector<1x128xf32>
      %1046 = vector.broadcast %1045 : vector<1x128xf32> to vector<8x128xf32>
      %1047 = arith.mulf %919, %1046 : vector<8x128xf32>
      %1048 = arith.subf %1044, %1047 : vector<8x128xf32>
      %1049 = vector.extract_strided_slice %429 {offsets = [0, 0], sizes = [1, 128], strides = [1, 1]} : vector<8x128xf32> to vector<1x128xf32>
      %1050 = vector.broadcast %1049 : vector<1x128xf32> to vector<8x128xf32>
      %1051 = arith.mulf %930, %1050 : vector<8x128xf32>
      %1052 = arith.subf %1048, %1051 : vector<8x128xf32>
      %1053 = vector.extract_strided_slice %452 {offsets = [0, 0], sizes = [1, 128], strides = [1, 1]} : vector<8x128xf32> to vector<1x128xf32>
      %1054 = vector.broadcast %1053 : vector<1x128xf32> to vector<8x128xf32>
      %1055 = arith.mulf %941, %1054 : vector<8x128xf32>
      %1056 = arith.subf %1052, %1055 : vector<8x128xf32>
      %c0_99 = arith.constant 0 : index
      %c0_100 = arith.constant 0 : index
      %c0_101 = arith.constant 0 : index
      %1057 = vector.load %arg11[%c0_99, %c0_100, %c0_101] : memref<8x8x128xf32, #tpu.memory_space<vmem>>, vector<1x8x128xf32>
      %1058 = vector.shape_cast %1057 : vector<1x8x128xf32> to vector<8x128xf32>
      %1059 = vector.shape_cast %1056 : vector<8x128xf32> to vector<1x8x128xf32>
      tpu.vector_store %arg11[%c0_99, %c0_100, %c0_101], %1059 {strides = array<i32>} : memref<8x8x128xf32, #tpu.memory_space<vmem>>, vector<1x8x128xf32>,
      %1060 = vector.extract_strided_slice %383 {offsets = [1, 0], sizes = [1, 128], strides = [1, 1]} : vector<8x128xf32> to vector<1x128xf32>
      %1061 = vector.broadcast %1060 : vector<1x128xf32> to vector<8x128xf32>
      %1062 = arith.mulf %908, %1061 : vector<8x128xf32>
      %1063 = arith.subf %242, %1062 : vector<8x128xf32>
      %1064 = vector.extract_strided_slice %406 {offsets = [1, 0], sizes = [1, 128], strides = [1, 1]} : vector<8x128xf32> to vector<1x128xf32>
      %1065 = vector.broadcast %1064 : vector<1x128xf32> to vector<8x128xf32>
      %1066 = arith.mulf %919, %1065 : vector<8x128xf32>
      %1067 = arith.subf %1063, %1066 : vector<8x128xf32>
      %1068 = vector.extract_strided_slice %429 {offsets = [1, 0], sizes = [1, 128], strides = [1, 1]} : vector<8x128xf32> to vector<1x128xf32>
      %1069 = vector.broadcast %1068 : vector<1x128xf32> to vector<8x128xf32>
      %1070 = arith.mulf %930, %1069 : vector<8x128xf32>
      %1071 = arith.subf %1067, %1070 : vector<8x128xf32>
      %1072 = vector.extract_strided_slice %452 {offsets = [1, 0], sizes = [1, 128], strides = [1, 1]} : vector<8x128xf32> to vector<1x128xf32>
      %1073 = vector.broadcast %1072 : vector<1x128xf32> to vector<8x128xf32>
      %1074 = arith.mulf %941, %1073 : vector<8x128xf32>
      %1075 = arith.subf %1071, %1074 : vector<8x128xf32>
      %c1_102 = arith.constant 1 : index
      %c0_103 = arith.constant 0 : index
      %c0_104 = arith.constant 0 : index
      %1076 = vector.load %arg11[%c1_102, %c0_103, %c0_104] : memref<8x8x128xf32, #tpu.memory_space<vmem>>, vector<1x8x128xf32>
      %1077 = vector.shape_cast %1076 : vector<1x8x128xf32> to vector<8x128xf32>
      %1078 = vector.shape_cast %1075 : vector<8x128xf32> to vector<1x8x128xf32>
      tpu.vector_store %arg11[%c1_102, %c0_103, %c0_104], %1078 {strides = array<i32>} : memref<8x8x128xf32, #tpu.memory_space<vmem>>, vector<1x8x128xf32>,
      %1079 = vector.extract_strided_slice %383 {offsets = [2, 0], sizes = [1, 128], strides = [1, 1]} : vector<8x128xf32> to vector<1x128xf32>
      %1080 = vector.broadcast %1079 : vector<1x128xf32> to vector<8x128xf32>
      %1081 = arith.mulf %908, %1080 : vector<8x128xf32>
      %1082 = arith.subf %257, %1081 : vector<8x128xf32>
      %1083 = vector.extract_strided_slice %406 {offsets = [2, 0], sizes = [1, 128], strides = [1, 1]} : vector<8x128xf32> to vector<1x128xf32>
      %1084 = vector.broadcast %1083 : vector<1x128xf32> to vector<8x128xf32>
      %1085 = arith.mulf %919, %1084 : vector<8x128xf32>
      %1086 = arith.subf %1082, %1085 : vector<8x128xf32>
      %1087 = vector.extract_strided_slice %429 {offsets = [2, 0], sizes = [1, 128], strides = [1, 1]} : vector<8x128xf32> to vector<1x128xf32>
      %1088 = vector.broadcast %1087 : vector<1x128xf32> to vector<8x128xf32>
      %1089 = arith.mulf %930, %1088 : vector<8x128xf32>
      %1090 = arith.subf %1086, %1089 : vector<8x128xf32>
      %1091 = vector.extract_strided_slice %452 {offsets = [2, 0], sizes = [1, 128], strides = [1, 1]} : vector<8x128xf32> to vector<1x128xf32>
      %1092 = vector.broadcast %1091 : vector<1x128xf32> to vector<8x128xf32>
      %1093 = arith.mulf %941, %1092 : vector<8x128xf32>
      %1094 = arith.subf %1090, %1093 : vector<8x128xf32>
      %c2_105 = arith.constant 2 : index
      %c0_106 = arith.constant 0 : index
      %c0_107 = arith.constant 0 : index
      %1095 = vector.load %arg11[%c2_105, %c0_106, %c0_107] : memref<8x8x128xf32, #tpu.memory_space<vmem>>, vector<1x8x128xf32>
      %1096 = vector.shape_cast %1095 : vector<1x8x128xf32> to vector<8x128xf32>
      %1097 = vector.shape_cast %1094 : vector<8x128xf32> to vector<1x8x128xf32>
      tpu.vector_store %arg11[%c2_105, %c0_106, %c0_107], %1097 {strides = array<i32>} : memref<8x8x128xf32, #tpu.memory_space<vmem>>, vector<1x8x128xf32>,
      %1098 = vector.extract_strided_slice %383 {offsets = [3, 0], sizes = [1, 128], strides = [1, 1]} : vector<8x128xf32> to vector<1x128xf32>
      %1099 = vector.broadcast %1098 : vector<1x128xf32> to vector<8x128xf32>
      %1100 = arith.mulf %908, %1099 : vector<8x128xf32>
      %1101 = arith.subf %272, %1100 : vector<8x128xf32>
      %1102 = vector.extract_strided_slice %406 {offsets = [3, 0], sizes = [1, 128], strides = [1, 1]} : vector<8x128xf32> to vector<1x128xf32>
      %1103 = vector.broadcast %1102 : vector<1x128xf32> to vector<8x128xf32>
      %1104 = arith.mulf %919, %1103 : vector<8x128xf32>
      %1105 = arith.subf %1101, %1104 : vector<8x128xf32>
      %1106 = vector.extract_strided_slice %429 {offsets = [3, 0], sizes = [1, 128], strides = [1, 1]} : vector<8x128xf32> to vector<1x128xf32>
      %1107 = vector.broadcast %1106 : vector<1x128xf32> to vector<8x128xf32>
      %1108 = arith.mulf %930, %1107 : vector<8x128xf32>
      %1109 = arith.subf %1105, %1108 : vector<8x128xf32>
      %1110 = vector.extract_strided_slice %452 {offsets = [3, 0], sizes = [1, 128], strides = [1, 1]} : vector<8x128xf32> to vector<1x128xf32>
      %1111 = vector.broadcast %1110 : vector<1x128xf32> to vector<8x128xf32>
      %1112 = arith.mulf %941, %1111 : vector<8x128xf32>
      %1113 = arith.subf %1109, %1112 : vector<8x128xf32>
      %c3_108 = arith.constant 3 : index
      %c0_109 = arith.constant 0 : index
      %c0_110 = arith.constant 0 : index
      %1114 = vector.load %arg11[%c3_108, %c0_109, %c0_110] : memref<8x8x128xf32, #tpu.memory_space<vmem>>, vector<1x8x128xf32>
      %1115 = vector.shape_cast %1114 : vector<1x8x128xf32> to vector<8x128xf32>
      %1116 = vector.shape_cast %1113 : vector<8x128xf32> to vector<1x8x128xf32>
      tpu.vector_store %arg11[%c3_108, %c0_109, %c0_110], %1116 {strides = array<i32>} : memref<8x8x128xf32, #tpu.memory_space<vmem>>, vector<1x8x128xf32>,
      %1117 = vector.extract_strided_slice %383 {offsets = [4, 0], sizes = [1, 128], strides = [1, 1]} : vector<8x128xf32> to vector<1x128xf32>
      %1118 = vector.broadcast %1117 : vector<1x128xf32> to vector<8x128xf32>
      %1119 = arith.mulf %908, %1118 : vector<8x128xf32>
      %1120 = arith.subf %284, %1119 : vector<8x128xf32>
      %1121 = vector.extract_strided_slice %406 {offsets = [4, 0], sizes = [1, 128], strides = [1, 1]} : vector<8x128xf32> to vector<1x128xf32>
      %1122 = vector.broadcast %1121 : vector<1x128xf32> to vector<8x128xf32>
      %1123 = arith.mulf %919, %1122 : vector<8x128xf32>
      %1124 = arith.subf %1120, %1123 : vector<8x128xf32>
      %1125 = vector.extract_strided_slice %429 {offsets = [4, 0], sizes = [1, 128], strides = [1, 1]} : vector<8x128xf32> to vector<1x128xf32>
      %1126 = vector.broadcast %1125 : vector<1x128xf32> to vector<8x128xf32>
      %1127 = arith.mulf %930, %1126 : vector<8x128xf32>
      %1128 = arith.subf %1124, %1127 : vector<8x128xf32>
      %1129 = vector.extract_strided_slice %452 {offsets = [4, 0], sizes = [1, 128], strides = [1, 1]} : vector<8x128xf32> to vector<1x128xf32>
      %1130 = vector.broadcast %1129 : vector<1x128xf32> to vector<8x128xf32>
      %1131 = arith.mulf %941, %1130 : vector<8x128xf32>
      %1132 = arith.subf %1128, %1131 : vector<8x128xf32>
      %c4_111 = arith.constant 4 : index
      %c0_112 = arith.constant 0 : index
      %c0_113 = arith.constant 0 : index
      %1133 = vector.load %arg11[%c4_111, %c0_112, %c0_113] : memref<8x8x128xf32, #tpu.memory_space<vmem>>, vector<1x8x128xf32>
      %1134 = vector.shape_cast %1133 : vector<1x8x128xf32> to vector<8x128xf32>
      %1135 = vector.shape_cast %1132 : vector<8x128xf32> to vector<1x8x128xf32>
      tpu.vector_store %arg11[%c4_111, %c0_112, %c0_113], %1135 {strides = array<i32>} : memref<8x8x128xf32, #tpu.memory_space<vmem>>, vector<1x8x128xf32>,
      %1136 = vector.extract_strided_slice %383 {offsets = [5, 0], sizes = [1, 128], strides = [1, 1]} : vector<8x128xf32> to vector<1x128xf32>
      %1137 = vector.broadcast %1136 : vector<1x128xf32> to vector<8x128xf32>
      %1138 = arith.mulf %908, %1137 : vector<8x128xf32>
      %1139 = arith.subf %296, %1138 : vector<8x128xf32>
      %1140 = vector.extract_strided_slice %406 {offsets = [5, 0], sizes = [1, 128], strides = [1, 1]} : vector<8x128xf32> to vector<1x128xf32>
      %1141 = vector.broadcast %1140 : vector<1x128xf32> to vector<8x128xf32>
      %1142 = arith.mulf %919, %1141 : vector<8x128xf32>
      %1143 = arith.subf %1139, %1142 : vector<8x128xf32>
      %1144 = vector.extract_strided_slice %429 {offsets = [5, 0], sizes = [1, 128], strides = [1, 1]} : vector<8x128xf32> to vector<1x128xf32>
      %1145 = vector.broadcast %1144 : vector<1x128xf32> to vector<8x128xf32>
      %1146 = arith.mulf %930, %1145 : vector<8x128xf32>
      %1147 = arith.subf %1143, %1146 : vector<8x128xf32>
      %1148 = vector.extract_strided_slice %452 {offsets = [5, 0], sizes = [1, 128], strides = [1, 1]} : vector<8x128xf32> to vector<1x128xf32>
      %1149 = vector.broadcast %1148 : vector<1x128xf32> to vector<8x128xf32>
      %1150 = arith.mulf %941, %1149 : vector<8x128xf32>
      %1151 = arith.subf %1147, %1150 : vector<8x128xf32>
      %c5_114 = arith.constant 5 : index
      %c0_115 = arith.constant 0 : index
      %c0_116 = arith.constant 0 : index
      %1152 = vector.load %arg11[%c5_114, %c0_115, %c0_116] : memref<8x8x128xf32, #tpu.memory_space<vmem>>, vector<1x8x128xf32>
      %1153 = vector.shape_cast %1152 : vector<1x8x128xf32> to vector<8x128xf32>
      %1154 = vector.shape_cast %1151 : vector<8x128xf32> to vector<1x8x128xf32>
      tpu.vector_store %arg11[%c5_114, %c0_115, %c0_116], %1154 {strides = array<i32>} : memref<8x8x128xf32, #tpu.memory_space<vmem>>, vector<1x8x128xf32>,
      %1155 = vector.extract_strided_slice %383 {offsets = [6, 0], sizes = [1, 128], strides = [1, 1]} : vector<8x128xf32> to vector<1x128xf32>
      %1156 = vector.broadcast %1155 : vector<1x128xf32> to vector<8x128xf32>
      %1157 = arith.mulf %908, %1156 : vector<8x128xf32>
      %1158 = arith.subf %308, %1157 : vector<8x128xf32>
      %1159 = vector.extract_strided_slice %406 {offsets = [6, 0], sizes = [1, 128], strides = [1, 1]} : vector<8x128xf32> to vector<1x128xf32>
      %1160 = vector.broadcast %1159 : vector<1x128xf32> to vector<8x128xf32>
      %1161 = arith.mulf %919, %1160 : vector<8x128xf32>
      %1162 = arith.subf %1158, %1161 : vector<8x128xf32>
      %1163 = vector.extract_strided_slice %429 {offsets = [6, 0], sizes = [1, 128], strides = [1, 1]} : vector<8x128xf32> to vector<1x128xf32>
      %1164 = vector.broadcast %1163 : vector<1x128xf32> to vector<8x128xf32>
      %1165 = arith.mulf %930, %1164 : vector<8x128xf32>
      %1166 = arith.subf %1162, %1165 : vector<8x128xf32>
      %1167 = vector.extract_strided_slice %452 {offsets = [6, 0], sizes = [1, 128], strides = [1, 1]} : vector<8x128xf32> to vector<1x128xf32>
      %1168 = vector.broadcast %1167 : vector<1x128xf32> to vector<8x128xf32>
      %1169 = arith.mulf %941, %1168 : vector<8x128xf32>
      %1170 = arith.subf %1166, %1169 : vector<8x128xf32>
      %c6_117 = arith.constant 6 : index
      %c0_118 = arith.constant 0 : index
      %c0_119 = arith.constant 0 : index
      %1171 = vector.load %arg11[%c6_117, %c0_118, %c0_119] : memref<8x8x128xf32, #tpu.memory_space<vmem>>, vector<1x8x128xf32>
      %1172 = vector.shape_cast %1171 : vector<1x8x128xf32> to vector<8x128xf32>
      %1173 = vector.shape_cast %1170 : vector<8x128xf32> to vector<1x8x128xf32>
      tpu.vector_store %arg11[%c6_117, %c0_118, %c0_119], %1173 {strides = array<i32>} : memref<8x8x128xf32, #tpu.memory_space<vmem>>, vector<1x8x128xf32>,
      %1174 = vector.extract_strided_slice %383 {offsets = [7, 0], sizes = [1, 128], strides = [1, 1]} : vector<8x128xf32> to vector<1x128xf32>
      %1175 = vector.broadcast %1174 : vector<1x128xf32> to vector<8x128xf32>
      %1176 = arith.mulf %908, %1175 : vector<8x128xf32>
      %1177 = arith.subf %320, %1176 : vector<8x128xf32>
      %1178 = vector.extract_strided_slice %406 {offsets = [7, 0], sizes = [1, 128], strides = [1, 1]} : vector<8x128xf32> to vector<1x128xf32>
      %1179 = vector.broadcast %1178 : vector<1x128xf32> to vector<8x128xf32>
      %1180 = arith.mulf %919, %1179 : vector<8x128xf32>
      %1181 = arith.subf %1177, %1180 : vector<8x128xf32>
      %1182 = vector.extract_strided_slice %429 {offsets = [7, 0], sizes = [1, 128], strides = [1, 1]} : vector<8x128xf32> to vector<1x128xf32>
      %1183 = vector.broadcast %1182 : vector<1x128xf32> to vector<8x128xf32>
      %1184 = arith.mulf %930, %1183 : vector<8x128xf32>
      %1185 = arith.subf %1181, %1184 : vector<8x128xf32>
      %1186 = vector.extract_strided_slice %452 {offsets = [7, 0], sizes = [1, 128], strides = [1, 1]} : vector<8x128xf32> to vector<1x128xf32>
      %1187 = vector.broadcast %1186 : vector<1x128xf32> to vector<8x128xf32>
      %1188 = arith.mulf %941, %1187 : vector<8x128xf32>
      %1189 = arith.subf %1185, %1188 : vector<8x128xf32>
      %c7_120 = arith.constant 7 : index
      %c0_121 = arith.constant 0 : index
      %c0_122 = arith.constant 0 : index
      %1190 = vector.load %arg11[%c7_120, %c0_121, %c0_122] : memref<8x8x128xf32, #tpu.memory_space<vmem>>, vector<1x8x128xf32>
      %1191 = vector.shape_cast %1190 : vector<1x8x128xf32> to vector<8x128xf32>
      %1192 = vector.shape_cast %1189 : vector<8x128xf32> to vector<1x8x128xf32>
      tpu.vector_store %arg11[%c7_120, %c0_121, %c0_122], %1192 {strides = array<i32>} : memref<8x8x128xf32, #tpu.memory_space<vmem>>, vector<1x8x128xf32>,
      %1193 = vector.extract_strided_slice %1039 {offsets = [0, 0], sizes = [4, 128], strides = [1, 1]} : vector<8x128xf32> to vector<4x128xf32>
      %1194 = arith.index_cast %184 : i32 to index
      %c0_123 = arith.constant 0 : index
      %c0_124 = arith.constant 0 : index
      %1195 = vector.load %arg7[%1194, %c0_123, %c0_124] : memref<8x4x128xf32, #tpu.memory_space<vmem>>, vector<1x4x128xf32>
      %1196 = vector.shape_cast %1195 : vector<1x4x128xf32> to vector<4x128xf32>
      %1197 = vector.shape_cast %1193 : vector<4x128xf32> to vector<1x4x128xf32>
      tpu.vector_store %arg7[%1194, %c0_123, %c0_124], %1197 {strides = array<i32>} : memref<8x4x128xf32, #tpu.memory_space<vmem>>, vector<1x4x128xf32>,
    }
    %c0_42 = arith.constant 0 : index
    %c0_43 = arith.constant 0 : index
    %179 = vector.load %arg10[%c0_42, %c0_43] : memref<8x128xf32, #tpu.memory_space<vmem>>, vector<8x128xf32>
    %c0_44 = arith.constant 0 : index
    %c0_45 = arith.constant 0 : index
    %180 = vector.load %arg8[%c0_44, %c0_45] : memref<8x128xf32, #tpu.memory_space<vmem>>, vector<8x128xf32>
    tpu.vector_store %arg8[%c0_44, %c0_45], %179 {strides = array<i32>} : memref<8x128xf32, #tpu.memory_space<vmem>>, vector<8x128xf32>,
    %c0_46 = arith.constant 0 : index
    %c0_47 = arith.constant 0 : index
    %c0_48 = arith.constant 0 : index
    %181 = vector.load %arg11[%c0_46, %c0_47, %c0_48] : memref<8x8x128xf32, #tpu.memory_space<vmem>>, vector<8x8x128xf32>
    %c0_49 = arith.constant 0 : index
    %c0_50 = arith.constant 0 : index
    %c0_51 = arith.constant 0 : index
    %182 = vector.load %arg9[%c0_49, %c0_50, %c0_51] : memref<8x8x128xf32, #tpu.memory_space<vmem>>, vector<8x8x128xf32>
    tpu.vector_store %arg9[%c0_49, %c0_50, %c0_51], %181 {strides = array<i32>} : memref<8x8x128xf32, #tpu.memory_space<vmem>>, vector<8x8x128xf32>,
    return
  }
  func.func @transform_0(%arg0: i32, %arg1: memref<36xf32, #tpu.memory_space<smem>>, %arg2: memref<2xi32, #tpu.memory_space<smem>>) -> (i32, i32) {
    %c0_i32 = arith.constant 0 : i32
    %c0_i32_0 = arith.constant 0 : i32
    %c0_i32_1 = arith.constant 0 : i32
    return %c0_i32, %c0_i32_0 : i32, i32
  }
  func.func @transform_1(%arg0: i32, %arg1: memref<36xf32, #tpu.memory_space<smem>>, %arg2: memref<2xi32, #tpu.memory_space<smem>>) -> (i32, i32, i32) {
    %c0_i32 = arith.constant 0 : i32
    %c0_i32_0 = arith.constant 0 : i32
    %c0_i32_1 = arith.constant 0 : i32
    return %arg0, %c0_i32, %c0_i32_0 : i32, i32, i32
  }
  func.func @transform_2(%arg0: i32, %arg1: memref<36xf32, #tpu.memory_space<smem>>, %arg2: memref<2xi32, #tpu.memory_space<smem>>) -> (i32, i32) {
    %c0_i32 = arith.constant 0 : i32
    %c0_i32_0 = arith.constant 0 : i32
    %c0_i32_1 = arith.constant 0 : i32
    return %c0_i32, %c0_i32_0 : i32, i32
  }
  func.func @transform_3(%arg0: i32, %arg1: memref<36xf32, #tpu.memory_space<smem>>, %arg2: memref<2xi32, #tpu.memory_space<smem>>) -> (i32, i32, i32) {
    %c0_i32 = arith.constant 0 : i32
    %c0_i32_0 = arith.constant 0 : i32
    %c0_i32_1 = arith.constant 0 : i32
    %c0_i32_2 = arith.constant 0 : i32
    return %c0_i32, %c0_i32_0, %c0_i32_1 : i32, i32, i32
  }
  func.func @transform_4(%arg0: i32, %arg1: memref<36xf32, #tpu.memory_space<smem>>, %arg2: memref<2xi32, #tpu.memory_space<smem>>) -> (i32, i32, i32) {
    %c0_i32 = arith.constant 0 : i32
    %c0_i32_0 = arith.constant 0 : i32
    %c0_i32_1 = arith.constant 0 : i32
    return %arg0, %c0_i32, %c0_i32_0 : i32, i32, i32
  }
  func.func @transform_5(%arg0: i32, %arg1: memref<36xf32, #tpu.memory_space<smem>>, %arg2: memref<2xi32, #tpu.memory_space<smem>>) -> (i32, i32) {
    %c0_i32 = arith.constant 0 : i32
    %c0_i32_0 = arith.constant 0 : i32
    %c0_i32_1 = arith.constant 0 : i32
    return %c0_i32, %c0_i32_0 : i32, i32
  }
  func.func @transform_6(%arg0: i32, %arg1: memref<36xf32, #tpu.memory_space<smem>>, %arg2: memref<2xi32, #tpu.memory_space<smem>>) -> (i32, i32, i32) {
    %c0_i32 = arith.constant 0 : i32
    %c0_i32_0 = arith.constant 0 : i32
    %c0_i32_1 = arith.constant 0 : i32
    %c0_i32_2 = arith.constant 0 : i32
    return %c0_i32, %c0_i32_0, %c0_i32_1 : i32, i32, i32
  }
}

</mosaic_0001>

<llo_original>
// kernel: _kalman_sequence.1
$region0: #{_kalman_sequence.1}
  #allocation0 [shape = 'u32[]', space=smem, size = 0x4, offset = 0x4, fixed_abs, tag = 'smem constant byte address 0x4 - core index']
  #allocation1 [shape = 'u32[144,128]{1,0:T(1,128)}', space=vmem, size = 0x12000, scoped, tag = 'internal scratch']
  #allocation2 [shape = 'f32[8,128]{1,0:T(8,128)}', space=vmem, size = 0x1000, scoped, tag = 'scratch operand']
  #allocation3 [shape = 'f32[8,8,128]{2,1,0:T(8,128)}', space=vmem, size = 0x8000, scoped, tag = 'scratch operand']
  #allocation4 [shape = 's32[1]{0}', space=sflag, size = 0x4, scoped, tag = 'scoped memory for _kalman_sequence.1']
  #allocation5 [shape = 'u8[512]{0}', space=smem, size = 0x200, scoped, tag = 'prefetched SMEM operand 0']
  #allocation6 [shape = 'u8[512]{0}', space=smem, size = 0x200, scoped, tag = 'prefetched SMEM operand 1']
  %s0 = inlined_call_operand.vmem [shape: f32[36], index: 0, kind: input, shape index: {}]
  %s1 = inlined_call_operand.vmem [shape: s32[2], index: 1, kind: input, shape index: {}]
  %s2 = inlined_call_operand.vmem [shape: f32[16,32], index: 2, kind: input, shape index: {}]
  %s3 = inlined_call_operand.vmem [shape: f32[16,4,128], index: 3, kind: input, shape index: {}]
  %s4 = inlined_call_operand.vmem [shape: f32[8,128], index: 4, kind: input, shape index: {}]
  %s5 = inlined_call_operand.vmem [shape: f32[8,8,128], index: 5, kind: input, shape index: {}]
  %s6 = inlined_call_operand.vmem [shape: f32[16,4,128], index: 6, kind: output, shape index: {0}]
  %s7 = inlined_call_operand.hbm [shape: f32[8,128], index: 7, kind: output, shape index: {1}]
  %s8 = inlined_call_operand.hbm [shape: f32[8,8,128], index: 8, kind: output, shape index: {2}]
  %9 = xla_tuple %s6, %s7, %s8
  %s10 = sld [smem:[#allocation0]]
  $region80: #{_kalman_sequence.1} parent=0
    _
  %s12 = ssub.s32 1, %s10
  %s13 = scalar_select 0, %s12, %s10
  %s14 = sshll.u32 %s0, 4
  %s15 = int_to_ptr.vmem [resolvable:$true] %s14
  %17 = dma.vmem_to_smem %s15, 16, [#allocation5], [#allocation4]
  %s18 = sshll.u32 %s1, 4
  %s19 = int_to_ptr.vmem [resolvable:$true] %s18
  %21 = dma.vmem_to_smem %s19, 16, [#allocation6], [#allocation4]
  %22 = dma.done [#allocation4], 32
  %23 = sfence
  $region1: #{_kalman_sequence.1} parent=0
    #allocation7 [shape = 'u8[4096]{0}', space=vmem, size = 0x1000, scoped, tag = 'output window, operand 1, single buffered']
    #allocation8 [shape = 's32[2]{0}', space=sflag, size = 0x8, scoped, tag = 'scoped memory for _kalman_sequence.1']
    #allocation9 [shape = 'u8[32768]{0}', space=vmem, size = 0x8000, scoped, tag = 'output window, operand 2, single buffered']
    #allocation10 [shape = 's32[1]{0}', space=sflag, size = 0x4, scoped, tag = 'scoped memory for _kalman_sequence.1']
    %24 = vsyncpa [#allocation8], 0
    %25 = vsyncpa [#allocation10], 0
    loop: start=0, step=1, limit=4
    $region2: #{_kalman_sequence.1} parent=1 // loop_pre_header
      _
    $region3: #{_kalman_sequence.1} parent=1 // loop_header
      %s27 = sphi 0, %s31
      %p28 = scmp.ge.s32.totalorder %s27, 4
      %s35 = sphi 0, %s35
      %s37 = sphi 0, %s35
      %s38 = sphi 0, %s37
      %s52 = sphi 0, %s38
      %s58 = sphi 0, %s60
      %s61 = sphi 0, %s58
      %s62 = sphi 0, %s61
      %s78 = sphi 0, %s62
      %s82 = sphi 0, %s82
      %s84 = sphi 0, %s82
      %s85 = sphi 0, %s84
      %s99 = sphi 0, %s85
      %s103 = sphi 0, %s103
      %s105 = sphi 0, %s103
      %s106 = sphi 0, %s105
      %s120 = sphi 0, %s106
      %s126 = sphi 0, %s128
      %s129 = sphi 0, %s126
      %s130 = sphi 0, %s129
      %s146 = sphi 0, %s130
      %s150 = sphi 0, %s150
      %s152 = sphi 0, %s150
      %s153 = sphi 0, %s152
      %s167 = sphi 0, %s153
      %s171 = sphi 0, %s171
      %s173 = sphi 0, %s171
      %s174 = sphi 0, %s173
      %s188 = sphi 0, %s174
    $region4: #{_kalman_sequence.1} parent=1 // loop_header_branch
      %30 = sbr.rel (%p28) target = $region8
    $region5: #{_kalman_sequence.1} parent=1 // loop_body
      %s32 = ssub.s32 %s27, 1
      %s33 = ssub.s32 %s27, 2
      %s34 = sadd.s32 %s27, 1
      %s36 = sadd.s32 %s35, 1
      %p39 = scmp.eq.s32.totalorder %s27, 1
      %p40 = scmp.ne.s32.totalorder %s35, %s37
      %p41 = scmp.eq.s32.totalorder %s27, 0
      %p42 = por %p40, %p41
      %p43 = scmp.ne.s32.totalorder %s35, %s37
      %p44 = scmp.eq.s32.totalorder %s32, 1
      %p45 = por %p43, %p44
      %p46 = scmp.ne.s32.totalorder %s37, %s38
      %p47 = scmp.eq.s32.totalorder %s32, 0
      %p48 = por %p46, %p47
      %p49 = scmp.ne.s32.totalorder %s37, %s38
      %p50 = scmp.eq.s32.totalorder %s33, 1
      %p51 = por %p49, %p50
      %p53 = scmp.ne.s32.totalorder %s38, %s52
      %p54 = scmp.eq.s32.totalorder %s33, 0
      %p55 = por %p53, %p54
      %s56 = ssub.s32 %s27, %s34
      %p57 = scmp.eq.s32.totalorder %s56, 0
      %s59 = sadd.s32 %s58, 1
      %s60 = scalar_select %p57, %s58, %s59
      %p63 = pneg %p57
      %p64 = scmp.eq.s32.totalorder %s27, 1
      %p65 = por %p63, %p64
      %p66 = scmp.ne.s32.totalorder %s58, %s61
      %p67 = scmp.eq.s32.totalorder %s27, 0
      %p68 = por %p66, %p67
      %p69 = scmp.ne.s32.totalorder %s58, %s61
      %p70 = scmp.eq.s32.totalorder %s32, 1
      %p71 = por %p69, %p70
      %p72 = scmp.ne.s32.totalorder %s61, %s62
      %p73 = scmp.eq.s32.totalorder %s32, 0
      %p74 = por %p72, %p73
      %p75 = scmp.ne.s32.totalorder %s61, %s62
      %p76 = scmp.eq.s32.totalorder %s33, 1
      %p77 = por %p75, %p76
      %p79 = scmp.ne.s32.totalorder %s62, %s78
      %p80 = scmp.eq.s32.totalorder %s33, 0
      %p81 = por %p79, %p80
      %s83 = sadd.s32 %s82, 1
      %p86 = scmp.eq.s32.totalorder %s27, 1
      %p87 = scmp.ne.s32.totalorder %s82, %s84
      %p88 = scmp.eq.s32.totalorder %s27, 0
      %p89 = por %p87, %p88
      %p90 = scmp.ne.s32.totalorder %s82, %s84
      %p91 = scmp.eq.s32.totalorder %s32, 1
      %p92 = por %p90, %p91
      %p93 = scmp.ne.s32.totalorder %s84, %s85
      %p94 = scmp.eq.s32.totalorder %s32, 0
      %p95 = por %p93, %p94
      %p96 = scmp.ne.s32.totalorder %s84, %s85
      %p97 = scmp.eq.s32.totalorder %s33, 1
      %p98 = por %p96, %p97
      %p100 = scmp.ne.s32.totalorder %s85, %s99
      %p101 = scmp.eq.s32.totalorder %s33, 0
      %p102 = por %p100, %p101
      %s104 = sadd.s32 %s103, 1
      %p107 = scmp.eq.s32.totalorder %s27, 1
      %p108 = scmp.ne.s32.totalorder %s103, %s105
      %p109 = scmp.eq.s32.totalorder %s27, 0
      %p110 = por %p108, %p109
      %p111 = scmp.ne.s32.totalorder %s103, %s105
      %p112 = scmp.eq.s32.totalorder %s32, 1
      %p113 = por %p111, %p112
      %p114 = scmp.ne.s32.totalorder %s105, %s106
      %p115 = scmp.eq.s32.totalorder %s32, 0
      %p116 = por %p114, %p115
      %p117 = scmp.ne.s32.totalorder %s105, %s106
      %p118 = scmp.eq.s32.totalorder %s33, 1
      %p119 = por %p117, %p118
      %p121 = scmp.ne.s32.totalorder %s106, %s120
      %p122 = scmp.eq.s32.totalorder %s33, 0
      %p123 = por %p121, %p122
      %s124 = ssub.s32 %s27, %s34
      %p125 = scmp.eq.s32.totalorder %s124, 0
      %s127 = sadd.s32 %s126, 1
      %s128 = scalar_select %p125, %s126, %s127
      %p131 = pneg %p125
      %p132 = scmp.eq.s32.totalorder %s27, 1
      %p133 = por %p131, %p132
      %p134 = scmp.ne.s32.totalorder %s126, %s129
      %p135 = scmp.eq.s32.totalorder %s27, 0
      %p136 = por %p134, %p135
      %p137 = scmp.ne.s32.totalorder %s126, %s129
      %p138 = scmp.eq.s32.totalorder %s32, 1
      %p139 = por %p137, %p138
      %p140 = scmp.ne.s32.totalorder %s129, %s130
      %p141 = scmp.eq.s32.totalorder %s32, 0
      %p142 = por %p140, %p141
      %p143 = scmp.ne.s32.totalorder %s129, %s130
      %p144 = scmp.eq.s32.totalorder %s33, 1
      %p145 = por %p143, %p144
      %p147 = scmp.ne.s32.totalorder %s130, %s146
      %p148 = scmp.eq.s32.totalorder %s33, 0
      %p149 = por %p147, %p148
      %s151 = sadd.s32 %s150, 1
      %p154 = scmp.eq.s32.totalorder %s27, 1
      %p155 = scmp.ne.s32.totalorder %s150, %s152
      %p156 = scmp.eq.s32.totalorder %s27, 0
      %p157 = por %p155, %p156
      %p158 = scmp.ne.s32.totalorder %s150, %s152
      %p159 = scmp.eq.s32.totalorder %s32, 1
      %p160 = por %p158, %p159
      %p161 = scmp.ne.s32.totalorder %s152, %s153
      %p162 = scmp.eq.s32.totalorder %s32, 0
      %p163 = por %p161, %p162
      %p164 = scmp.ne.s32.totalorder %s152, %s153
      %p165 = scmp.eq.s32.totalorder %s33, 1
      %p166 = por %p164, %p165
      %p168 = scmp.ne.s32.totalorder %s153, %s167
      %p169 = scmp.eq.s32.totalorder %s33, 0
      %p170 = por %p168, %p169
      %s172 = sadd.s32 %s171, 1
      %p175 = scmp.eq.s32.totalorder %s27, 1
      %p176 = scmp.ne.s32.totalorder %s171, %s173
      %p177 = scmp.eq.s32.totalorder %s27, 0
      %p178 = por %p176, %p177
      %p179 = scmp.ne.s32.totalorder %s171, %s173
      %p180 = scmp.eq.s32.totalorder %s32, 1
      %p181 = por %p179, %p180
      %p182 = scmp.ne.s32.totalorder %s173, %s174
      %p183 = scmp.eq.s32.totalorder %s32, 0
      %p184 = por %p182, %p183
      %p185 = scmp.ne.s32.totalorder %s173, %s174
      %p186 = scmp.eq.s32.totalorder %s33, 1
      %p187 = por %p185, %p186
      %p189 = scmp.ne.s32.totalorder %s174, %s188
      %p190 = scmp.eq.s32.totalorder %s33, 0
      %p191 = por %p189, %p190
      %p192 = scmp.le.s32.totalorder 1, %s27
      %p193 = scmp.lt.s32.totalorder %s27, 3
      %p194 = pnand %p192, %p193
      %p195 = pneg %p194
      // Predicated region
      $region9: #{_kalman_sequence.1} parent=5 // pred_check
        _
      $region10: #{_kalman_sequence.1} parent=5 // pred_check_branch
        %197 = sbr.rel (%p194) target = $region12
      $region11: #{_kalman_sequence.1} parent=5 // pred_region
        %s198 = ssub.s32 %s27, 1
        // Predicated region
        $region13: #{_kalman_sequence.1} parent=11 // pred_check
          %p199 = pneg %p48
        $region14: #{_kalman_sequence.1} parent=11 // pred_check_branch
          %201 = sbr.rel (%p199) target = $region16
        $region15: #{_kalman_sequence.1} parent=11 // pred_region
          _
        $region16: #{_kalman_sequence.1} parent=11 // pred_fallthru
          _
        // Predicated region
        $region17: #{_kalman_sequence.1} parent=11 // pred_check
          %p202 = pneg %p95
        $region18: #{_kalman_sequence.1} parent=11 // pred_check_branch
          %204 = sbr.rel (%p202) target = $region20
        $region19: #{_kalman_sequence.1} parent=11 // pred_region
          _
        $region20: #{_kalman_sequence.1} parent=11 // pred_fallthru
          _
        // Predicated region
        $region21: #{_kalman_sequence.1} parent=11 // pred_check
          %p205 = pneg %p116
        $region22: #{_kalman_sequence.1} parent=11 // pred_check_branch
          %207 = sbr.rel (%p205) target = $region24
        $region23: #{_kalman_sequence.1} parent=11 // pred_region
          _
        $region24: #{_kalman_sequence.1} parent=11 // pred_fallthru
          _
      $region12: #{_kalman_sequence.1} parent=5 // pred_fallthru
        _
      %p208 = scmp.lt.s32.totalorder %s27, 2
      // Predicated region
      $region25: #{_kalman_sequence.1} parent=5 // pred_check
        %p209 = pneg %p208
      $region26: #{_kalman_sequence.1} parent=5 // pred_check_branch
        %211 = sbr.rel (%p209) target = $region28
      $region27: #{_kalman_sequence.1} parent=5 // pred_region
        // Predicated region
        $region29: #{_kalman_sequence.1} parent=27 // pred_check
          %p212 = pneg %p68
        $region30: #{_kalman_sequence.1} parent=27 // pred_check_branch
          %214 = sbr.rel (%p212) target = $region32
        $region31: #{_kalman_sequence.1} parent=27 // pred_region
          %s215 = smul.u32 8, %s27
          %p216 = scmp.lt.s32.totalorder %s215, 15
          %s217 = scalar_select %p216, %s215, 15
          %s218 = smul.addr %s217, 4
          %s219 = scalar_lea.vmem %s3, %s218
          %s220 = smul.u32 8, %s27
        $region32: #{_kalman_sequence.1} parent=27 // pred_fallthru
          _
      $region28: #{_kalman_sequence.1} parent=5 // pred_fallthru
        _
      %p221 = scmp.le.s32.totalorder 1, %s27
      %p222 = scmp.lt.s32.totalorder %s27, 3
      %p223 = pnand %p221, %p222
      %p224 = pneg %p223
      // Predicated region
      $region33: #{_kalman_sequence.1} parent=5 // pred_check
        _
      $region34: #{_kalman_sequence.1} parent=5 // pred_check_branch
        %226 = sbr.rel (%p223) target = $region36
      $region35: #{_kalman_sequence.1} parent=5 // pred_region
        %s227 = ssub.s32 %s27, 1
        %p228 = pneg %p48
        %p229 = pneg %p45
        %s230 = smul.u32 8, %s32
        %p231 = scmp.lt.s32.totalorder %s230, 15
        %s232 = scalar_select %p231, %s230, 15
        %s233 = smul.addr %s232, 4
        %s234 = scalar_lea.vmem %s3, %s233
        %p235 = pneg %p74
        %p236 = pneg %p71
        %p237 = pneg %p95
        %p238 = pneg %p92
        %p239 = pneg %p116
        %p240 = pneg %p113
        %p241 = pneg %p142
        %p242 = pneg %p139
        %s243 = smul.u32 8, %s32
        %p244 = scmp.lt.s32.totalorder %s243, 15
        %s245 = scalar_select %p244, %s243, 15
        %s246 = smul.addr %s245, 4
        %s247 = scalar_lea.vmem %s6, %s246
        %p248 = pneg %p163
        %p249 = pneg %p160
        %p250 = pneg %p184
        %p251 = pneg %p181
        %s252 = smul.u32 8, %s32
        %p253 = scmp.lt.s32.totalorder %s252, 15
        %s254 = scalar_select %p253, %s252, 15
        %s255 = smul.addr %s254, 4
        %s256 = scalar_lea.vmem %s3, %s255
        %s257 = smul.u32 8, %s32
        %s258 = smul.u32 8, %s32
        %p259 = scmp.lt.s32.totalorder %s258, 15
        %s260 = scalar_select %p259, %s258, 15
        %s261 = smul.addr %s260, 4
        %s262 = scalar_lea.vmem %s6, %s261
        %s263 = smul.u32 8, %s32
        %s264 = sld [smem:[#allocation6]]
        %s265 = sld [smem:[#allocation6 + $0x1]]
        %v266 = vlaneseq
        %v267 = vshrl.u32 %v266, 7
        %v268 = vld [vmem:[%s2] sm:$0xff]
        %v269 = vmax.f32 %v268, 0.9
        %v270 = vmin.f32 %v269, 1.1
        %vm271 = vcmp.lt.s32.totalorder %v267, 4
        %v272 = vxor.u32 %v268, 2147483648
        %v273 = vmul.f32 %v272, 1.442695
        %v274 = vpow.pop %v273
        %v275 = vadd.f32 %v274, 1.0
        %v276 = vrcp.pop %v275
        %v277 = vmul.f32 1.0, %v276
        %v278 = vsel %vm271, %v277, 0.0
        %v279 = vld [vmem:[%s2 + $0x8] sm:$0xff]
        %v280 = vld [vmem:[%s2] sm:$0xf]
        %s281 = sld [smem:[#allocation5]]
        %v282 = vstv %s281
        %v283 = vmul.f32 %v282, 1.442695
        %v284 = vpow.pop %v283
        %s285 = sld [smem:[#allocation5 + $0x1]]
        %v286 = vstv %s285
        %v287 = vmul.f32 %v286, 1.442695
        %v288 = vpow.pop %v287
        %s289 = sld [smem:[#allocation5 + $0x2]]
        %v290 = vstv %s289
        %v291 = vxor.u32 %v290, 2147483648
        %v292 = vmul.f32 %v291, 1.442695
        %v293 = vpow.pop %v292
        %v294 = vadd.f32 %v293, 1.0
        %v295 = vrcp.pop %v294
        %v296 = vmul.f32 1.0, %v295
        %s297 = sld [smem:[#allocation5 + $0x3]]
        %s298 = sld [smem:[#allocation5 + $0x4]]
        %s299 = sld [smem:[#allocation5 + $0x5]]
        %s300 = sld [smem:[#allocation5 + $0x6]]
        %s301 = sld [smem:[#allocation5 + $0x7]]
        %s302 = sld [smem:[#allocation5 + $0x8]]
        %s303 = sld [smem:[#allocation5 + $0x9]]
        %s304 = sld [smem:[#allocation5 + $0xa]]
        %s305 = sld [smem:[#allocation5 + $0xb]]
        %s306 = sld [smem:[#allocation5 + $0xc]]
        %s307 = sld [smem:[#allocation5 + $0xd]]
        %s308 = sld [smem:[#allocation5 + $0xe]]
        %s309 = sld [smem:[#allocation5 + $0xf]]
        %s310 = sld [smem:[#allocation5 + $0x10]]
        %s311 = sld [smem:[#allocation5 + $0x11]]
        %s312 = sld [smem:[#allocation5 + $0x12]]
        %s313 = sld [smem:[#allocation5 + $0x13]]
        %s314 = sld [smem:[#allocation5 + $0x14]]
        %s315 = sld [smem:[#allocation5 + $0x15]]
        %s316 = sld [smem:[#allocation5 + $0x16]]
        %s317 = sld [smem:[#allocation5 + $0x17]]
        %s318 = sld [smem:[#allocation5 + $0x18]]
        %s319 = sld [smem:[#allocation5 + $0x19]]
        %s320 = sld [smem:[#allocation5 + $0x1a]]
        %s321 = sld [smem:[#allocation5 + $0x1b]]
        %s322 = sld [smem:[#allocation5 + $0x1c]]
        %s323 = sld [smem:[#allocation5 + $0x1d]]
        %s324 = sld [smem:[#allocation5 + $0x1e]]
        %s325 = sld [smem:[#allocation5 + $0x1f]]
        %s326 = sld [smem:[#allocation5 + $0x20]]
        %s327 = sld [smem:[#allocation5 + $0x21]]
        %s328 = sld [smem:[#allocation5 + $0x22]]
        %s329 = sld [smem:[#allocation5 + $0x23]]
        %vm330 = vcmp.eq.s32.totalorder %v267, 0
        %v331 = vsel %vm330, %v284, 0.0
        %vm332 = vcmp.eq.s32.totalorder %v267, 1
        %v333 = vsel %vm332, %v284, 0.0
        %vm334 = vcmp.eq.s32.totalorder %v267, 2
        %v335 = vsel %vm334, %v284, 0.0
        %vm336 = vcmp.eq.s32.totalorder %v267, 3
        %v337 = vsel %vm336, %v284, 0.0
        %vm338 = vcmp.eq.s32.totalorder %v267, 4
        %v339 = vsel %vm338, %v284, 0.0
        %vm340 = vcmp.eq.s32.totalorder %v267, 5
        %v341 = vsel %vm340, %v284, 0.0
        %vm342 = vcmp.eq.s32.totalorder %v267, 6
        %v343 = vsel %vm342, %v284, 0.0
        %vm344 = vcmp.eq.s32.totalorder %v267, 7
        %v345 = vsel %vm344, %v284, 0.0
        %v346 = vsel %vm330, %v288, 0.0
        %v347 = vsel %vm332, %v288, 0.0
        %v348 = vsel %vm334, %v288, 0.0
        %v349 = vsel %vm336, %v288, 0.0
        %p350 = scmp.eq.s32.totalorder %s32, 0
        // Predicated region
        $region37: #{_kalman_sequence.1} parent=35 // pred_check
          %p351 = pneg %p350
        $region38: #{_kalman_sequence.1} parent=35 // pred_check_branch
          %353 = sbr.rel (%p351) target = $region40
        $region39: #{_kalman_sequence.1} parent=35 // pred_region
          %v354 = vld [vmem:[%s4] sm:$0xff]
          %355 = vst [vmem:[#allocation2] sm:$0xff] %v354
          %v356 = vld [vmem:[%s5] sm:$0xff]
          %v357 = vld [vmem:[%s5 + $0x8] sm:$0xff]
          %v358 = vld [vmem:[%s5 + $0x10] sm:$0xff]
          %v359 = vld [vmem:[%s5 + $0x18] sm:$0xff]
          %v360 = vld [vmem:[%s5 + $0x20] sm:$0xff]
          %v361 = vld [vmem:[%s5 + $0x28] sm:$0xff]
          %v362 = vld [vmem:[%s5 + $0x30] sm:$0xff]
          %v363 = vld [vmem:[%s5 + $0x38] sm:$0xff]
          %364 = vst [vmem:[#allocation3] sm:$0xff] %v356
          %365 = vst [vmem:[#allocation3 + $0x8] sm:$0xff] %v357
          %366 = vst [vmem:[#allocation3 + $0x10] sm:$0xff] %v358
          %367 = vst [vmem:[#allocation3 + $0x18] sm:$0xff] %v359
          %368 = vst [vmem:[#allocation3 + $0x20] sm:$0xff] %v360
          %369 = vst [vmem:[#allocation3 + $0x28] sm:$0xff] %v361
          %370 = vst [vmem:[#allocation3 + $0x30] sm:$0xff] %v362
          %371 = vst [vmem:[#allocation3 + $0x38] sm:$0xff] %v363
        $region40: #{_kalman_sequence.1} parent=35 // pred_fallthru
          _
        %p372 = scmp.eq.s32.totalorder %s264, 0
        %p373 = pnand %p350, %p372
        %p374 = pneg %p373
        // Predicated region
        $region41: #{_kalman_sequence.1} parent=35 // pred_check
          _
        $region42: #{_kalman_sequence.1} parent=35 // pred_check_branch
          %376 = sbr.rel (%p373) target = $region44
        $region43: #{_kalman_sequence.1} parent=35 // pred_region
          %v377 = vld [vmem:[%s256] sm:$0xf]
          %vm378 = vcmask 1043456
          %v379 = vsel %vm378, %v377, 0.0
          %380 = vst [vmem:[#allocation2] sm:$0xff] %v379
          %v381 = vsel %vm330, 1, 0
          %vm382 = vcmp.eq.s32.totalorder %v381, 1
          %v383 = vsel %vm382, 1.0, 0.0
          %384 = vst [vmem:[#allocation3] sm:$0xff] %v383
          %v385 = vsel %vm332, 1, 0
          %vm386 = vcmp.eq.s32.totalorder %v385, 1
          %v387 = vsel %vm386, 1.0, 0.0
          %s388 = scalar_lea.vmem [#allocation3], 8
          %389 = vst [vmem:[%s388] sm:$0xff] %v387
          %v390 = vsel %vm334, 1, 0
          %vm391 = vcmp.eq.s32.totalorder %v390, 1
          %v392 = vsel %vm391, 1.0, 0.0
          %s393 = scalar_lea.vmem [#allocation3], 16
          %394 = vst [vmem:[%s393] sm:$0xff] %v392
          %v395 = vsel %vm336, 1, 0
          %vm396 = vcmp.eq.s32.totalorder %v395, 1
          %v397 = vsel %vm396, 1.0, 0.0
          %s398 = scalar_lea.vmem [#allocation3], 24
          %399 = vst [vmem:[%s398] sm:$0xff] %v397
          %v400 = vsel %vm338, 1, 0
          %vm401 = vcmp.eq.s32.totalorder %v400, 1
          %v402 = vsel %vm401, 1.0, 0.0
          %s403 = scalar_lea.vmem [#allocation3], 32
          %404 = vst [vmem:[%s403] sm:$0xff] %v402
          %v405 = vsel %vm340, 1, 0
          %vm406 = vcmp.eq.s32.totalorder %v405, 1
          %v407 = vsel %vm406, 1.0, 0.0
          %s408 = scalar_lea.vmem [#allocation3], 40
          %409 = vst [vmem:[%s408] sm:$0xff] %v407
          %v410 = vsel %vm342, 1, 0
          %vm411 = vcmp.eq.s32.totalorder %v410, 1
          %v412 = vsel %vm411, 1.0, 0.0
          %s413 = scalar_lea.vmem [#allocation3], 48
          %414 = vst [vmem:[%s413] sm:$0xff] %v412
          %v415 = vsel %vm344, 1, 0
          %vm416 = vcmp.eq.s32.totalorder %v415, 1
          %v417 = vsel %vm416, 1.0, 0.0
          %s418 = scalar_lea.vmem [#allocation3], 56
          %419 = vst [vmem:[%s418] sm:$0xff] %v417
          %420 = vst [vmem:[%s262] sm:$0xf] %v377
        $region44: #{_kalman_sequence.1} parent=35 // pred_fallthru
          _
        %s421 = smul.u32 %s32, 8
        %s422 = scalar_select %p374, 1, 0
        %s423 = ssub.s32 %s265, %s421
        %p424 = scmp.lt.s32.totalorder %s423, 8
        %s425 = scalar_select %p424, %s423, 8
        %s426 = ssub.s32 %s425, %s422
        // While loop
        $region45: #{_kalman_sequence.1} parent=35 // loop_pre_header
          _
        $region46: #{_kalman_sequence.1} parent=35 // loop_header
          %s428 = sphi 0, %s430
          %p429 = scmp.ge.s32.totalorder %s428, %s426
        $region47: #{_kalman_sequence.1} parent=35 // loop_header_branch
          %432 = sbr.rel (%p429) target = $region51
        $region48: #{_kalman_sequence.1} parent=35 // loop_body
          %s433 = sadd.s32 %s422, %s428
          %s434 = smul.u32 %s433, 4
          %s435 = scalar_lea.vmem %s256, %s434
          %v436 = vld [vmem:[%s435] sm:$0xf]
          %v437 = vld [vmem:[#allocation2] sm:$0xff]
          %v438 = vld [vmem:[#allocation3] sm:$0xff]
          %s439 = scalar_lea.vmem [#allocation3], 8
          %v440 = vld [vmem:[%s439] sm:$0xff]
          %s441 = scalar_lea.vmem [#allocation3], 16
          %v442 = vld [vmem:[%s441] sm:$0xff]
          %s443 = scalar_lea.vmem [#allocation3], 24
          %v444 = vld [vmem:[%s443] sm:$0xff]
          %s445 = scalar_lea.vmem [#allocation3], 32
          %v446 = vld [vmem:[%s445] sm:$0xff]
          %s447 = scalar_lea.vmem [#allocation3], 40
          %v448 = vld [vmem:[%s447] sm:$0xff]
          %s449 = scalar_lea.vmem [#allocation3], 48
          %v450 = vld [vmem:[%s449] sm:$0xff]
          %s451 = scalar_lea.vmem [#allocation3], 56
          %v452 = vld [vmem:[%s451] sm:$0xff]
          %v454 = vrot.slane %v437, 4
          %vm456 = vcmask 1043456
          %v457 = vsel %vm456, %v454, %v454
          %459 = vset.pattern.permute.xlu0 12
          %460 = vperm.xlu0 %459, %v270
          %v461 = vpop.permute.xlu0 %460
          %v463 = vmul.f32 %v461, %v437
          %465 = vset.pattern.permute.xlu0 13
          %466 = vperm.xlu0 %465, %v278
          %v467 = vpop.permute.xlu0 %466
          %v469 = vmul.f32 %v467, %v457
          %v470 = vadd.f32 %v463, %v469
          %471 = vrot.lane.b32.xlu0 %v270, 116
          %v472 = vpop.permute.xlu0 %471
          %s473 = vtos %v472
          %v474 = vstv %s473
          %v476 = vmul.f32 %v474, %v438
          %477 = vrot.lane.b32.xlu0 %v278, 115
          %v478 = vpop.permute.xlu0 %477
          %s479 = vtos %v478
          %v480 = vstv %s479
          %v482 = vmul.f32 %v480, %v446
          %v483 = vadd.f32 %v476, %v482
          %v485 = vrot.slane %v483, 4
          %v487 = vsel %vm456, %v485, %v485
          %v488 = vmul.f32 %v461, %v483
          %v489 = vmul.f32 %v467, %v487
          %v490 = vadd.f32 %v488, %v489
          %v491 = vadd.f32 %v490, %v331
          %v492 = vrot.slane %v270, 1
          %493 = vrot.lane.b32.xlu0 %v492, 116
          %v494 = vpop.permute.xlu0 %493
          %s495 = vtos %v494
          %v496 = vstv %s495
          %v498 = vmul.f32 %v496, %v440
          %v499 = vrot.slane %v278, 1
          %500 = vrot.lane.b32.xlu0 %v499, 115
          %v501 = vpop.permute.xlu0 %500
          %s502 = vtos %v501
          %v503 = vstv %s502
          %v505 = vmul.f32 %v503, %v448
          %v506 = vadd.f32 %v498, %v505
          %v508 = vrot.slane %v506, 4
          %v510 = vsel %vm456, %v508, %v508
          %v511 = vmul.f32 %v461, %v506
          %v512 = vmul.f32 %v467, %v510
          %v513 = vadd.f32 %v511, %v512
          %v514 = vadd.f32 %v513, %v333
          %v515 = vrot.slane %v270, 2
          %516 = vrot.lane.b32.xlu0 %v515, 116
          %v517 = vpop.permute.xlu0 %516
          %s518 = vtos %v517
          %v519 = vstv %s518
          %v521 = vmul.f32 %v519, %v442
          %v522 = vrot.slane %v278, 2
          %523 = vrot.lane.b32.xlu0 %v522, 115
          %v524 = vpop.permute.xlu0 %523
          %s525 = vtos %v524
          %v526 = vstv %s525
          %v528 = vmul.f32 %v526, %v450
          %v529 = vadd.f32 %v521, %v528
          %v531 = vrot.slane %v529, 4
          %v533 = vsel %vm456, %v531, %v531
          %v534 = vmul.f32 %v461, %v529
          %v535 = vmul.f32 %v467, %v533
          %v536 = vadd.f32 %v534, %v535
          %v537 = vadd.f32 %v536, %v335
          %v538 = vrot.slane %v270, 3
          %539 = vrot.lane.b32.xlu0 %v538, 116
          %v540 = vpop.permute.xlu0 %539
          %s541 = vtos %v540
          %v542 = vstv %s541
          %v544 = vmul.f32 %v542, %v444
          %v545 = vrot.slane %v278, 3
          %546 = vrot.lane.b32.xlu0 %v545, 115
          %v547 = vpop.permute.xlu0 %546
          %s548 = vtos %v547
          %v549 = vstv %s548
          %v551 = vmul.f32 %v549, %v452
          %v552 = vadd.f32 %v544, %v551
          %v554 = vrot.slane %v552, 4
          %v556 = vsel %vm456, %v554, %v554
          %v557 = vmul.f32 %v461, %v552
          %v558 = vmul.f32 %v467, %v556
          %v559 = vadd.f32 %v557, %v558
          %v560 = vadd.f32 %v559, %v337
          %v561 = vrot.slane %v270, 4
          %562 = vrot.lane.b32.xlu0 %v561, 116
          %v563 = vpop.permute.xlu0 %562
          %s564 = vtos %v563
          %v565 = vstv %s564
          %v567 = vmul.f32 %v565, %v446
          %v569 = vrot.slane %v567, 4
          %v571 = vsel %vm456, %v569, %v569
          %v572 = vmul.f32 %v461, %v567
          %v573 = vmul.f32 %v467, %v571
          %v574 = vadd.f32 %v572, %v573
          %v575 = vadd.f32 %v574, %v339
          %v576 = vrot.slane %v270, 5
          %577 = vrot.lane.b32.xlu0 %v576, 116
          %v578 = vpop.permute.xlu0 %577
          %s579 = vtos %v578
          %v580 = vstv %s579
          %v582 = vmul.f32 %v580, %v448
          %v584 = vrot.slane %v582, 4
          %v586 = vsel %vm456, %v584, %v584
          %v587 = vmul.f32 %v461, %v582
          %v588 = vmul.f32 %v467, %v586
          %v589 = vadd.f32 %v587, %v588
          %v590 = vadd.f32 %v589, %v341
          %v591 = vrot.slane %v270, 6
          %592 = vrot.lane.b32.xlu0 %v591, 116
          %v593 = vpop.permute.xlu0 %592
          %s594 = vtos %v593
          %v595 = vstv %s594
          %v597 = vmul.f32 %v595, %v450
          %v599 = vrot.slane %v597, 4
          %v601 = vsel %vm456, %v599, %v599
          %v602 = vmul.f32 %v461, %v597
          %v603 = vmul.f32 %v467, %v601
          %v604 = vadd.f32 %v602, %v603
          %v605 = vadd.f32 %v604, %v343
          %v606 = vrot.slane %v270, 7
          %607 = vrot.lane.b32.xlu0 %v606, 116
          %v608 = vpop.permute.xlu0 %607
          %s609 = vtos %v608
          %v610 = vstv %s609
          %v612 = vmul.f32 %v610, %v452
          %v614 = vrot.slane %v612, 4
          %v616 = vsel %vm456, %v614, %v614
          %v617 = vmul.f32 %v461, %v612
          %v618 = vmul.f32 %v467, %v616
          %v619 = vadd.f32 %v617, %v618
          %v620 = vadd.f32 %v619, %v345
          %622 = vset.pattern.permute.xlu0 16
          %623 = vperm.xlu0 %622, %v280
          %v624 = vpop.permute.xlu0 %623
          %v626 = vlaneseq
          %v627 = vshrl.u32 %v626, 7
          %v628 = vsub.s32 0, %v627
          %v629 = vrot.slane %v470, %v628
          %v630 = vmul.f32 %v624, %v629
          %631 = vset.pattern.permute.xlu0 17
          %632 = vperm.xlu0 %631, %v280
          %v633 = vpop.permute.xlu0 %632
          %v635 = vlaneseq
          %v636 = vshrl.u32 %v635, 7
          %v637 = vsub.s32 1, %v636
          %v638 = vrot.slane %v470, %v637
          %v639 = vmul.f32 %v633, %v638
          %v640 = vadd.f32 %v630, %v639
          %641 = vset.pattern.permute.xlu0 18
          %642 = vperm.xlu0 %641, %v280
          %v643 = vpop.permute.xlu0 %642
          %v645 = vlaneseq
          %v646 = vshrl.u32 %v645, 7
          %v647 = vsub.s32 2, %v646
          %v648 = vrot.slane %v470, %v647
          %v649 = vmul.f32 %v643, %v648
          %v650 = vadd.f32 %v640, %v649
          %651 = vset.pattern.permute.xlu0 19
          %652 = vperm.xlu0 %651, %v280
          %v653 = vpop.permute.xlu0 %652
          %v655 = vlaneseq
          %v656 = vshrl.u32 %v655, 7
          %v657 = vsub.s32 3, %v656
          %v658 = vrot.slane %v470, %v657
          %v659 = vmul.f32 %v653, %v658
          %v660 = vadd.f32 %v650, %v659
          %661 = vset.pattern.permute.xlu0 20
          %662 = vperm.xlu0 %661, %v280
          %v663 = vpop.permute.xlu0 %662
          %v665 = vlaneseq
          %v666 = vshrl.u32 %v665, 7
          %v667 = vsub.s32 4, %v666
          %v668 = vrot.slane %v470, %v667
          %v669 = vmul.f32 %v663, %v668
          %v670 = vadd.f32 %v660, %v669
          %671 = vset.pattern.permute.xlu0 21
          %672 = vperm.xlu0 %671, %v280
          %v673 = vpop.permute.xlu0 %672
          %v675 = vlaneseq
          %v676 = vshrl.u32 %v675, 7
          %v677 = vsub.s32 5, %v676
          %v678 = vrot.slane %v470, %v677
          %v679 = vmul.f32 %v673, %v678
          %v680 = vadd.f32 %v670, %v679
          %681 = vset.pattern.permute.xlu0 22
          %682 = vperm.xlu0 %681, %v280
          %v683 = vpop.permute.xlu0 %682
          %v685 = vlaneseq
          %v686 = vshrl.u32 %v685, 7
          %v687 = vsub.s32 6, %v686
          %v688 = vrot.slane %v470, %v687
          %v689 = vmul.f32 %v683, %v688
          %v690 = vadd.f32 %v680, %v689
          %691 = vset.pattern.permute.xlu0 23
          %692 = vperm.xlu0 %691, %v280
          %v693 = vpop.permute.xlu0 %692
          %v695 = vlaneseq
          %v696 = vshrl.u32 %v695, 7
          %v697 = vsub.s32 7, %v696
          %v698 = vrot.slane %v470, %v697
          %v699 = vmul.f32 %v693, %v698
          %v700 = vadd.f32 %v690, %v699
          %v701 = vsub.f32 %v436, %v700
          %v702 = vstv %s298
          %v703 = vmul.f32 %v702, %v491
          %v704 = vstv %s299
          %v705 = vmul.f32 %v704, %v514
          %v706 = vadd.f32 %v703, %v705
          %v707 = vstv %s300
          %v708 = vmul.f32 %v707, %v537
          %v709 = vadd.f32 %v706, %v708
          %v710 = vstv %s301
          %v711 = vmul.f32 %v710, %v560
          %v712 = vadd.f32 %v709, %v711
          %v713 = vstv %s302
          %v714 = vmul.f32 %v713, %v575
          %v715 = vadd.f32 %v712, %v714
          %v716 = vstv %s303
          %v717 = vmul.f32 %v716, %v590
          %v718 = vadd.f32 %v715, %v717
          %v719 = vstv %s304
          %v720 = vmul.f32 %v719, %v605
          %v721 = vadd.f32 %v718, %v720
          %v722 = vstv %s305
          %v723 = vmul.f32 %v722, %v620
          %v724 = vadd.f32 %v721, %v723
          %v725 = vstv %s306
          %v726 = vmul.f32 %v725, %v491
          %v727 = vstv %s307
          %v728 = vmul.f32 %v727, %v514
          %v729 = vadd.f32 %v726, %v728
          %v730 = vstv %s308
          %v731 = vmul.f32 %v730, %v537
          %v732 = vadd.f32 %v729, %v731
          %v733 = vstv %s309
          %v734 = vmul.f32 %v733, %v560
          %v735 = vadd.f32 %v732, %v734
          %v736 = vstv %s310
          %v737 = vmul.f32 %v736, %v575
          %v738 = vadd.f32 %v735, %v737
          %v739 = vstv %s311
          %v740 = vmul.f32 %v739, %v590
          %v741 = vadd.f32 %v738, %v740
          %v742 = vstv %s312
          %v743 = vmul.f32 %v742, %v605
          %v744 = vadd.f32 %v741, %v743
          %v745 = vstv %s313
          %v746 = vmul.f32 %v745, %v620
          %v747 = vadd.f32 %v744, %v746
          %v748 = vstv %s314
          %v749 = vmul.f32 %v748, %v491
          %v750 = vstv %s315
          %v751 = vmul.f32 %v750, %v514
          %v752 = vadd.f32 %v749, %v751
          %v753 = vstv %s316
          %v754 = vmul.f32 %v753, %v537
          %v755 = vadd.f32 %v752, %v754
          %v756 = vstv %s317
          %v757 = vmul.f32 %v756, %v560
          %v758 = vadd.f32 %v755, %v757
          %v759 = vstv %s318
          %v760 = vmul.f32 %v759, %v575
          %v761 = vadd.f32 %v758, %v760
          %v762 = vstv %s319
          %v763 = vmul.f32 %v762, %v590
          %v764 = vadd.f32 %v761, %v763
          %v765 = vstv %s320
          %v766 = vmul.f32 %v765, %v605
          %v767 = vadd.f32 %v764, %v766
          %v768 = vstv %s321
          %v769 = vmul.f32 %v768, %v620
          %v770 = vadd.f32 %v767, %v769
          %v771 = vstv %s322
          %v772 = vmul.f32 %v771, %v491
          %v773 = vstv %s323
          %v774 = vmul.f32 %v773, %v514
          %v775 = vadd.f32 %v772, %v774
          %v776 = vstv %s324
          %v777 = vmul.f32 %v776, %v537
          %v778 = vadd.f32 %v775, %v777
          %v779 = vstv %s325
          %v780 = vmul.f32 %v779, %v560
          %v781 = vadd.f32 %v778, %v780
          %v782 = vstv %s326
          %v783 = vmul.f32 %v782, %v575
          %v784 = vadd.f32 %v781, %v783
          %v785 = vstv %s327
          %v786 = vmul.f32 %v785, %v590
          %v787 = vadd.f32 %v784, %v786
          %v788 = vstv %s328
          %v789 = vmul.f32 %v788, %v605
          %v790 = vadd.f32 %v787, %v789
          %v791 = vstv %s329
          %v792 = vmul.f32 %v791, %v620
          %v793 = vadd.f32 %v790, %v792
          %v794 = vlaneseq
          %v795 = vshrl.u32 %v794, 7
          %v796 = vsub.s32 0, %v795
          %v797 = vrot.slane %v724, %v796
          %v798 = vmul.f32 %v624, %v797
          %v799 = vlaneseq
          %v800 = vshrl.u32 %v799, 7
          %v801 = vsub.s32 1, %v800
          %v802 = vrot.slane %v724, %v801
          %v803 = vmul.f32 %v633, %v802
          %v804 = vadd.f32 %v798, %v803
          %v805 = vlaneseq
          %v806 = vshrl.u32 %v805, 7
          %v807 = vsub.s32 2, %v806
          %v808 = vrot.slane %v724, %v807
          %v809 = vmul.f32 %v643, %v808
          %v810 = vadd.f32 %v804, %v809
          %v811 = vlaneseq
          %v812 = vshrl.u32 %v811, 7
          %v813 = vsub.s32 3, %v812
          %v814 = vrot.slane %v724, %v813
          %v815 = vmul.f32 %v653, %v814
          %v816 = vadd.f32 %v810, %v815
          %v817 = vlaneseq
          %v818 = vshrl.u32 %v817, 7
          %v819 = vsub.s32 4, %v818
          %v820 = vrot.slane %v724, %v819
          %v821 = vmul.f32 %v663, %v820
          %v822 = vadd.f32 %v816, %v821
          %v823 = vlaneseq
          %v824 = vshrl.u32 %v823, 7
          %v825 = vsub.s32 5, %v824
          %v826 = vrot.slane %v724, %v825
          %v827 = vmul.f32 %v673, %v826
          %v828 = vadd.f32 %v822, %v827
          %v829 = vlaneseq
          %v830 = vshrl.u32 %v829, 7
          %v831 = vsub.s32 6, %v830
          %v832 = vrot.slane %v724, %v831
          %v833 = vmul.f32 %v683, %v832
          %v834 = vadd.f32 %v828, %v833
          %v835 = vlaneseq
          %v836 = vshrl.u32 %v835, 7
          %v837 = vsub.s32 7, %v836
          %v838 = vrot.slane %v724, %v837
          %v839 = vmul.f32 %v693, %v838
          %v840 = vadd.f32 %v834, %v839
          %v841 = vadd.f32 %v840, %v346
          %v842 = vlaneseq
          %v843 = vshrl.u32 %v842, 7
          %v844 = vsub.s32 0, %v843
          %v845 = vrot.slane %v747, %v844
          %v846 = vmul.f32 %v624, %v845
          %v847 = vlaneseq
          %v848 = vshrl.u32 %v847, 7
          %v849 = vsub.s32 1, %v848
          %v850 = vrot.slane %v747, %v849
          %v851 = vmul.f32 %v633, %v850
          %v852 = vadd.f32 %v846, %v851
          %v853 = vlaneseq
          %v854 = vshrl.u32 %v853, 7
          %v855 = vsub.s32 2, %v854
          %v856 = vrot.slane %v747, %v855
          %v857 = vmul.f32 %v643, %v856
          %v858 = vadd.f32 %v852, %v857
          %v859 = vlaneseq
          %v860 = vshrl.u32 %v859, 7
          %v861 = vsub.s32 3, %v860
          %v862 = vrot.slane %v747, %v861
          %v863 = vmul.f32 %v653, %v862
          %v864 = vadd.f32 %v858, %v863
          %v865 = vlaneseq
          %v866 = vshrl.u32 %v865, 7
          %v867 = vsub.s32 4, %v866
          %v868 = vrot.slane %v747, %v867
          %v869 = vmul.f32 %v663, %v868
          %v870 = vadd.f32 %v864, %v869
          %v871 = vlaneseq
          %v872 = vshrl.u32 %v871, 7
          %v873 = vsub.s32 5, %v872
          %v874 = vrot.slane %v747, %v873
          %v875 = vmul.f32 %v673, %v874
          %v876 = vadd.f32 %v870, %v875
          %v877 = vlaneseq
          %v878 = vshrl.u32 %v877, 7
          %v879 = vsub.s32 6, %v878
          %v880 = vrot.slane %v747, %v879
          %v881 = vmul.f32 %v683, %v880
          %v882 = vadd.f32 %v876, %v881
          %v883 = vlaneseq
          %v884 = vshrl.u32 %v883, 7
          %v885 = vsub.s32 7, %v884
          %v886 = vrot.slane %v747, %v885
          %v887 = vmul.f32 %v693, %v886
          %v888 = vadd.f32 %v882, %v887
          %v889 = vadd.f32 %v888, %v347
          %v890 = vlaneseq
          %v891 = vshrl.u32 %v890, 7
          %v892 = vsub.s32 0, %v891
          %v893 = vrot.slane %v770, %v892
          %v894 = vmul.f32 %v624, %v893
          %v895 = vlaneseq
          %v896 = vshrl.u32 %v895, 7
          %v897 = vsub.s32 1, %v896
          %v898 = vrot.slane %v770, %v897
          %v899 = vmul.f32 %v633, %v898
          %v900 = vadd.f32 %v894, %v899
          %v901 = vlaneseq
          %v902 = vshrl.u32 %v901, 7
          %v903 = vsub.s32 2, %v902
          %v904 = vrot.slane %v770, %v903
          %v905 = vmul.f32 %v643, %v904
          %v906 = vadd.f32 %v900, %v905
          %v907 = vlaneseq
          %v908 = vshrl.u32 %v907, 7
          %v909 = vsub.s32 3, %v908
          %v910 = vrot.slane %v770, %v909
          %v911 = vmul.f32 %v653, %v910
          %v912 = vadd.f32 %v906, %v911
          %v913 = vlaneseq
          %v914 = vshrl.u32 %v913, 7
          %v915 = vsub.s32 4, %v914
          %v916 = vrot.slane %v770, %v915
          %v917 = vmul.f32 %v663, %v916
          %v918 = vadd.f32 %v912, %v917
          %v919 = vlaneseq
          %v920 = vshrl.u32 %v919, 7
          %v921 = vsub.s32 5, %v920
          %v922 = vrot.slane %v770, %v921
          %v923 = vmul.f32 %v673, %v922
          %v924 = vadd.f32 %v918, %v923
          %v925 = vlaneseq
          %v926 = vshrl.u32 %v925, 7
          %v927 = vsub.s32 6, %v926
          %v928 = vrot.slane %v770, %v927
          %v929 = vmul.f32 %v683, %v928
          %v930 = vadd.f32 %v924, %v929
          %v931 = vlaneseq
          %v932 = vshrl.u32 %v931, 7
          %v933 = vsub.s32 7, %v932
          %v934 = vrot.slane %v770, %v933
          %v935 = vmul.f32 %v693, %v934
          %v936 = vadd.f32 %v930, %v935
          %v937 = vadd.f32 %v936, %v348
          %v938 = vlaneseq
          %v939 = vshrl.u32 %v938, 7
          %v940 = vsub.s32 0, %v939
          %v941 = vrot.slane %v793, %v940
          %v942 = vmul.f32 %v624, %v941
          %v943 = vlaneseq
          %v944 = vshrl.u32 %v943, 7
          %v945 = vsub.s32 1, %v944
          %v946 = vrot.slane %v793, %v945
          %v947 = vmul.f32 %v633, %v946
          %v948 = vadd.f32 %v942, %v947
          %v949 = vlaneseq
          %v950 = vshrl.u32 %v949, 7
          %v951 = vsub.s32 2, %v950
          %v952 = vrot.slane %v793, %v951
          %v953 = vmul.f32 %v643, %v952
          %v954 = vadd.f32 %v948, %v953
          %v955 = vlaneseq
          %v956 = vshrl.u32 %v955, 7
          %v957 = vsub.s32 3, %v956
          %v958 = vrot.slane %v793, %v957
          %v959 = vmul.f32 %v653, %v958
          %v960 = vadd.f32 %v954, %v959
          %v961 = vlaneseq
          %v962 = vshrl.u32 %v961, 7
          %v963 = vsub.s32 4, %v962
          %v964 = vrot.slane %v793, %v963
          %v965 = vmul.f32 %v663, %v964
          %v966 = vadd.f32 %v960, %v965
          %v967 = vlaneseq
          %v968 = vshrl.u32 %v967, 7
          %v969 = vsub.s32 5, %v968
          %v970 = vrot.slane %v793, %v969
          %v971 = vmul.f32 %v673, %v970
          %v972 = vadd.f32 %v966, %v971
          %v973 = vlaneseq
          %v974 = vshrl.u32 %v973, 7
          %v975 = vsub.s32 6, %v974
          %v976 = vrot.slane %v793, %v975
          %v977 = vmul.f32 %v683, %v976
          %v978 = vadd.f32 %v972, %v977
          %v979 = vlaneseq
          %v980 = vshrl.u32 %v979, 7
          %v981 = vsub.s32 7, %v980
          %v982 = vrot.slane %v793, %v981
          %v983 = vmul.f32 %v693, %v982
          %v984 = vadd.f32 %v978, %v983
          %v985 = vadd.f32 %v984, %v349
          %v987 = vrot.slane %v985, 1
          %v989 = vmul.f32 %v937, %v987
          %v991 = vrot.slane %v937, 1
          %v993 = vmul.f32 %v985, %v991
          %v994 = vsub.f32 %v989, %v993
          %v996 = vrot.slane %v994, 1
          %v998 = vmul.f32 %v889, %v996
          %v999 = vmul.f32 %v889, %v987
          %v1001 = vrot.slane %v889, 1
          %v1003 = vmul.f32 %v985, %v1001
          %v1004 = vsub.f32 %v999, %v1003
          %v1006 = vrot.slane %v1004, 1
          %v1008 = vmul.f32 %v937, %v1006
          %v1009 = vsub.f32 %v998, %v1008
          %v1010 = vmul.f32 %v889, %v991
          %v1011 = vmul.f32 %v937, %v1001
          %v1012 = vsub.f32 %v1010, %v1011
          %v1014 = vrot.slane %v1012, 1
          %v1016 = vmul.f32 %v985, %v1014
          %v1017 = vadd.f32 %v1009, %v1016
          %v1018 = vmul.f32 %v841, %v996
          %v1019 = vmul.f32 %v841, %v987
          %v1021 = vrot.slane %v841, 1
          %v1023 = vmul.f32 %v985, %v1021
          %v1024 = vsub.f32 %v1019, %v1023
          %v1026 = vrot.slane %v1024, 1
          %v1028 = vmul.f32 %v937, %v1026
          %v1029 = vsub.f32 %v1018, %v1028
          %v1030 = vmul.f32 %v841, %v991
          %v1031 = vmul.f32 %v937, %v1021
          %v1032 = vsub.f32 %v1030, %v1031
          %v1034 = vrot.slane %v1032, 1
          %v1036 = vmul.f32 %v985, %v1034
          %v1037 = vadd.f32 %v1029, %v1036
          %v1038 = vsub.f32 0.0, %v1037
          %v1039 = vmul.f32 %v841, %v1006
          %v1040 = vmul.f32 %v889, %v1026
          %v1041 = vsub.f32 %v1039, %v1040
          %v1042 = vmul.f32 %v841, %v1001
          %v1043 = vmul.f32 %v889, %v1021
          %v1044 = vsub.f32 %v1042, %v1043
          %v1046 = vrot.slane %v1044, 1
          %v1048 = vmul.f32 %v985, %v1046
          %v1049 = vadd.f32 %v1041, %v1048
          %v1050 = vmul.f32 %v841, %v1014
          %v1051 = vmul.f32 %v889, %v1034
          %v1052 = vsub.f32 %v1050, %v1051
          %v1053 = vmul.f32 %v937, %v1046
          %v1054 = vadd.f32 %v1052, %v1053
          %v1055 = vsub.f32 0.0, %v1054
          %v1056 = vrot.slane %v994, 2
          %v1058 = vmul.f32 %v889, %v1056
          %v1059 = vrot.slane %v1004, 2
          %v1061 = vmul.f32 %v937, %v1059
          %v1062 = vsub.f32 %v1058, %v1061
          %v1063 = vrot.slane %v1012, 2
          %v1065 = vmul.f32 %v985, %v1063
          %v1066 = vadd.f32 %v1062, %v1065
          %v1067 = vsub.f32 0.0, %v1066
          %v1068 = vmul.f32 %v841, %v1056
          %v1069 = vrot.slane %v1024, 2
          %v1071 = vmul.f32 %v937, %v1069
          %v1072 = vsub.f32 %v1068, %v1071
          %v1073 = vrot.slane %v1032, 2
          %v1075 = vmul.f32 %v985, %v1073
          %v1076 = vadd.f32 %v1072, %v1075
          %v1077 = vmul.f32 %v841, %v1059
          %v1078 = vmul.f32 %v889, %v1069
          %v1079 = vsub.f32 %v1077, %v1078
          %v1080 = vrot.slane %v1044, 2
          %v1082 = vmul.f32 %v985, %v1080
          %v1083 = vadd.f32 %v1079, %v1082
          %v1084 = vsub.f32 0.0, %v1083
          %v1085 = vmul.f32 %v841, %v1063
          %v1086 = vmul.f32 %v889, %v1073
          %v1087 = vsub.f32 %v1085, %v1086
          %v1088 = vmul.f32 %v937, %v1080
          %v1089 = vadd.f32 %v1087, %v1088
          %v1090 = vrot.slane %v985, 2
          %v1092 = vmul.f32 %v937, %v1090
          %v1093 = vrot.slane %v937, 2
          %v1095 = vmul.f32 %v985, %v1093
          %v1096 = vsub.f32 %v1092, %v1095
          %v1098 = vrot.slane %v1096, 1
          %v1100 = vmul.f32 %v889, %v1098
          %v1101 = vmul.f32 %v889, %v1090
          %v1102 = vrot.slane %v889, 2
          %v1104 = vmul.f32 %v985, %v1102
          %v1105 = vsub.f32 %v1101, %v1104
          %v1107 = vrot.slane %v1105, 1
          %v1109 = vmul.f32 %v937, %v1107
          %v1110 = vsub.f32 %v1100, %v1109
          %v1111 = vmul.f32 %v889, %v1093
          %v1112 = vmul.f32 %v937, %v1102
          %v1113 = vsub.f32 %v1111, %v1112
          %v1115 = vrot.slane %v1113, 1
          %v1117 = vmul.f32 %v985, %v1115
          %v1118 = vadd.f32 %v1110, %v1117
          %v1119 = vmul.f32 %v841, %v1098
          %v1120 = vmul.f32 %v841, %v1090
          %v1121 = vrot.slane %v841, 2
          %v1123 = vmul.f32 %v985, %v1121
          %v1124 = vsub.f32 %v1120, %v1123
          %v1126 = vrot.slane %v1124, 1
          %v1128 = vmul.f32 %v937, %v1126
          %v1129 = vsub.f32 %v1119, %v1128
          %v1130 = vmul.f32 %v841, %v1093
          %v1131 = vmul.f32 %v937, %v1121
          %v1132 = vsub.f32 %v1130, %v1131
          %v1134 = vrot.slane %v1132, 1
          %v1136 = vmul.f32 %v985, %v1134
          %v1137 = vadd.f32 %v1129, %v1136
          %v1138 = vsub.f32 0.0, %v1137
          %v1139 = vmul.f32 %v841, %v1107
          %v1140 = vmul.f32 %v889, %v1126
          %v1141 = vsub.f32 %v1139, %v1140
          %v1142 = vmul.f32 %v841, %v1102
          %v1143 = vmul.f32 %v889, %v1121
          %v1144 = vsub.f32 %v1142, %v1143
          %v1146 = vrot.slane %v1144, 1
          %v1148 = vmul.f32 %v985, %v1146
          %v1149 = vadd.f32 %v1141, %v1148
          %v1150 = vmul.f32 %v841, %v1115
          %v1151 = vmul.f32 %v889, %v1134
          %v1152 = vsub.f32 %v1150, %v1151
          %v1153 = vmul.f32 %v937, %v1146
          %v1154 = vadd.f32 %v1152, %v1153
          %v1155 = vsub.f32 0.0, %v1154
          %v1156 = vsub.f32 0.0, %v1017
          %v1157 = vsub.f32 0.0, %v1049
          %v1159 = vrot.slane %v1017, 1
          %v1161 = vmul.f32 %v841, %v1159
          %v1163 = vrot.slane %v1038, 1
          %v1165 = vmul.f32 %v889, %v1163
          %v1166 = vadd.f32 %v1161, %v1165
          %v1168 = vrot.slane %v1049, 1
          %v1170 = vmul.f32 %v937, %v1168
          %v1171 = vadd.f32 %v1166, %v1170
          %v1173 = vrot.slane %v1055, 1
          %v1175 = vmul.f32 %v985, %v1173
          %v1176 = vadd.f32 %v1171, %v1175
          %v1177 = vrcp.pop %v1176
          %v1178 = vmul.f32 1.0, %v1177
          %v1180 = vrot.slane %v1178, 7
          %v1182 = vmul.f32 %v1017, %v1180
          %v1183 = vmul.f32 %v1067, %v1178
          %v1184 = vmul.f32 %v1118, %v1178
          %v1185 = vmul.f32 %v1156, %v1178
          %v1186 = vmul.f32 %v1038, %v1180
          %v1187 = vmul.f32 %v1076, %v1178
          %v1188 = vmul.f32 %v1138, %v1178
          %v1189 = vmul.f32 %v1037, %v1178
          %v1190 = vmul.f32 %v1049, %v1180
          %v1191 = vmul.f32 %v1084, %v1178
          %v1192 = vmul.f32 %v1149, %v1178
          %v1193 = vmul.f32 %v1157, %v1178
          %v1194 = vmul.f32 %v1055, %v1180
          %v1195 = vmul.f32 %v1089, %v1178
          %v1196 = vmul.f32 %v1155, %v1178
          %v1197 = vmul.f32 %v1054, %v1178
          %v1198 = vlaneseq
          %v1199 = vshrl.u32 %v1198, 7
          %v1200 = vsub.s32 1, %v1199
          %v1201 = vrot.slane %v1182, %v1200
          %v1202 = vmul.f32 %v724, %v1201
          %v1203 = vlaneseq
          %v1204 = vshrl.u32 %v1203, 7
          %v1205 = vsub.s32 1, %v1204
          %v1206 = vrot.slane %v1186, %v1205
          %v1207 = vmul.f32 %v747, %v1206
          %v1208 = vadd.f32 %v1202, %v1207
          %v1209 = vlaneseq
          %v1210 = vshrl.u32 %v1209, 7
          %v1211 = vsub.s32 1, %v1210
          %v1212 = vrot.slane %v1190, %v1211
          %v1213 = vmul.f32 %v770, %v1212
          %v1214 = vadd.f32 %v1208, %v1213
          %v1215 = vlaneseq
          %v1216 = vshrl.u32 %v1215, 7
          %v1217 = vsub.s32 1, %v1216
          %v1218 = vrot.slane %v1194, %v1217
          %v1219 = vmul.f32 %v793, %v1218
          %v1220 = vadd.f32 %v1214, %v1219
          %v1221 = vlaneseq
          %v1222 = vshrl.u32 %v1221, 7
          %v1223 = vsub.s32 0, %v1222
          %v1224 = vrot.slane %v1183, %v1223
          %v1225 = vmul.f32 %v724, %v1224
          %v1226 = vlaneseq
          %v1227 = vshrl.u32 %v1226, 7
          %v1228 = vsub.s32 0, %v1227
          %v1229 = vrot.slane %v1187, %v1228
          %v1230 = vmul.f32 %v747, %v1229
          %v1231 = vadd.f32 %v1225, %v1230
          %v1232 = vlaneseq
          %v1233 = vshrl.u32 %v1232, 7
          %v1234 = vsub.s32 0, %v1233
          %v1235 = vrot.slane %v1191, %v1234
          %v1236 = vmul.f32 %v770, %v1235
          %v1237 = vadd.f32 %v1231, %v1236
          %v1238 = vlaneseq
          %v1239 = vshrl.u32 %v1238, 7
          %v1240 = vsub.s32 0, %v1239
          %v1241 = vrot.slane %v1195, %v1240
          %v1242 = vmul.f32 %v793, %v1241
          %v1243 = vadd.f32 %v1237, %v1242
          %v1244 = vlaneseq
          %v1245 = vshrl.u32 %v1244, 7
          %v1246 = vsub.s32 0, %v1245
          %v1247 = vrot.slane %v1184, %v1246
          %v1248 = vmul.f32 %v724, %v1247
          %v1249 = vlaneseq
          %v1250 = vshrl.u32 %v1249, 7
          %v1251 = vsub.s32 0, %v1250
          %v1252 = vrot.slane %v1188, %v1251
          %v1253 = vmul.f32 %v747, %v1252
          %v1254 = vadd.f32 %v1248, %v1253
          %v1255 = vlaneseq
          %v1256 = vshrl.u32 %v1255, 7
          %v1257 = vsub.s32 0, %v1256
          %v1258 = vrot.slane %v1192, %v1257
          %v1259 = vmul.f32 %v770, %v1258
          %v1260 = vadd.f32 %v1254, %v1259
          %v1261 = vlaneseq
          %v1262 = vshrl.u32 %v1261, 7
          %v1263 = vsub.s32 0, %v1262
          %v1264 = vrot.slane %v1196, %v1263
          %v1265 = vmul.f32 %v793, %v1264
          %v1266 = vadd.f32 %v1260, %v1265
          %v1267 = vlaneseq
          %v1268 = vshrl.u32 %v1267, 7
          %v1269 = vsub.s32 0, %v1268
          %v1270 = vrot.slane %v1185, %v1269
          %v1271 = vmul.f32 %v724, %v1270
          %v1272 = vlaneseq
          %v1273 = vshrl.u32 %v1272, 7
          %v1274 = vsub.s32 0, %v1273
          %v1275 = vrot.slane %v1189, %v1274
          %v1276 = vmul.f32 %v747, %v1275
          %v1277 = vadd.f32 %v1271, %v1276
          %v1278 = vlaneseq
          %v1279 = vshrl.u32 %v1278, 7
          %v1280 = vsub.s32 0, %v1279
          %v1281 = vrot.slane %v1193, %v1280
          %v1282 = vmul.f32 %v770, %v1281
          %v1283 = vadd.f32 %v1277, %v1282
          %v1284 = vlaneseq
          %v1285 = vshrl.u32 %v1284, 7
          %v1286 = vsub.s32 0, %v1285
          %v1287 = vrot.slane %v1197, %v1286
          %v1288 = vmul.f32 %v793, %v1287
          %v1289 = vadd.f32 %v1283, %v1288
          %1291 = vset.pattern.permute.xlu0 0
          %1292 = vperm.xlu0 %1291, %v268
          %v1293 = vpop.permute.xlu0 %1292
          %1296 = vset.pattern.permute.xlu0 0
          %1297 = vperm.xlu0 %1296, %v279
          %v1298 = vpop.permute.xlu0 %1297
          %v1300 = vlaneseq
          %v1301 = vshrl.u32 %v1300, 7
          %v1302 = vsub.s32 0, %v1301
          %v1303 = vrot.slane %v701, %v1302
          %v1304 = vmul.f32 %v1293, %v1303
          %v1305 = vmul.f32 %v1298, %v1303
          %1306 = vset.pattern.permute.xlu0 1
          %1307 = vperm.xlu0 %1306, %v268
          %v1308 = vpop.permute.xlu0 %1307
          %1310 = vset.pattern.permute.xlu0 1
          %1311 = vperm.xlu0 %1310, %v279
          %v1312 = vpop.permute.xlu0 %1311
          %v1314 = vlaneseq
          %v1315 = vshrl.u32 %v1314, 7
          %v1316 = vsub.s32 1, %v1315
          %v1317 = vrot.slane %v701, %v1316
          %v1318 = vmul.f32 %v1308, %v1317
          %v1319 = vmul.f32 %v1312, %v1317
          %v1320 = vadd.f32 %v1304, %v1318
          %v1321 = vadd.f32 %v1305, %v1319
          %1322 = vset.pattern.permute.xlu0 2
          %1323 = vperm.xlu0 %1322, %v268
          %v1324 = vpop.permute.xlu0 %1323
          %1326 = vset.pattern.permute.xlu0 2
          %1327 = vperm.xlu0 %1326, %v279
          %v1328 = vpop.permute.xlu0 %1327
          %v1330 = vlaneseq
          %v1331 = vshrl.u32 %v1330, 7
          %v1332 = vsub.s32 2, %v1331
          %v1333 = vrot.slane %v701, %v1332
          %v1334 = vmul.f32 %v1324, %v1333
          %v1335 = vmul.f32 %v1328, %v1333
          %v1336 = vadd.f32 %v1320, %v1334
          %v1337 = vadd.f32 %v1321, %v1335
          %1338 = vset.pattern.permute.xlu0 3
          %1339 = vperm.xlu0 %1338, %v268
          %v1340 = vpop.permute.xlu0 %1339
          %1342 = vset.pattern.permute.xlu0 3
          %1343 = vperm.xlu0 %1342, %v279
          %v1344 = vpop.permute.xlu0 %1343
          %v1346 = vlaneseq
          %v1347 = vshrl.u32 %v1346, 7
          %v1348 = vsub.s32 3, %v1347
          %v1349 = vrot.slane %v701, %v1348
          %v1350 = vmul.f32 %v1340, %v1349
          %v1351 = vmul.f32 %v1344, %v1349
          %v1352 = vadd.f32 %v1336, %v1350
          %v1353 = vadd.f32 %v1337, %v1351
          %1354 = vset.pattern.permute.xlu0 4
          %1355 = vperm.xlu0 %1354, %v268
          %v1356 = vpop.permute.xlu0 %1355
          %1358 = vset.pattern.permute.xlu0 4
          %1359 = vperm.xlu0 %1358, %v279
          %v1360 = vpop.permute.xlu0 %1359
          %v1362 = vlaneseq
          %v1363 = vshrl.u32 %v1362, 7
          %v1364 = vsub.s32 0, %v1363
          %v1365 = vrot.slane %v436, %v1364
          %v1366 = vmul.f32 %v1356, %v1365
          %v1367 = vmul.f32 %v1360, %v1365
          %v1368 = vadd.f32 %v1352, %v1366
          %v1369 = vadd.f32 %v1353, %v1367
          %1370 = vset.pattern.permute.xlu0 5
          %1371 = vperm.xlu0 %1370, %v268
          %v1372 = vpop.permute.xlu0 %1371
          %1374 = vset.pattern.permute.xlu0 5
          %1375 = vperm.xlu0 %1374, %v279
          %v1376 = vpop.permute.xlu0 %1375
          %v1378 = vlaneseq
          %v1379 = vshrl.u32 %v1378, 7
          %v1380 = vsub.s32 1, %v1379
          %v1381 = vrot.slane %v436, %v1380
          %v1382 = vmul.f32 %v1372, %v1381
          %v1383 = vmul.f32 %v1376, %v1381
          %v1384 = vadd.f32 %v1368, %v1382
          %v1385 = vadd.f32 %v1369, %v1383
          %1386 = vset.pattern.permute.xlu0 6
          %1387 = vperm.xlu0 %1386, %v268
          %v1388 = vpop.permute.xlu0 %1387
          %1390 = vset.pattern.permute.xlu0 6
          %1391 = vperm.xlu0 %1390, %v279
          %v1392 = vpop.permute.xlu0 %1391
          %v1394 = vlaneseq
          %v1395 = vshrl.u32 %v1394, 7
          %v1396 = vsub.s32 2, %v1395
          %v1397 = vrot.slane %v436, %v1396
          %v1398 = vmul.f32 %v1388, %v1397
          %v1399 = vmul.f32 %v1392, %v1397
          %v1400 = vadd.f32 %v1384, %v1398
          %v1401 = vadd.f32 %v1385, %v1399
          %1402 = vset.pattern.permute.xlu0 7
          %1403 = vperm.xlu0 %1402, %v268
          %v1404 = vpop.permute.xlu0 %1403
          %1406 = vset.pattern.permute.xlu0 7
          %1407 = vperm.xlu0 %1406, %v279
          %v1408 = vpop.permute.xlu0 %1407
          %v1410 = vlaneseq
          %v1411 = vshrl.u32 %v1410, 7
          %v1412 = vsub.s32 3, %v1411
          %v1413 = vrot.slane %v436, %v1412
          %v1414 = vmul.f32 %v1404, %v1413
          %v1415 = vmul.f32 %v1408, %v1413
          %v1416 = vadd.f32 %v1400, %v1414
          %v1417 = vadd.f32 %v1401, %v1415
          %1418 = vset.pattern.permute.xlu0 8
          %1419 = vperm.xlu0 %1418, %v268
          %v1420 = vpop.permute.xlu0 %1419
          %1422 = vset.pattern.permute.xlu0 8
          %1423 = vperm.xlu0 %1422, %v279
          %v1424 = vpop.permute.xlu0 %1423
          %v1426 = vadd.f32 %v1416, %v1420
          %v1427 = vadd.f32 %v1417, %v1424
          %v1428 = vadd.f32 %v1426, %v1427
          %v1429 = vrot.slane %v1428, 4
          %v1430 = vadd.f32 %v1428, %v1429
          %v1431 = vrot.slane %v1430, 2
          %v1432 = vadd.f32 %v1430, %v1431
          %v1433 = vrot.slane %v1432, 1
          %v1434 = vadd.f32 %v1432, %v1433
          %v1435 = vrcp.pop 16.0
          %v1436 = vmul.f32 %v1434, %v1435
          %v1437 = vsub.f32 %v1426, %v1436
          %v1438 = vsub.f32 %v1427, %v1436
          %v1439 = vmul.f32 %v1437, %v1437
          %v1440 = vmul.f32 %v1438, %v1438
          %v1441 = vadd.f32 %v1439, %v1440
          %v1442 = vrot.slane %v1441, 4
          %v1443 = vadd.f32 %v1441, %v1442
          %v1444 = vrot.slane %v1443, 2
          %v1445 = vadd.f32 %v1443, %v1444
          %v1446 = vrot.slane %v1445, 1
          %v1447 = vadd.f32 %v1445, %v1446
          %v1448 = vmul.f32 %v1447, %v1435
          %v1449 = vadd.f32 %v1448, 1e-05
          %v1450 = vrsqrt.pop %v1449
          %v1451 = vmul.f32 %v1437, %v1450
          %v1452 = vmul.f32 %v1438, %v1450
          %1453 = vset.pattern.permute.xlu0 9
          %1454 = vperm.xlu0 %1453, %v268
          %v1455 = vpop.permute.xlu0 %1454
          %1457 = vset.pattern.permute.xlu0 9
          %1458 = vperm.xlu0 %1457, %v279
          %v1459 = vpop.permute.xlu0 %1458
          %v1461 = vmul.f32 %v1451, %v1455
          %v1462 = vmul.f32 %v1452, %v1459
          %1463 = vset.pattern.permute.xlu0 10
          %1464 = vperm.xlu0 %1463, %v268
          %v1465 = vpop.permute.xlu0 %1464
          %1467 = vset.pattern.permute.xlu0 10
          %1468 = vperm.xlu0 %1467, %v279
          %v1469 = vpop.permute.xlu0 %1468
          %v1471 = vadd.f32 %v1461, %v1465
          %v1472 = vadd.f32 %v1462, %v1469
          %v1473 = vmax.f32 %v1471, 0.0
          %v1474 = vmax.f32 %v1472, 0.0
          %1475 = vset.pattern.permute.xlu0 11
          %1476 = vperm.xlu0 %1475, %v268
          %v1477 = vpop.permute.xlu0 %1476
          %1479 = vset.pattern.permute.xlu0 11
          %1480 = vperm.xlu0 %1479, %v279
          %v1481 = vpop.permute.xlu0 %1480
          %v1483 = vmul.f32 %v1473, %v1477
          %v1484 = vmul.f32 %v1474, %v1481
          %v1485 = vadd.f32 %v1483, %v1484
          %v1486 = vrot.slane %v1485, 4
          %v1487 = vadd.f32 %v1485, %v1486
          %v1488 = vrot.slane %v1487, 2
          %v1489 = vadd.f32 %v1487, %v1488
          %v1490 = vrot.slane %v1489, 1
          %v1491 = vadd.f32 %v1489, %v1490
          %v1492 = vstv %s297
          %v1493 = vadd.f32 %v1491, %v1492
          %v1494 = vxor.u32 %v1493, 2147483648
          %v1495 = vmul.f32 %v1494, 1.442695
          %v1496 = vpow.pop %v1495
          %v1497 = vadd.f32 %v1496, 1.0
          %v1498 = vrcp.pop %v1497
          %v1499 = vmul.f32 1.0, %v1498
          %v1500 = vmul.f32 %v1499, %v296
          %v1501 = vmul.f32 %v1220, %v1303
          %v1502 = vmul.f32 %v1243, %v1317
          %v1503 = vadd.f32 %v1501, %v1502
          %v1504 = vmul.f32 %v1266, %v1333
          %v1505 = vadd.f32 %v1503, %v1504
          %v1506 = vmul.f32 %v1289, %v1349
          %v1507 = vadd.f32 %v1505, %v1506
          %v1508 = vmul.f32 %v1500, %v1507
          %v1509 = vadd.f32 %v470, %v1508
          %1510 = vst [vmem:[#allocation2] sm:$0xff] %v1509
          %v1511 = vmul.f32 %v1220, %v797
          %v1512 = vsub.f32 %v491, %v1511
          %v1513 = vmul.f32 %v1243, %v845
          %v1514 = vsub.f32 %v1512, %v1513
          %v1515 = vmul.f32 %v1266, %v893
          %v1516 = vsub.f32 %v1514, %v1515
          %v1517 = vmul.f32 %v1289, %v941
          %v1518 = vsub.f32 %v1516, %v1517
          %1519 = vst [vmem:[#allocation3] sm:$0xff] %v1518
          %v1520 = vmul.f32 %v1220, %v802
          %v1521 = vsub.f32 %v514, %v1520
          %v1522 = vmul.f32 %v1243, %v850
          %v1523 = vsub.f32 %v1521, %v1522
          %v1524 = vmul.f32 %v1266, %v898
          %v1525 = vsub.f32 %v1523, %v1524
          %v1526 = vmul.f32 %v1289, %v946
          %v1527 = vsub.f32 %v1525, %v1526
          %1528 = vst [vmem:[%s439] sm:$0xff] %v1527
          %v1529 = vmul.f32 %v1220, %v808
          %v1530 = vsub.f32 %v537, %v1529
          %v1531 = vmul.f32 %v1243, %v856
          %v1532 = vsub.f32 %v1530, %v1531
          %v1533 = vmul.f32 %v1266, %v904
          %v1534 = vsub.f32 %v1532, %v1533
          %v1535 = vmul.f32 %v1289, %v952
          %v1536 = vsub.f32 %v1534, %v1535
          %1537 = vst [vmem:[%s441] sm:$0xff] %v1536
          %v1538 = vmul.f32 %v1220, %v814
          %v1539 = vsub.f32 %v560, %v1538
          %v1540 = vmul.f32 %v1243, %v862
          %v1541 = vsub.f32 %v1539, %v1540
          %v1542 = vmul.f32 %v1266, %v910
          %v1543 = vsub.f32 %v1541, %v1542
          %v1544 = vmul.f32 %v1289, %v958
          %v1545 = vsub.f32 %v1543, %v1544
          %1546 = vst [vmem:[%s443] sm:$0xff] %v1545
          %v1547 = vmul.f32 %v1220, %v820
          %v1548 = vsub.f32 %v575, %v1547
          %v1549 = vmul.f32 %v1243, %v868
          %v1550 = vsub.f32 %v1548, %v1549
          %v1551 = vmul.f32 %v1266, %v916
          %v1552 = vsub.f32 %v1550, %v1551
          %v1553 = vmul.f32 %v1289, %v964
          %v1554 = vsub.f32 %v1552, %v1553
          %1555 = vst [vmem:[%s445] sm:$0xff] %v1554
          %v1556 = vmul.f32 %v1220, %v826
          %v1557 = vsub.f32 %v590, %v1556
          %v1558 = vmul.f32 %v1243, %v874
          %v1559 = vsub.f32 %v1557, %v1558
          %v1560 = vmul.f32 %v1266, %v922
          %v1561 = vsub.f32 %v1559, %v1560
          %v1562 = vmul.f32 %v1289, %v970
          %v1563 = vsub.f32 %v1561, %v1562
          %1564 = vst [vmem:[%s447] sm:$0xff] %v1563
          %v1565 = vmul.f32 %v1220, %v832
          %v1566 = vsub.f32 %v605, %v1565
          %v1567 = vmul.f32 %v1243, %v880
          %v1568 = vsub.f32 %v1566, %v1567
          %v1569 = vmul.f32 %v1266, %v928
          %v1570 = vsub.f32 %v1568, %v1569
          %v1571 = vmul.f32 %v1289, %v976
          %v1572 = vsub.f32 %v1570, %v1571
          %1573 = vst [vmem:[%s449] sm:$0xff] %v1572
          %v1574 = vmul.f32 %v1220, %v838
          %v1575 = vsub.f32 %v620, %v1574
          %v1576 = vmul.f32 %v1243, %v886
          %v1577 = vsub.f32 %v1575, %v1576
          %v1578 = vmul.f32 %v1266, %v934
          %v1579 = vsub.f32 %v1577, %v1578
          %v1580 = vmul.f32 %v1289, %v982
          %v1581 = vsub.f32 %v1579, %v1580
          %1582 = vst [vmem:[%s451] sm:$0xff] %v1581
          %s1583 = scalar_lea.vmem %s262, %s434
          %1584 = vst [vmem:[%s1583] sm:$0xf] %v1509
        $region49: #{_kalman_sequence.1} parent=35 // loop_footer
          %s430 = sadd.s32 %s428, 1
        $region50: #{_kalman_sequence.1} parent=35 // loop_footer_branch
          %427 = sbr.rel target = $region46
        $region51: #{_kalman_sequence.1} parent=35 // loop_exit
          _
        %v1585 = vld [vmem:[#allocation2] sm:$0xff]
        %1586 = vst [vmem:[#allocation7] sm:$0xff] %v1585
        %v1587 = vld [vmem:[#allocation3] sm:$0xff]
        %v1588 = vld [vmem:[#allocation3 + $0x8] sm:$0xff]
        %v1589 = vld [vmem:[#allocation3 + $0x10] sm:$0xff]
        %v1590 = vld [vmem:[#allocation3 + $0x18] sm:$0xff]
        %v1591 = vld [vmem:[#allocation3 + $0x20] sm:$0xff]
        %v1592 = vld [vmem:[#allocation3 + $0x28] sm:$0xff]
        %v1593 = vld [vmem:[#allocation3 + $0x30] sm:$0xff]
        %v1594 = vld [vmem:[#allocation3 + $0x38] sm:$0xff]
        %1595 = vst [vmem:[#allocation9] sm:$0xff] %v1587
        %1596 = vst [vmem:[#allocation9 + $0x8] sm:$0xff] %v1588
        %1597 = vst [vmem:[#allocation9 + $0x10] sm:$0xff] %v1589
        %1598 = vst [vmem:[#allocation9 + $0x18] sm:$0xff] %v1590
        %1599 = vst [vmem:[#allocation9 + $0x20] sm:$0xff] %v1591
        %1600 = vst [vmem:[#allocation9 + $0x28] sm:$0xff] %v1592
        %1601 = vst [vmem:[#allocation9 + $0x30] sm:$0xff] %v1593
        %1602 = vst [vmem:[#allocation9 + $0x38] sm:$0xff] %v1594
        %s1603 = smul.u32 8, %s32
        %p1604 = scmp.lt.s32.totalorder %s1603, 15
        %s1605 = scalar_select %p1604, %s1603, 15
        %s1606 = smul.addr %s1605, 4
        %s1607 = scalar_lea.vmem %s6, %s1606
        // Predicated region
        $region52: #{_kalman_sequence.1} parent=35 // pred_check
          %p1608 = pneg %p139
        $region53: #{_kalman_sequence.1} parent=35 // pred_check_branch
          %1610 = sbr.rel (%p1608) target = $region55
        $region54: #{_kalman_sequence.1} parent=35 // pred_region
          %s1611 = smul.u32 8, %s32
        $region55: #{_kalman_sequence.1} parent=35 // pred_fallthru
          _
        // Predicated region
        $region56: #{_kalman_sequence.1} parent=35 // pred_check
          %p1612 = pneg %p160
        $region57: #{_kalman_sequence.1} parent=35 // pred_check_branch
          %1614 = sbr.rel (%p1612) target = $region59
        $region58: #{_kalman_sequence.1} parent=35 // pred_region
          %s1616 = ssub.s32 128, 128
          %1617 = vsyncadd [#allocation8], %s1616
          %s1619 = sshll.u32 [#allocation7], 4
          %s1620 = int_to_ptr.vmem [resolvable:$true] %s1619
          %1622 = dma.vmem_to_hbm [thread:$0]  %s1620, 128, %s7, [#allocation8]
        $region59: #{_kalman_sequence.1} parent=35 // pred_fallthru
          _
        // Predicated region
        $region60: #{_kalman_sequence.1} parent=35 // pred_check
          %p1623 = pneg %p181
        $region61: #{_kalman_sequence.1} parent=35 // pred_check_branch
          %1625 = sbr.rel (%p1623) target = $region63
        $region62: #{_kalman_sequence.1} parent=35 // pred_region
          %s1627 = ssub.s32 1024, 1024
          %1628 = vsyncadd [#allocation10], %s1627
          %s1629 = sshll.u32 [#allocation9], 4
          %s1630 = int_to_ptr.vmem [resolvable:$true] %s1629
          %1635 = dma.vmem_to_hbm [thread:$0]  %s1630, 1024, %s8, [#allocation10], 128, 128, 8
        $region63: #{_kalman_sequence.1} parent=35 // pred_fallthru
          _
        // Predicated region
        $region64: #{_kalman_sequence.1} parent=35 // pred_check
          %p1636 = pneg %p160
        $region65: #{_kalman_sequence.1} parent=35 // pred_check_branch
          %1638 = sbr.rel (%p1636) target = $region67
        $region66: #{_kalman_sequence.1} parent=35 // pred_region
          %1639 = dma.done [#allocation8], 128
        $region67: #{_kalman_sequence.1} parent=35 // pred_fallthru
          _
        // Predicated region
        $region68: #{_kalman_sequence.1} parent=35 // pred_check
          %p1640 = pneg %p181
        $region69: #{_kalman_sequence.1} parent=35 // pred_check_branch
          %1642 = sbr.rel (%p1640) target = $region71
        $region70: #{_kalman_sequence.1} parent=35 // pred_region
          %1643 = dma.done [#allocation10], 1024
        $region71: #{_kalman_sequence.1} parent=35 // pred_fallthru
          _
      $region36: #{_kalman_sequence.1} parent=5 // pred_fallthru
        _
      %p1644 = scmp.le.s32.totalorder 2, %s27
      // Predicated region
      $region72: #{_kalman_sequence.1} parent=5 // pred_check
        %p1645 = pneg %p1644
      $region73: #{_kalman_sequence.1} parent=5 // pred_check_branch
        %1647 = sbr.rel (%p1645) target = $region75
      $region74: #{_kalman_sequence.1} parent=5 // pred_region
        %s1648 = ssub.s32 %s27, 2
        // Predicated region
        $region76: #{_kalman_sequence.1} parent=74 // pred_check
          %p1649 = pneg %p145
        $region77: #{_kalman_sequence.1} parent=74 // pred_check_branch
          %1651 = sbr.rel (%p1649) target = $region79
        $region78: #{_kalman_sequence.1} parent=74 // pred_region
          %s1652 = smul.u32 8, %s33
          %p1653 = scmp.lt.s32.totalorder %s1652, 15
          %s1654 = scalar_select %p1653, %s1652, 15
          %s1655 = smul.addr %s1654, 4
          %s1656 = scalar_lea.vmem %s6, %s1655
        $region79: #{_kalman_sequence.1} parent=74 // pred_fallthru
          _
      $region75: #{_kalman_sequence.1} parent=5 // pred_fallthru
        _
    $region6: #{_kalman_sequence.1} parent=1 // loop_footer
      %s31 = sadd.s32 1, %s27
    $region7: #{_kalman_sequence.1} parent=1 // loop_footer_branch
      %26 = sbr.rel target = $region3
    $region8: #{_kalman_sequence.1} parent=1 // loop_exit
      _
    %1657 = vsyncpa [#allocation8], 1
    %s1658 = scalar_lea.sflag [#allocation8], 1
    %1659 = vsyncpa %s1658, 1
    %1660 = vsyncpa [#allocation10], 1

</llo_original>
